<compile_context>
chip_gen: v6e
topology: v6e:2x2x1
jax: 0.10.0
libtpu: 0.0.40
codegen_flags: <defaults>
</compile_context>

<pallas_src>
import functools

import jax
import jax.numpy as jnp
from jax.experimental import pallas as pl
from jax.experimental.pallas import tpu as pltpu

F32 = jnp.float32
BF16 = jnp.bfloat16

TE = 256                        # edge rows per chunk (256 fills v6e/v7x MXU)
USE_APPROX_RECIPROCAL = True    # EUP approx reciprocal for 1/(den+eps), softmax


def _round_up(x, m):
    return ((x + m - 1) // m) * m


def _vmem_limit_bytes():
    # Generation-aware scoped-VMEM limit (~3/4 of physical per core).
    try:
        cap = int(pltpu.get_tpu_info().vmem_capacity_bytes)
        return max(32 << 20, (cap * 3) // 4)
    except Exception:
        return 48 << 20


def _onehot(cond):
    # bf16 one-hot built in-register; 0/1 are exact in bf16.
    return jnp.where(cond, 1.0, 0.0).astype(BF16)


# ----------------------------------------------------------------------------
# Fused GNN stack kernel: input embeddings + every GatedGCN layer.
#
# Reference math (GatedGCNLayer, benchmarking-gnns):
#   e_ij  = C e_ij + D h_src + E h_dst
#   sigma = sigmoid(e_ij)
#   h_i   = A h_i + sum_{j->i} sigma_ij * B h_j / (sum_{j->i} sigma_ij + 1e-6)
#   BN(eval) -> ReLU -> residual ; dropout = identity at inference.
# ----------------------------------------------------------------------------
def _gnn_kernel(cfg, h0_ref, e0_ref, src_ref, dst_ref, dstr_ref,
                wEh, bEh, wEe, bEe,
                w_node, b_node, wC, bC, bn_h, bn_e, wS, bS,
                h_out, s_out, h_scr, e_scr):
    n_pad = cfg["n_pad"]
    H = cfg["hidden"]
    te = cfg["te"]
    nblk = cfg["e_pad"] // te
    l = pl.program_id(0)

    # ---- first layer step: fused input embeddings into resident VMEM state --
    @pl.when(l == 0)
    def _embed():
        h_scr[...] = (jnp.dot(h0_ref[...].astype(BF16), wEh[...],
                              preferred_element_type=F32) + bEh[...])
        e_scr[...] = (jnp.dot(e0_ref[...].astype(BF16), wEe[...],
                              preferred_element_type=F32) + bEe[...])

    # ---- per-layer fused node projections: [A|B|D|E] h ----------------------
    h_in = h_scr[...]                                     # (N_pad, H) f32
    proj = (jnp.dot(h_in.astype(BF16), w_node[...],
                    preferred_element_type=F32) + b_node[...])
    ah = proj[:, :H]                                      # A h
    bde = proj[:, H:].astype(BF16)                        # [Bh | Dh | Eh] bf16

    # one-hot iotas: built once per layer step (hoisted out of the chunk loop)
    col_iota = jax.lax.broadcasted_iota(jnp.int32, (te, n_pad), 1)
    row_iota = jax.lax.broadcasted_iota(jnp.int32, (n_pad, te), 0)

    acc = jnp.zeros((n_pad, 2 * H), F32)                  # [num | den]
    for c in range(nblk):                                 # static loop; e resident
        esl = pl.ds(c * te, te)
        e_in = e_scr[esl, :]                              # (te, H) f32
        src_oh = _onehot(col_iota == src_ref[esl, :])     # (te, N)  gather src
        dst_oh = _onehot(col_iota == dst_ref[esl, :])     # (te, N)  gather dst
        dst_ohT = _onehot(row_iota == dstr_ref[:, esl])   # (N, te)  scatter->dst

        Ce = (jnp.dot(e_in.astype(BF16), wC[...],
                      preferred_element_type=F32) + bC[...])
        bd = jnp.dot(src_oh, bde[:, :2 * H],
                     preferred_element_type=F32)          # [Bh_src | Dh_src]
        eh = jnp.dot(dst_oh, bde[:, 2 * H:],
                     preferred_element_type=F32)          # Eh_dst

        e_new = Ce + bd[:, H:] + eh                       # C e + D h_src + E h_dst
        sig = jax.nn.sigmoid(e_new)
        msg = jnp.concatenate([sig * bd[:, :H], sig], axis=-1).astype(BF16)
        acc = acc + jnp.dot(dst_ohT, msg, preferred_element_type=F32)

        e_post = e_new
        if cfg["batch_norm"]:
            e_post = e_post * bn_e[0:1, :] + bn_e[1:2, :]
        e_post = jnp.maximum(e_post, 0.0)
        if cfg["residual"]:
            e_post = e_in + e_post
        e_scr[esl, :] = e_post                            # e stays in VMEM

    # ---- node update ---------------------------------------------------------
    num = acc[:, :H]
    den = acc[:, H:]
    if cfg["approx_recip"]:
        agg = num * pl.reciprocal(den + 1e-6, approx=True)
    else:
        agg = num / (den + 1e-6)
    h_new = ah + agg
    if cfg["batch_norm"]:
        h_new = h_new * bn_h[0:1, :] + bn_h[1:2, :]
    h_act = jnp.maximum(h_new, 0.0)
    if cfg["residual"]:
        h_act = h_in + h_act
    h_scr[...] = h_act
    h_out[...] = h_act.astype(BF16)                       # bf16 across HBM

    # ---- soft-assignment head (host keeps only the "bi" layers) --------------
    # TODO(synk): biGatedGCNLayer source is not in the spec; its soft-assignment
    # head is approximated as a temperature(sigma)-scaled softmax of a linear
    # projection of the updated node features.
    logits = (jnp.dot(h_act.astype(BF16), wS[...],
                      preferred_element_type=F32) + bS[...]) * cfg["inv_sigma"]
    z = logits - jnp.max(logits, axis=-1, keepdims=True)
    ez = jnp.exp(z)
    denom = jnp.sum(ez, axis=-1, keepdims=True)
    if cfg["approx_recip"]:
        s_out[...] = ez * pl.reciprocal(denom, approx=True)
    else:
        s_out[...] = ez / denom


def _gnn_stack(params, h0, e0, src_col, dst_col, dst_row, n_pad, e_pad,
               sigma, batch_norm, residual):
    lp = params["layers"]
    em = params["embed"]
    L, H = lp["w_node"].shape[0], lp["w_node"].shape[1]
    a_pad = lp["wS"].shape[2]

    cfg = dict(n_pad=n_pad, e_pad=e_pad, hidden=H, te=TE,
               residual=residual, batch_norm=batch_norm,
               inv_sigma=float(1.0 / sigma),
               approx_recip=USE_APPROX_RECIPROCAL)

    full = lambda a: pl.BlockSpec(a.shape, lambda l: (0,) * a.ndim)
    perl = lambda a: pl.BlockSpec((None,) + tuple(a.shape[1:]),
                                  lambda l: (l,) + (0,) * (a.ndim - 1))

    inputs = [h0, e0, src_col, dst_col, dst_row,
              em["wEh"], em["bEh"], em["wEe"], em["bEe"],
              lp["w_node"], lp["b_node"], lp["wC"], lp["bC"],
              lp["bn_h"], lp["bn_e"], lp["wS"], lp["bS"]]
    in_specs = [full(h0), full(e0), full(src_col), full(dst_col), full(dst_row),
                full(em["wEh"]), full(em["bEh"]), full(em["wEe"]), full(em["bEe"]),
                perl(lp["w_node"]), perl(lp["b_node"]), perl(lp["wC"]),
                perl(lp["bC"]), perl(lp["bn_h"]), perl(lp["bn_e"]),
                perl(lp["wS"]), perl(lp["bS"])]

    out_shape = (jax.ShapeDtypeStruct((n_pad, H), BF16),
                 jax.ShapeDtypeStruct((L, n_pad, a_pad), F32))
    out_specs = (pl.BlockSpec((n_pad, H), lambda l: (0, 0)),
                 pl.BlockSpec((None, n_pad, a_pad), lambda l: (l, 0, 0)))

    scratch = [pltpu.VMEM((n_pad, H), F32),      # resident node features
               pltpu.VMEM((e_pad, H), F32)]      # resident edge features

    flops = 2 * L * (n_pad * H * 4 * H + e_pad * H * H
                     + 5 * e_pad * n_pad * H + n_pad * H * a_pad)
    bytes_accessed = (4 * (h0.size + e0.size + L * n_pad * a_pad)
                      + 2 * (n_pad * H + lp["w_node"].size + lp["wC"].size
                             + lp["wS"].size))

    return pl.pallas_call(
        functools.partial(_gnn_kernel, cfg),
        grid=(L,),
        out_shape=out_shape,
        in_specs=in_specs,
        out_specs=out_specs,
        scratch_shapes=scratch,
        compiler_params=pltpu.CompilerParams(
            dimension_semantics=("arbitrary",),     # layers are sequential
            vmem_limit_bytes=_vmem_limit_bytes()),
        cost_estimate=pl.CostEstimate(
            flops=int(flops),
            transcendentals=int(L * (e_pad * H + n_pad * a_pad)),
            bytes_accessed=int(bytes_accessed)),
    )(*inputs)


# ----------------------------------------------------------------------------
# Edge readout: concat([h_src, h_dst]) -> MLPReadout(2*out_dim, n_classes, L=2)
# First FC is refactored as  src_oh @ (h W0a) + dst_oh @ (h W0b), with the
# projected node slab computed once and kept resident in VMEM.  Hidden / class
# dims are zero-padded to 128 so every output tile is lane-dense.
# ----------------------------------------------------------------------------
def _readout_kernel(cfg, h_ref, src_ref, dst_ref,
                    w0a, w0b, b0, w1, b1, w2, b2, out_ref, ph_scr, iota_scr):
    n_pad = cfg["n_pad"]
    te = cfg["te"]
    d0 = cfg["d0"]

    @pl.when(pl.program_id(0) == 0)
    def _init():
        hb = h_ref[...].astype(BF16)
        pa = jnp.dot(hb, w0a[...], preferred_element_type=F32)
        pb = jnp.dot(hb, w0b[...], preferred_element_type=F32)
        ph_scr[...] = jnp.concatenate([pa, pb], axis=-1).astype(BF16)
        iota_scr[...] = jax.lax.broadcasted_iota(jnp.int32, (te, n_pad), 1)

    iota = iota_scr[...]
    src_oh = _onehot(iota == src_ref[...])
    dst_oh = _onehot(iota == dst_ref[...])
    y = (jnp.dot(src_oh, ph_scr[:, :d0], preferred_element_type=F32)
         + jnp.dot(dst_oh, ph_scr[:, d0:], preferred_element_type=F32)
         + b0[...])
    y = jnp.maximum(y, 0.0)
    y = jnp.dot(y.astype(BF16), w1[...], preferred_element_type=F32) + b1[...]
    y = jnp.maximum(y, 0.0)
    y = jnp.dot(y.astype(BF16), w2[...], preferred_element_type=F32) + b2[...]
    out_ref[...] = y


def _edge_readout(h, src_col, dst_col, mlp, n_pad):
    e_pad = src_col.shape[0]
    nblk = e_pad // TE
    H = h.shape[1]
    d0 = mlp["w0a"].shape[1]
    d1p = mlp["w1"].shape[1]
    c_pad = mlp["w2"].shape[1]
    cfg = dict(n_pad=n_pad, te=TE, d0=d0)

    full = lambda a: pl.BlockSpec(a.shape, lambda i: (0,) * a.ndim)
    inputs = [h, src_col, dst_col, mlp["w0a"], mlp["w0b"], mlp["b0"],
              mlp["w1"], mlp["b1"], mlp["w2"], mlp["b2"]]
    in_specs = [full(h),
                pl.BlockSpec((TE, 1), lambda i: (i, 0)),
                pl.BlockSpec((TE, 1), lambda i: (i, 0))] + \
               [full(mlp[k]) for k in ("w0a", "w0b", "b0", "w1", "b1", "w2", "b2")]

    flops = 2 * (2 * n_pad * H * d0
                 + e_pad * (2 * n_pad * d0 + d0 * d1p + d1p * c_pad))

    return pl.pallas_call(
        functools.partial(_readout_kernel, cfg),
        grid=(nblk,),
        out_shape=jax.ShapeDtypeStruct((e_pad, c_pad), F32),
        in_specs=in_specs,
        out_specs=pl.BlockSpec((TE, c_pad), lambda i: (i, 0)),
        scratch_shapes=[pltpu.VMEM((n_pad, 2 * d0), BF16),
                        pltpu.VMEM((TE, n_pad), jnp.int32)],
        compiler_params=pltpu.CompilerParams(
            dimension_semantics=("arbitrary",),     # ph_scr reused across tiles
            vmem_limit_bytes=_vmem_limit_bytes()),
        cost_estimate=pl.CostEstimate(
            flops=int(flops), transcendentals=0,
            bytes_accessed=int(2 * h.size + 4 * e_pad * c_pad)),
    )(*inputs)


# ----------------------------------------------------------------------------
# Parameter construction (deterministic, synthetic; weights bf16, biases f32)
# ----------------------------------------------------------------------------
def _lin(key, din, dout, w_dtype=BF16):
    kw, kb = jax.random.split(key)
    w = (jax.random.normal(kw, (din, dout), F32)
         / jnp.sqrt(float(din))).astype(w_dtype)
    b = jax.random.normal(kb, (1, dout), F32) * 0.01
    return w, b


def _bn_fold(dout, eps=1e-5):
    # eval-mode BatchNorm1d folded to per-feature (scale, shift).
    # TODO(synk): real checkpoints must fold their actual running stats.
    gamma = jnp.ones((dout,), F32)
    beta = jnp.zeros((dout,), F32)
    mean = jnp.zeros((dout,), F32)
    var = jnp.ones((dout,), F32)
    scale = gamma * jax.lax.rsqrt(var + eps)
    shift = beta - mean * scale
    return jnp.stack([scale, shift], axis=0)               # (2, dout)


def init_params(key, in_dim, in_dim_edge, hidden, out_dim, n_classes,
                n_layers, assign_dim):
    # Fused stacked-weight path assumes a uniform hidden width (true for the
    # standard TSP configs where hidden_dim == out_dim).
    assert hidden == out_dim, "fused layer stack requires hidden_dim == out_dim"
    H = hidden
    a_pad = _round_up(max(assign_dim, 1), 128)
    c_pad = _round_up(n_classes, 128)

    # replicate the layer-type schedule of biGatedGCNNet_IL.__init__
    kinds = ["gated"]
    for l in range(n_layers - 1):
        if l == n_layers - 2:
            kinds.append("bi" if l % 2 == 0 else "gated")
        elif l % 2 == 0:
            kinds.append("bi")
        else:
            kinds.append("gated")

    keys = jax.random.split(key, n_layers + 2)
    w_node, b_node, wC, bC, bn_h, bn_e, wS, bS = ([] for _ in range(8))
    for i, kind in enumerate(kinds):
        ks = jax.random.split(keys[i], 6)
        wA, bA = _lin(ks[0], H, H)
        wB, bB = _lin(ks[1], H, H)
        wc, bc = _lin(ks[2], H, H)
        wD, bD = _lin(ks[3], H, H)
        wE, bE = _lin(ks[4], H, H)
        w_node.append(jnp.concatenate([wA, wB, wD, wE], axis=1))   # (H, 4H)
        b_node.append(jnp.concatenate([bA, bB, bD, bE], axis=1))   # (1, 4H)
        wC.append(wc)
        bC.append(bc)
        bn_h.append(_bn_fold(H))
        bn_e.append(_bn_fold(H))
        if kind == "bi":
            ws, bs = _lin(ks[5], H, assign_dim)
        else:
            ws = jnp.zeros((H, assign_dim), BF16)
            bs = jnp.zeros((1, assign_dim), F32)
        # pad assignment dim to 128 lanes; padded logits get a -1e9 bias so the
        # in-kernel softmax assigns them ~0 probability.
        wS.append(jnp.pad(ws.astype(F32),
                          ((0, 0), (0, a_pad - assign_dim))).astype(BF16))
        bS.append(jnp.pad(bs, ((0, 0), (0, a_pad - assign_dim)),
                          constant_values=-1e9))

    kh, ke = jax.random.split(keys[n_layers], 2)
    wEh, bEh = _lin(kh, in_dim, H)
    wEe, bEe = _lin(ke, in_dim_edge, H)

    # MLPReadout(2*out_dim, n_classes, L=2): 2*out -> out -> out/2 -> n_classes
    d0 = (2 * out_dim) // 2
    d1 = (2 * out_dim) // 4
    d1_pad = _round_up(d1, 128)
    k0, k1, k2 = jax.random.split(keys[n_layers + 1], 3)
    w0, b0 = _lin(k0, 2 * out_dim, d0)
    w1, b1 = _lin(k1, d0, d1)
    w2, b2 = _lin(k2, d1, n_classes)
    mlp = dict(
        w0a=w0[:out_dim, :], w0b=w0[out_dim:, :], b0=b0,
        w1=jnp.pad(w1.astype(F32), ((0, 0), (0, d1_pad - d1))).astype(BF16),
        b1=jnp.pad(b1, ((0, 0), (0, d1_pad - d1))),
        w2=jnp.pad(w2.astype(F32),
                   ((0, d1_pad - d1), (0, c_pad - n_classes))).astype(BF16),
        b2=jnp.pad(b2, ((0, 0), (0, c_pad - n_classes))))

    layers = dict(w_node=jnp.stack(w_node), b_node=jnp.stack(b_node),
                  wC=jnp.stack(wC), bC=jnp.stack(bC),
                  bn_h=jnp.stack(bn_h), bn_e=jnp.stack(bn_e),
                  wS=jnp.stack(wS), bS=jnp.stack(bS))
    embed = dict(wEh=wEh, bEh=bEh, wEe=wEe, bEe=bEe)
    bi_idx = tuple(i for i, k in enumerate(kinds) if k == "bi")
    return dict(layers=layers, embed=embed, mlp=mlp, kinds=tuple(kinds),
                bi_idx=bi_idx, n_classes=n_classes, assign_dim=assign_dim)


# ----------------------------------------------------------------------------
# Full forward pass (mirrors biGatedGCNNet_IL.forward; pos_enc=False,
# edge_feat=True, batch_norm=True, residual=True, inference mode).
# ----------------------------------------------------------------------------
def forward(params, h_nodes, e_edges, src, dst, sigma,
            batch_norm=True, residual=True):
    n = h_nodes.shape[0]
    e_cnt = src.shape[0]
    n_pad = _round_up(n, 128)          # lane-dense one-hot / MXU contraction dim
    e_pad = _round_up(e_cnt, TE)

    # Padded edges point at the out-of-range node index n_pad: their in-kernel
    # one-hot rows are all zero, so they neither gather nor scatter (inert).
    pad_e = e_pad - e_cnt
    src_p = jnp.concatenate([src.astype(jnp.int32),
                             jnp.full((pad_e,), n_pad, jnp.int32)])
    dst_p = jnp.concatenate([dst.astype(jnp.int32),
                             jnp.full((pad_e,), n_pad, jnp.int32)])
    src_col = src_p.reshape(e_pad, 1)
    dst_col = dst_p.reshape(e_pad, 1)
    dst_row = dst_p.reshape(1, e_pad)

    h0 = jnp.pad(h_nodes.astype(F32), ((0, n_pad - n), (0, 0)))
    e0 = jnp.pad(e_edges.astype(F32), ((0, pad_e), (0, 0)))

    h_fin, s_all = _gnn_stack(params, h0, e0, src_col, dst_col, dst_row,
                              n_pad, e_pad, sigma, batch_norm, residual)

    ad = params["assign_dim"]
    S = jnp.stack([s_all[i, :n, :ad] for i in params["bi_idx"]], axis=0)

    logits = _edge_readout(h_fin, src_col, dst_col, params["mlp"], n_pad)
    return logits[:e_cnt, :params["n_classes"]], S


if __name__ == "__main__":
    # small synthetic TSP-style graph consistent with the module's forward
    N, E = 64, 256
    IN_DIM, IN_DIM_EDGE = 2, 1           # node = 2-D coords, edge = distance
    HIDDEN, OUT_DIM = 128, 128           # lane-dense hidden sizes
    N_CLASSES = 2
    ASSIGN_DIM = 8
    N_LAYERS = 4
    SIGMA = 1.0

    key = jax.random.PRNGKey(0)
    k_src, k_dst, k_h, k_e, k_p = jax.random.split(key, 5)
    src = jax.random.randint(k_src, (E,), 0, N, dtype=jnp.int32)
    dst = jax.random.randint(k_dst, (E,), 0, N, dtype=jnp.int32)
    h0 = jax.random.normal(k_h, (N, IN_DIM), F32)
    e0 = jax.random.normal(k_e, (E, IN_DIM_EDGE), F32)

    params = init_params(k_p, IN_DIM, IN_DIM_EDGE, HIDDEN, OUT_DIM,
                         N_CLASSES, N_LAYERS, ASSIGN_DIM)

    edge_logits, S = forward(params, h0, e0, src, dst, SIGMA)
    jax.block_until_ready((edge_logits, S))

    n_bi = len(params["bi_idx"])
    assert edge_logits.shape == (E, N_CLASSES)
    assert S.shape == (n_bi, N, ASSIGN_DIM)
    assert bool(jnp.all(jnp.isfinite(edge_logits)))
    assert bool(jnp.all(jnp.isfinite(S)))
    print("KERNEL_OK")
</pallas_src>

<mosaic_0001>
module attributes {stable_mosaic.version = 11 : i64} {
  func.func @_gnn_kernel(%arg0: i32, %arg1: memref<128x2xf32, #tpu.memory_space<vmem>>, %arg2: memref<256x1xf32, #tpu.memory_space<vmem>>, %arg3: memref<256x1xi32, #tpu.memory_space<vmem>>, %arg4: memref<256x1xi32, #tpu.memory_space<vmem>>, %arg5: memref<1x256xi32, #tpu.memory_space<vmem>>, %arg6: memref<2x128xbf16, #tpu.memory_space<vmem>>, %arg7: memref<1x128xf32, #tpu.memory_space<vmem>>, %arg8: memref<1x128xbf16, #tpu.memory_space<vmem>>, %arg9: memref<1x128xf32, #tpu.memory_space<vmem>>, %arg10: memref<1x128x512xbf16, #tpu.memory_space<vmem>>, %arg11: memref<1x1x512xf32, #tpu.memory_space<vmem>>, %arg12: memref<1x128x128xbf16, #tpu.memory_space<vmem>>, %arg13: memref<1x1x128xf32, #tpu.memory_space<vmem>>, %arg14: memref<1x2x128xf32, #tpu.memory_space<vmem>>, %arg15: memref<1x2x128xf32, #tpu.memory_space<vmem>>, %arg16: memref<1x128x128xbf16, #tpu.memory_space<vmem>>, %arg17: memref<1x1x128xf32, #tpu.memory_space<vmem>>, %arg18: memref<128x128xbf16, #tpu.memory_space<vmem>>, %arg19: memref<1x128x128xf32, #tpu.memory_space<vmem>>, %arg20: memref<128x128xf32, #tpu.memory_space<vmem>>, %arg21: memref<256x128xf32, #tpu.memory_space<vmem>>) attributes {dimension_semantics = [#tpu.dimension_semantics<arbitrary>], iteration_bounds = array<i64: 4>, scalar_prefetch = 0 : i64, scratch_operands = 2 : i64, tpu.core_type = #tpu.core_type<tc>, window_params = [{pipeline_mode = #tpu.pipeline_mode<synchronous>, transform_indices = @transform_0, window_bounds = array<i64: 128, 2>}, {pipeline_mode = #tpu.pipeline_mode<synchronous>, transform_indices = @transform_1, window_bounds = array<i64: 256, 1>}, {pipeline_mode = #tpu.pipeline_mode<synchronous>, transform_indices = @transform_2, window_bounds = array<i64: 256, 1>}, {pipeline_mode = #tpu.pipeline_mode<synchronous>, transform_indices = @transform_3, window_bounds = array<i64: 256, 1>}, {pipeline_mode = #tpu.pipeline_mode<synchronous>, transform_indices = @transform_4, window_bounds = array<i64: 1, 256>}, {pipeline_mode = #tpu.pipeline_mode<synchronous>, transform_indices = @transform_5, window_bounds = array<i64: 2, 128>}, {pipeline_mode = #tpu.pipeline_mode<synchronous>, transform_indices = @transform_6, window_bounds = array<i64: 1, 128>}, {pipeline_mode = #tpu.pipeline_mode<synchronous>, transform_indices = @transform_7, window_bounds = array<i64: 1, 128>}, {pipeline_mode = #tpu.pipeline_mode<synchronous>, transform_indices = @transform_8, window_bounds = array<i64: 1, 128>}, {transform_indices = @transform_9, window_bounds = array<i64: 1, 128, 512>}, {transform_indices = @transform_10, window_bounds = array<i64: 1, 1, 512>}, {transform_indices = @transform_11, window_bounds = array<i64: 1, 128, 128>}, {transform_indices = @transform_12, window_bounds = array<i64: 1, 1, 128>}, {transform_indices = @transform_13, window_bounds = array<i64: 1, 2, 128>}, {transform_indices = @transform_14, window_bounds = array<i64: 1, 2, 128>}, {transform_indices = @transform_15, window_bounds = array<i64: 1, 128, 128>}, {transform_indices = @transform_16, window_bounds = array<i64: 1, 1, 128>}, {pipeline_mode = #tpu.pipeline_mode<synchronous>, transform_indices = @transform_17, window_bounds = array<i64: 128, 128>}, {transform_indices = @transform_18, window_bounds = array<i64: 1, 128, 128>}]} {
    %c0_i32 = arith.constant 0 : i32
    %0 = arith.cmpi eq, %arg0, %c0_i32 : i32
    %1 = arith.extui %0 : i1 to i32
    %c0_i32_0 = arith.constant 0 : i32
    %2 = arith.cmpi ne, %1, %c0_i32_0 : i32
    scf.if %2 {
      %c0_67 = arith.constant 0 : index
      %c0_68 = arith.constant 0 : index
      %122 = vector.load %arg1[%c0_67, %c0_68] : memref<128x2xf32, #tpu.memory_space<vmem>>, vector<128x2xf32>
      %123 = arith.truncf %122 : vector<128x2xf32> to vector<128x2xbf16>
      %c0_69 = arith.constant 0 : index
      %c0_70 = arith.constant 0 : index
      %124 = vector.load %arg6[%c0_69, %c0_70] : memref<2x128xbf16, #tpu.memory_space<vmem>>, vector<2x128xbf16>
      %cst_71 = arith.constant dense<0.000000e+00> : vector<128x128xf32>
      %125 = tpu.matmul %123, %124, %cst_71 {dimension_numbers = #tpu.dot_dimension_numbers<[1], [0], [0], [1], [0, 0, 1, 1], [], []>} : vector<128x2xbf16>, vector<2x128xbf16>, vector<128x128xf32> -> vector<128x128xf32>
      %c0_72 = arith.constant 0 : index
      %c0_73 = arith.constant 0 : index
      %126 = vector.load %arg7[%c0_72, %c0_73] : memref<1x128xf32, #tpu.memory_space<vmem>>, vector<1x128xf32>
      %127 = vector.broadcast %126 : vector<1x128xf32> to vector<128x128xf32>
      %128 = arith.addf %125, %127 : vector<128x128xf32>
      %c0_74 = arith.constant 0 : index
      %c0_75 = arith.constant 0 : index
      %129 = vector.load %arg20[%c0_74, %c0_75] : memref<128x128xf32, #tpu.memory_space<vmem>>, vector<128x128xf32>
      tpu.vector_store %arg20[%c0_74, %c0_75], %128 {strides = array<i32>} : memref<128x128xf32, #tpu.memory_space<vmem>>, vector<128x128xf32>,
      %c0_76 = arith.constant 0 : index
      %c0_77 = arith.constant 0 : index
      %130 = vector.load %arg2[%c0_76, %c0_77] : memref<256x1xf32, #tpu.memory_space<vmem>>, vector<256x1xf32>
      %131 = arith.truncf %130 : vector<256x1xf32> to vector<256x1xbf16>
      %c0_78 = arith.constant 0 : index
      %c0_79 = arith.constant 0 : index
      %132 = vector.load %arg8[%c0_78, %c0_79] : memref<1x128xbf16, #tpu.memory_space<vmem>>, vector<1x128xbf16>
      %cst_80 = arith.constant dense<0.000000e+00> : vector<256x128xf32>
      %133 = tpu.matmul %131, %132, %cst_80 {dimension_numbers = #tpu.dot_dimension_numbers<[1], [0], [0], [1], [0, 0, 1, 1], [], []>} : vector<256x1xbf16>, vector<1x128xbf16>, vector<256x128xf32> -> vector<256x128xf32>
      %c0_81 = arith.constant 0 : index
      %c0_82 = arith.constant 0 : index
      %134 = vector.load %arg9[%c0_81, %c0_82] : memref<1x128xf32, #tpu.memory_space<vmem>>, vector<1x128xf32>
      %135 = vector.broadcast %134 : vector<1x128xf32> to vector<256x128xf32>
      %136 = arith.addf %133, %135 : vector<256x128xf32>
      %c0_83 = arith.constant 0 : index
      %c0_84 = arith.constant 0 : index
      %137 = vector.load %arg21[%c0_83, %c0_84] : memref<256x128xf32, #tpu.memory_space<vmem>>, vector<256x128xf32>
      tpu.vector_store %arg21[%c0_83, %c0_84], %136 {strides = array<i32>} : memref<256x128xf32, #tpu.memory_space<vmem>>, vector<256x128xf32>,
    } else {
    }
    %c0 = arith.constant 0 : index
    %c0_1 = arith.constant 0 : index
    %3 = vector.load %arg20[%c0, %c0_1] : memref<128x128xf32, #tpu.memory_space<vmem>>, vector<128x128xf32>
    %4 = arith.truncf %3 : vector<128x128xf32> to vector<128x128xbf16>
    %c0_2 = arith.constant 0 : index
    %c0_3 = arith.constant 0 : index
    %c0_4 = arith.constant 0 : index
    %5 = vector.load %arg10[%c0_2, %c0_3, %c0_4] : memref<1x128x512xbf16, #tpu.memory_space<vmem>>, vector<1x128x512xbf16>
    %6 = vector.shape_cast %5 : vector<1x128x512xbf16> to vector<128x512xbf16>
    %cst = arith.constant dense<0.000000e+00> : vector<128x512xf32>
    %7 = tpu.matmul %4, %6, %cst {dimension_numbers = #tpu.dot_dimension_numbers<[1], [0], [0], [1], [0, 0, 1, 1], [], []>} : vector<128x128xbf16>, vector<128x512xbf16>, vector<128x512xf32> -> vector<128x512xf32>
    %c0_5 = arith.constant 0 : index
    %c0_6 = arith.constant 0 : index
    %c0_7 = arith.constant 0 : index
    %8 = vector.load %arg11[%c0_5, %c0_6, %c0_7] : memref<1x1x512xf32, #tpu.memory_space<vmem>>, vector<1x1x512xf32>
    %9 = vector.shape_cast %8 : vector<1x1x512xf32> to vector<1x512xf32>
    %10 = vector.broadcast %9 : vector<1x512xf32> to vector<128x512xf32>
    %11 = arith.addf %7, %10 : vector<128x512xf32>
    %12 = vector.extract_strided_slice %11 {offsets = [0, 0], sizes = [128, 128], strides = [1, 1]} : vector<128x512xf32> to vector<128x128xf32>
    %13 = vector.extract_strided_slice %11 {offsets = [0, 128], sizes = [128, 384], strides = [1, 1]} : vector<128x512xf32> to vector<128x384xf32>
    %14 = arith.truncf %13 : vector<128x384xf32> to vector<128x384xbf16>
    %15 = tpu.iota {dimensions = array<i32: 1>} : vector<256x128xi32>
    %16 = tpu.iota {dimensions = array<i32: 0>} : vector<128x256xi32>
    %cst_8 = arith.constant 0.000000e+00 : f32
    %17 = vector.broadcast %cst_8 : f32 to vector<128x256xf32>
    %c0_9 = arith.constant 0 : index
    %c0_10 = arith.constant 0 : index
    %18 = vector.load %arg21[%c0_9, %c0_10] : memref<256x128xf32, #tpu.memory_space<vmem>>, vector<256x128xf32>
    %c0_11 = arith.constant 0 : index
    %c0_12 = arith.constant 0 : index
    %19 = vector.load %arg3[%c0_11, %c0_12] : memref<256x1xi32, #tpu.memory_space<vmem>>, vector<256x1xi32>
    %20 = vector.broadcast %19 : vector<256x1xi32> to vector<256x128xi32>
    %21 = arith.cmpi eq, %15, %20 : vector<256x128xi32>
    %cst_13 = arith.constant 1.000000e+00 : f32
    %cst_14 = arith.constant 0.000000e+00 : f32
    %22 = vector.broadcast %cst_13 : f32 to vector<256x128xf32>
    %23 = vector.broadcast %cst_14 : f32 to vector<256x128xf32>
    %24 = arith.select %21, %22, %23 : vector<256x128xi1>, vector<256x128xf32>
    %25 = arith.truncf %24 : vector<256x128xf32> to vector<256x128xbf16>
    %c0_15 = arith.constant 0 : index
    %c0_16 = arith.constant 0 : index
    %26 = vector.load %arg4[%c0_15, %c0_16] : memref<256x1xi32, #tpu.memory_space<vmem>>, vector<256x1xi32>
    %27 = vector.broadcast %26 : vector<256x1xi32> to vector<256x128xi32>
    %28 = arith.cmpi eq, %15, %27 : vector<256x128xi32>
    %cst_17 = arith.constant 1.000000e+00 : f32
    %cst_18 = arith.constant 0.000000e+00 : f32
    %29 = vector.broadcast %cst_17 : f32 to vector<256x128xf32>
    %30 = vector.broadcast %cst_18 : f32 to vector<256x128xf32>
    %31 = arith.select %28, %29, %30 : vector<256x128xi1>, vector<256x128xf32>
    %32 = arith.truncf %31 : vector<256x128xf32> to vector<256x128xbf16>
    %c0_19 = arith.constant 0 : index
    %c0_20 = arith.constant 0 : index
    %33 = vector.load %arg5[%c0_19, %c0_20] : memref<1x256xi32, #tpu.memory_space<vmem>>, vector<1x256xi32>
    %34 = vector.broadcast %33 : vector<1x256xi32> to vector<128x256xi32>
    %35 = arith.cmpi eq, %16, %34 : vector<128x256xi32>
    %cst_21 = arith.constant 1.000000e+00 : f32
    %cst_22 = arith.constant 0.000000e+00 : f32
    %36 = vector.broadcast %cst_21 : f32 to vector<128x256xf32>
    %37 = vector.broadcast %cst_22 : f32 to vector<128x256xf32>
    %38 = arith.select %35, %36, %37 : vector<128x256xi1>, vector<128x256xf32>
    %39 = arith.truncf %38 : vector<128x256xf32> to vector<128x256xbf16>
    %40 = arith.truncf %18 : vector<256x128xf32> to vector<256x128xbf16>
    %c0_23 = arith.constant 0 : index
    %c0_24 = arith.constant 0 : index
    %c0_25 = arith.constant 0 : index
    %41 = vector.load %arg12[%c0_23, %c0_24, %c0_25] : memref<1x128x128xbf16, #tpu.memory_space<vmem>>, vector<1x128x128xbf16>
    %42 = vector.shape_cast %41 : vector<1x128x128xbf16> to vector<128x128xbf16>
    %cst_26 = arith.constant dense<0.000000e+00> : vector<256x128xf32>
    %43 = tpu.matmul %40, %42, %cst_26 {dimension_numbers = #tpu.dot_dimension_numbers<[1], [0], [0], [1], [0, 0, 1, 1], [], []>} : vector<256x128xbf16>, vector<128x128xbf16>, vector<256x128xf32> -> vector<256x128xf32>
    %c0_27 = arith.constant 0 : index
    %c0_28 = arith.constant 0 : index
    %c0_29 = arith.constant 0 : index
    %44 = vector.load %arg13[%c0_27, %c0_28, %c0_29] : memref<1x1x128xf32, #tpu.memory_space<vmem>>, vector<1x1x128xf32>
    %45 = vector.shape_cast %44 : vector<1x1x128xf32> to vector<1x128xf32>
    %46 = vector.broadcast %45 : vector<1x128xf32> to vector<256x128xf32>
    %47 = arith.addf %43, %46 : vector<256x128xf32>
    %48 = vector.extract_strided_slice %14 {offsets = [0, 0], sizes = [128, 256], strides = [1, 1]} : vector<128x384xbf16> to vector<128x256xbf16>
    %cst_30 = arith.constant dense<0.000000e+00> : vector<256x256xf32>
    %49 = tpu.matmul %25, %48, %cst_30 {dimension_numbers = #tpu.dot_dimension_numbers<[1], [0], [0], [1], [0, 0, 1, 1], [], []>} : vector<256x128xbf16>, vector<128x256xbf16>, vector<256x256xf32> -> vector<256x256xf32>
    %50 = vector.extract_strided_slice %14 {offsets = [0, 256], sizes = [128, 128], strides = [1, 1]} : vector<128x384xbf16> to vector<128x128xbf16>
    %cst_31 = arith.constant dense<0.000000e+00> : vector<256x128xf32>
    %51 = tpu.matmul %32, %50, %cst_31 {dimension_numbers = #tpu.dot_dimension_numbers<[1], [0], [0], [1], [0, 0, 1, 1], [], []>} : vector<256x128xbf16>, vector<128x128xbf16>, vector<256x128xf32> -> vector<256x128xf32>
    %52 = vector.extract_strided_slice %49 {offsets = [0, 128], sizes = [256, 128], strides = [1, 1]} : vector<256x256xf32> to vector<256x128xf32>
    %53 = arith.addf %47, %52 : vector<256x128xf32>
    %54 = arith.addf %53, %51 : vector<256x128xf32>
    %55 = arith.negf %54 : vector<256x128xf32>
    %56 = math.exp %55 : vector<256x128xf32>
    %cst_32 = arith.constant 1.000000e+00 : f32
    %57 = vector.broadcast %cst_32 : f32 to vector<256x128xf32>
    %58 = arith.addf %57, %56 : vector<256x128xf32>
    %59 = arith.divf %57, %58 : vector<256x128xf32>
    %60 = vector.extract_strided_slice %49 {offsets = [0, 0], sizes = [256, 128], strides = [1, 1]} : vector<256x256xf32> to vector<256x128xf32>
    %61 = arith.mulf %59, %60 : vector<256x128xf32>
    %62 = tpu.concatenate %61, %59 in 1 : vector<256x128xf32>, vector<256x128xf32> -> vector<256x256xf32>
    %63 = arith.truncf %62 : vector<256x256xf32> to vector<256x256xbf16>
    %cst_33 = arith.constant dense<0.000000e+00> : vector<128x256xf32>
    %64 = tpu.matmul %39, %63, %cst_33 {dimension_numbers = #tpu.dot_dimension_numbers<[1], [0], [0], [1], [0, 0, 1, 1], [], []>} : vector<128x256xbf16>, vector<256x256xbf16>, vector<128x256xf32> -> vector<128x256xf32>
    %65 = arith.addf %17, %64 : vector<128x256xf32>
    %c0_34 = arith.constant 0 : index
    %c0_35 = arith.constant 0 : index
    %c0_36 = arith.constant 0 : index
    %66 = vector.load %arg15[%c0_34, %c0_35, %c0_36] : memref<1x2x128xf32, #tpu.memory_space<vmem>>, vector<1x1x128xf32>
    %67 = vector.shape_cast %66 : vector<1x1x128xf32> to vector<1x128xf32>
    %68 = vector.broadcast %67 : vector<1x128xf32> to vector<256x128xf32>
    %69 = arith.mulf %54, %68 : vector<256x128xf32>
    %c0_37 = arith.constant 0 : index
    %c1 = arith.constant 1 : index
    %c0_38 = arith.constant 0 : index
    %70 = vector.load %arg15[%c0_37, %c1, %c0_38] : memref<1x2x128xf32, #tpu.memory_space<vmem>>, vector<1x1x128xf32>
    %71 = vector.shape_cast %70 : vector<1x1x128xf32> to vector<1x128xf32>
    %72 = vector.broadcast %71 : vector<1x128xf32> to vector<256x128xf32>
    %73 = arith.addf %69, %72 : vector<256x128xf32>
    %cst_39 = arith.constant 0.000000e+00 : f32
    %74 = vector.broadcast %cst_39 : f32 to vector<256x128xf32>
    %75 = arith.maximumf %73, %74 : vector<256x128xf32>
    %76 = arith.addf %18, %75 : vector<256x128xf32>
    %c0_40 = arith.constant 0 : index
    %c0_41 = arith.constant 0 : index
    %77 = vector.load %arg21[%c0_40, %c0_41] : memref<256x128xf32, #tpu.memory_space<vmem>>, vector<256x128xf32>
    tpu.vector_store %arg21[%c0_40, %c0_41], %76 {strides = array<i32>} : memref<256x128xf32, #tpu.memory_space<vmem>>, vector<256x128xf32>,
    %78 = vector.extract_strided_slice %65 {offsets = [0, 0], sizes = [128, 128], strides = [1, 1]} : vector<128x256xf32> to vector<128x128xf32>
    %79 = vector.extract_strided_slice %65 {offsets = [0, 128], sizes = [128, 128], strides = [1, 1]} : vector<128x256xf32> to vector<128x128xf32>
    %cst_42 = arith.constant 9.99999997E-7 : f32
    %80 = vector.broadcast %cst_42 : f32 to vector<128x128xf32>
    %81 = arith.addf %79, %80 : vector<128x128xf32>
    %82 = tpu.reciprocal %81 {approx = true} : vector<128x128xf32> -> vector<128x128xf32>
    %83 = arith.mulf %78, %82 : vector<128x128xf32>
    %84 = arith.addf %12, %83 : vector<128x128xf32>
    %c0_43 = arith.constant 0 : index
    %c0_44 = arith.constant 0 : index
    %c0_45 = arith.constant 0 : index
    %85 = vector.load %arg14[%c0_43, %c0_44, %c0_45] : memref<1x2x128xf32, #tpu.memory_space<vmem>>, vector<1x1x128xf32>
    %86 = vector.shape_cast %85 : vector<1x1x128xf32> to vector<1x128xf32>
    %87 = vector.broadcast %86 : vector<1x128xf32> to vector<128x128xf32>
    %88 = arith.mulf %84, %87 : vector<128x128xf32>
    %c0_46 = arith.constant 0 : index
    %c1_47 = arith.constant 1 : index
    %c0_48 = arith.constant 0 : index
    %89 = vector.load %arg14[%c0_46, %c1_47, %c0_48] : memref<1x2x128xf32, #tpu.memory_space<vmem>>, vector<1x1x128xf32>
    %90 = vector.shape_cast %89 : vector<1x1x128xf32> to vector<1x128xf32>
    %91 = vector.broadcast %90 : vector<1x128xf32> to vector<128x128xf32>
    %92 = arith.addf %88, %91 : vector<128x128xf32>
    %cst_49 = arith.constant 0.000000e+00 : f32
    %93 = vector.broadcast %cst_49 : f32 to vector<128x128xf32>
    %94 = arith.maximumf %92, %93 : vector<128x128xf32>
    %95 = arith.addf %3, %94 : vector<128x128xf32>
    %c0_50 = arith.constant 0 : index
    %c0_51 = arith.constant 0 : index
    %96 = vector.load %arg20[%c0_50, %c0_51] : memref<128x128xf32, #tpu.memory_space<vmem>>, vector<128x128xf32>
    tpu.vector_store %arg20[%c0_50, %c0_51], %95 {strides = array<i32>} : memref<128x128xf32, #tpu.memory_space<vmem>>, vector<128x128xf32>,
    %97 = arith.truncf %95 : vector<128x128xf32> to vector<128x128xbf16>
    %c0_52 = arith.constant 0 : index
    %c0_53 = arith.constant 0 : index
    %98 = vector.load %arg18[%c0_52, %c0_53] : memref<128x128xbf16, #tpu.memory_space<vmem>>, vector<128x128xbf16>
    tpu.vector_store %arg18[%c0_52, %c0_53], %97 {strides = array<i32>} : memref<128x128xbf16, #tpu.memory_space<vmem>>, vector<128x128xbf16>,
    %99 = arith.truncf %95 : vector<128x128xf32> to vector<128x128xbf16>
    %c0_54 = arith.constant 0 : index
    %c0_55 = arith.constant 0 : index
    %c0_56 = arith.constant 0 : index
    %100 = vector.load %arg16[%c0_54, %c0_55, %c0_56] : memref<1x128x128xbf16, #tpu.memory_space<vmem>>, vector<1x128x128xbf16>
    %101 = vector.shape_cast %100 : vector<1x128x128xbf16> to vector<128x128xbf16>
    %cst_57 = arith.constant dense<0.000000e+00> : vector<128x128xf32>
    %102 = tpu.matmul %99, %101, %cst_57 {dimension_numbers = #tpu.dot_dimension_numbers<[1], [0], [0], [1], [0, 0, 1, 1], [], []>} : vector<128x128xbf16>, vector<128x128xbf16>, vector<128x128xf32> -> vector<128x128xf32>
    %c0_58 = arith.constant 0 : index
    %c0_59 = arith.constant 0 : index
    %c0_60 = arith.constant 0 : index
    %103 = vector.load %arg17[%c0_58, %c0_59, %c0_60] : memref<1x1x128xf32, #tpu.memory_space<vmem>>, vector<1x1x128xf32>
    %104 = vector.shape_cast %103 : vector<1x1x128xf32> to vector<1x128xf32>
    %105 = vector.broadcast %104 : vector<1x128xf32> to vector<128x128xf32>
    %106 = arith.addf %102, %105 : vector<128x128xf32>
    %cst_61 = arith.constant 1.000000e+00 : f32
    %107 = vector.broadcast %cst_61 : f32 to vector<128x128xf32>
    %108 = arith.mulf %106, %107 : vector<128x128xf32>
    %cst_62 = arith.constant dense<0xFF800000> : vector<128xf32>
    %109 = vector.multi_reduction <maximumf>, %108, %cst_62 [1] : vector<128x128xf32> to vector<128xf32>
    %110 = vector.shape_cast %109 : vector<128xf32> to vector<128x1xf32>
    %111 = vector.broadcast %110 : vector<128x1xf32> to vector<128x128xf32>
    %112 = arith.subf %108, %111 : vector<128x128xf32>
    %113 = math.exp %112 : vector<128x128xf32>
    %cst_63 = arith.constant dense<0.000000e+00> : vector<128xf32>
    %114 = vector.multi_reduction <add>, %113, %cst_63 [1] : vector<128x128xf32> to vector<128xf32>
    %115 = vector.shape_cast %114 : vector<128xf32> to vector<128x1xf32>
    %116 = tpu.reciprocal %115 {approx = true} : vector<128x1xf32> -> vector<128x1xf32>
    %117 = vector.broadcast %116 : vector<128x1xf32> to vector<128x128xf32>
    %118 = arith.mulf %113, %117 : vector<128x128xf32>
    %c0_64 = arith.constant 0 : index
    %c0_65 = arith.constant 0 : index
    %c0_66 = arith.constant 0 : index
    %119 = vector.load %arg19[%c0_64, %c0_65, %c0_66] : memref<1x128x128xf32, #tpu.memory_space<vmem>>, vector<1x128x128xf32>
    %120 = vector.shape_cast %119 : vector<1x128x128xf32> to vector<128x128xf32>
    %121 = vector.shape_cast %118 : vector<128x128xf32> to vector<1x128x128xf32>
    tpu.vector_store %arg19[%c0_64, %c0_65, %c0_66], %121 {strides = array<i32>} : memref<1x128x128xf32, #tpu.memory_space<vmem>>, vector<1x128x128xf32>,
    return
  }
  func.func @transform_0(%arg0: i32) -> (i32, i32) {
    %c0_i32 = arith.constant 0 : i32
    %c0_i32_0 = arith.constant 0 : i32
    %c0_i32_1 = arith.constant 0 : i32
    return %c0_i32, %c0_i32_0 : i32, i32
  }
  func.func @transform_1(%arg0: i32) -> (i32, i32) {
    %c0_i32 = arith.constant 0 : i32
    %c0_i32_0 = arith.constant 0 : i32
    %c0_i32_1 = arith.constant 0 : i32
    return %c0_i32, %c0_i32_0 : i32, i32
  }
  func.func @transform_2(%arg0: i32) -> (i32, i32) {
    %c0_i32 = arith.constant 0 : i32
    %c0_i32_0 = arith.constant 0 : i32
    %c0_i32_1 = arith.constant 0 : i32
    return %c0_i32, %c0_i32_0 : i32, i32
  }
  func.func @transform_3(%arg0: i32) -> (i32, i32) {
    %c0_i32 = arith.constant 0 : i32
    %c0_i32_0 = arith.constant 0 : i32
    %c0_i32_1 = arith.constant 0 : i32
    return %c0_i32, %c0_i32_0 : i32, i32
  }
  func.func @transform_4(%arg0: i32) -> (i32, i32) {
    %c0_i32 = arith.constant 0 : i32
    %c0_i32_0 = arith.constant 0 : i32
    %c0_i32_1 = arith.constant 0 : i32
    return %c0_i32, %c0_i32_0 : i32, i32
  }
  func.func @transform_5(%arg0: i32) -> (i32, i32) {
    %c0_i32 = arith.constant 0 : i32
    %c0_i32_0 = arith.constant 0 : i32
    %c0_i32_1 = arith.constant 0 : i32
    return %c0_i32, %c0_i32_0 : i32, i32
  }
  func.func @transform_6(%arg0: i32) -> (i32, i32) {
    %c0_i32 = arith.constant 0 : i32
    %c0_i32_0 = arith.constant 0 : i32
    %c0_i32_1 = arith.constant 0 : i32
    return %c0_i32, %c0_i32_0 : i32, i32
  }
  func.func @transform_7(%arg0: i32) -> (i32, i32) {
    %c0_i32 = arith.constant 0 : i32
    %c0_i32_0 = arith.constant 0 : i32
    %c0_i32_1 = arith.constant 0 : i32
    return %c0_i32, %c0_i32_0 : i32, i32
  }
  func.func @transform_8(%arg0: i32) -> (i32, i32) {
    %c0_i32 = arith.constant 0 : i32
    %c0_i32_0 = arith.constant 0 : i32
    %c0_i32_1 = arith.constant 0 : i32
    return %c0_i32, %c0_i32_0 : i32, i32
  }
  func.func @transform_9(%arg0: i32) -> (i32, i32, i32) {
    %c0_i32 = arith.constant 0 : i32
    %c0_i32_0 = arith.constant 0 : i32
    %c0_i32_1 = arith.constant 0 : i32
    return %arg0, %c0_i32, %c0_i32_0 : i32, i32, i32
  }
  func.func @transform_10(%arg0: i32) -> (i32, i32, i32) {
    %c0_i32 = arith.constant 0 : i32
    %c0_i32_0 = arith.constant 0 : i32
    %c0_i32_1 = arith.constant 0 : i32
    return %arg0, %c0_i32, %c0_i32_0 : i32, i32, i32
  }
  func.func @transform_11(%arg0: i32) -> (i32, i32, i32) {
    %c0_i32 = arith.constant 0 : i32
    %c0_i32_0 = arith.constant 0 : i32
    %c0_i32_1 = arith.constant 0 : i32
    return %arg0, %c0_i32, %c0_i32_0 : i32, i32, i32
  }
  func.func @transform_12(%arg0: i32) -> (i32, i32, i32) {
    %c0_i32 = arith.constant 0 : i32
    %c0_i32_0 = arith.constant 0 : i32
    %c0_i32_1 = arith.constant 0 : i32
    return %arg0, %c0_i32, %c0_i32_0 : i32, i32, i32
  }
  func.func @transform_13(%arg0: i32) -> (i32, i32, i32) {
    %c0_i32 = arith.constant 0 : i32
    %c0_i32_0 = arith.constant 0 : i32
    %c0_i32_1 = arith.constant 0 : i32
    return %arg0, %c0_i32, %c0_i32_0 : i32, i32, i32
  }
  func.func @transform_14(%arg0: i32) -> (i32, i32, i32) {
    %c0_i32 = arith.constant 0 : i32
    %c0_i32_0 = arith.constant 0 : i32
    %c0_i32_1 = arith.constant 0 : i32
    return %arg0, %c0_i32, %c0_i32_0 : i32, i32, i32
  }
  func.func @transform_15(%arg0: i32) -> (i32, i32, i32) {
    %c0_i32 = arith.constant 0 : i32
    %c0_i32_0 = arith.constant 0 : i32
    %c0_i32_1 = arith.constant 0 : i32
    return %arg0, %c0_i32, %c0_i32_0 : i32, i32, i32
  }
  func.func @transform_16(%arg0: i32) -> (i32, i32, i32) {
    %c0_i32 = arith.constant 0 : i32
    %c0_i32_0 = arith.constant 0 : i32
    %c0_i32_1 = arith.constant 0 : i32
    return %arg0, %c0_i32, %c0_i32_0 : i32, i32, i32
  }
  func.func @transform_17(%arg0: i32) -> (i32, i32) {
    %c0_i32 = arith.constant 0 : i32
    %c0_i32_0 = arith.constant 0 : i32
    %c0_i32_1 = arith.constant 0 : i32
    return %c0_i32, %c0_i32_0 : i32, i32
  }
  func.func @transform_18(%arg0: i32) -> (i32, i32, i32) {
    %c0_i32 = arith.constant 0 : i32
    %c0_i32_0 = arith.constant 0 : i32
    %c0_i32_1 = arith.constant 0 : i32
    return %arg0, %c0_i32, %c0_i32_0 : i32, i32, i32
  }
}

</mosaic_0001>

<llo_original>
// kernel: tpu_custom_call.1
$region0: #{tpu_custom_call.1}
  #allocation0 [shape = 'u32[]', space=smem, size = 0x4, offset = 0x4, fixed_abs, tag = 'smem constant byte address 0x4 - core index']
  #allocation1 [shape = 'u32[144,128]{1,0:T(1,128)}', space=vmem, size = 0x12000, scoped, tag = 'internal scratch']
  #allocation2 [shape = 'f32[128,128]{1,0:T(8,128)}', space=vmem, size = 0x10000, scoped, tag = 'scratch operand']
  #allocation3 [shape = 'f32[256,128]{1,0:T(8,128)}', space=vmem, size = 0x20000, scoped, tag = 'scratch operand']
  %s0 = inlined_call_operand.vmem [shape: f32[128,2], index: 0, kind: input, shape index: {}]
  %s1 = inlined_call_operand.vmem [shape: f32[256,1], index: 1, kind: input, shape index: {}]
  %s2 = inlined_call_operand.vmem [shape: s32[256,1], index: 2, kind: input, shape index: {}]
  %s3 = inlined_call_operand.vmem [shape: s32[256,1], index: 3, kind: input, shape index: {}]
  %s4 = inlined_call_operand.vmem [shape: s32[1,256], index: 4, kind: input, shape index: {}]
  %s5 = inlined_call_operand.vmem [shape: bf16[2,128], index: 5, kind: input, shape index: {}]
  %s6 = inlined_call_operand.vmem [shape: f32[1,128], index: 6, kind: input, shape index: {}]
  %s7 = inlined_call_operand.vmem [shape: bf16[1,128], index: 7, kind: input, shape index: {}]
  %s8 = inlined_call_operand.vmem [shape: f32[1,128], index: 8, kind: input, shape index: {}]
  %s9 = inlined_call_operand.hbm [shape: bf16[4,128,512], index: 9, kind: input, shape index: {}]
  %s10 = inlined_call_operand.vmem [shape: f32[4,1,512], index: 10, kind: input, shape index: {}]
  %s11 = inlined_call_operand.vmem [shape: bf16[4,128,128], index: 11, kind: input, shape index: {}]
  %s12 = inlined_call_operand.vmem [shape: f32[4,1,128], index: 12, kind: input, shape index: {}]
  %s13 = inlined_call_operand.vmem [shape: f32[4,2,128], index: 13, kind: input, shape index: {}]
  %s14 = inlined_call_operand.vmem [shape: f32[4,2,128], index: 14, kind: input, shape index: {}]
  %s15 = inlined_call_operand.vmem [shape: bf16[4,128,128], index: 15, kind: input, shape index: {}]
  %s16 = inlined_call_operand.vmem [shape: f32[4,1,128], index: 16, kind: input, shape index: {}]
  %s17 = inlined_call_operand.hbm [shape: bf16[128,128], index: 17, kind: output, shape index: {0}]
  %s18 = inlined_call_operand.hbm [shape: f32[4,128,128], index: 18, kind: output, shape index: {1}]
  %19 = xla_tuple %s17, %s18
  %s20 = sld [smem:[#allocation0]]
  $region117: #{tpu_custom_call.1} parent=0
    _
  %s22 = ssub.s32 1, %s20
  %s23 = scalar_select 0, %s22, %s20
  $region1: #{tpu_custom_call.1} parent=0
    #allocation4 [shape = 'u8[262144]{0}', space=vmem, size = 0x40000, scoped, tag = 'input window, operand 9']
    #allocation5 [shape = 's32[2]{0}', space=sflag, size = 0x8, scoped, tag = 'scoped memory for tpu_custom_call.1']
    #allocation6 [shape = 's32[2]{0}', space=sflag, size = 0x8, scoped, tag = 'scoped memory for tpu_custom_call.1']
    #allocation7 [shape = 'u8[32768]{0}', space=vmem, size = 0x8000, scoped, tag = 'output window, operand 0, single buffered']
    #allocation8 [shape = 'u8[131072]{0}', space=vmem, size = 0x20000, scoped, tag = 'output window, operand 1']
    #allocation9 [shape = 's32[2]{0}', space=sflag, size = 0x8, scoped, tag = 'scoped memory for tpu_custom_call.1']
    %24 = vsyncpa [#allocation5], 0
    %s25 = scalar_lea.sflag [#allocation5], 1
    %26 = vsyncpa %s25, 0
    %27 = vsyncpa [#allocation6], 0
    %28 = vsyncpa [#allocation9], 0
    %s29 = scalar_lea.sflag [#allocation9], 1
    %30 = vsyncpa %s29, 0
    loop: start=0, step=1, limit=6
    $region2: #{tpu_custom_call.1} parent=1 // loop_pre_header
      _
    $region3: #{tpu_custom_call.1} parent=1 // loop_header
      %s32 = sphi 0, %s36
      %p33 = scmp.ge.s32.totalorder %s32, 6
      %s40 = sphi 0, %s40
      %s42 = sphi 0, %s40
      %s43 = sphi 0, %s42
      %s57 = sphi 0, %s43
      %s61 = sphi 0, %s61
      %s63 = sphi 0, %s61
      %s64 = sphi 0, %s63
      %s78 = sphi 0, %s64
      %s82 = sphi 0, %s82
      %s84 = sphi 0, %s82
      %s85 = sphi 0, %s84
      %s99 = sphi 0, %s85
      %s103 = sphi 0, %s103
      %s105 = sphi 0, %s103
      %s106 = sphi 0, %s105
      %s120 = sphi 0, %s106
      %s124 = sphi 0, %s124
      %s126 = sphi 0, %s124
      %s127 = sphi 0, %s126
      %s141 = sphi 0, %s127
      %s145 = sphi 0, %s145
      %s147 = sphi 0, %s145
      %s148 = sphi 0, %s147
      %s162 = sphi 0, %s148
      %s166 = sphi 0, %s166
      %s168 = sphi 0, %s166
      %s169 = sphi 0, %s168
      %s183 = sphi 0, %s169
      %s187 = sphi 0, %s187
      %s189 = sphi 0, %s187
      %s190 = sphi 0, %s189
      %s204 = sphi 0, %s190
      %s208 = sphi 0, %s208
      %s210 = sphi 0, %s208
      %s211 = sphi 0, %s210
      %s225 = sphi 0, %s211
      %s231 = sphi 0, %s233
      %s234 = sphi 0, %s231
      %s235 = sphi 0, %s234
      %s251 = sphi 0, %s235
      %s257 = sphi 0, %s259
      %s260 = sphi 0, %s257
      %s261 = sphi 0, %s260
      %s277 = sphi 0, %s261
      %s283 = sphi 0, %s285
      %s286 = sphi 0, %s283
      %s287 = sphi 0, %s286
      %s303 = sphi 0, %s287
      %s309 = sphi 0, %s311
      %s312 = sphi 0, %s309
      %s313 = sphi 0, %s312
      %s329 = sphi 0, %s313
      %s335 = sphi 0, %s337
      %s338 = sphi 0, %s335
      %s339 = sphi 0, %s338
      %s355 = sphi 0, %s339
      %s361 = sphi 0, %s363
      %s364 = sphi 0, %s361
      %s365 = sphi 0, %s364
      %s381 = sphi 0, %s365
      %s387 = sphi 0, %s389
      %s390 = sphi 0, %s387
      %s391 = sphi 0, %s390
      %s407 = sphi 0, %s391
      %s413 = sphi 0, %s415
      %s416 = sphi 0, %s413
      %s417 = sphi 0, %s416
      %s433 = sphi 0, %s417
      %s437 = sphi 0, %s437
      %s439 = sphi 0, %s437
      %s440 = sphi 0, %s439
      %s454 = sphi 0, %s440
      %s460 = sphi 0, %s462
      %s463 = sphi 0, %s460
      %s464 = sphi 0, %s463
      %s480 = sphi 0, %s464
    $region4: #{tpu_custom_call.1} parent=1 // loop_header_branch
      %35 = sbr.rel (%p33) target = $region8
    $region5: #{tpu_custom_call.1} parent=1 // loop_body
      %s37 = ssub.s32 %s32, 1
      %s38 = ssub.s32 %s32, 2
      %s39 = sadd.s32 %s32, 1
      %s41 = sadd.s32 %s40, 1
      %p44 = scmp.eq.s32.totalorder %s32, 3
      %p45 = scmp.ne.s32.totalorder %s40, %s42
      %p46 = scmp.eq.s32.totalorder %s32, 0
      %p47 = por %p45, %p46
      %p48 = scmp.ne.s32.totalorder %s40, %s42
      %p49 = scmp.eq.s32.totalorder %s37, 3
      %p50 = por %p48, %p49
      %p51 = scmp.ne.s32.totalorder %s42, %s43
      %p52 = scmp.eq.s32.totalorder %s37, 0
      %p53 = por %p51, %p52
      %p54 = scmp.ne.s32.totalorder %s42, %s43
      %p55 = scmp.eq.s32.totalorder %s38, 3
      %p56 = por %p54, %p55
      %p58 = scmp.ne.s32.totalorder %s43, %s57
      %p59 = scmp.eq.s32.totalorder %s38, 0
      %p60 = por %p58, %p59
      %s62 = sadd.s32 %s61, 1
      %p65 = scmp.eq.s32.totalorder %s32, 3
      %p66 = scmp.ne.s32.totalorder %s61, %s63
      %p67 = scmp.eq.s32.totalorder %s32, 0
      %p68 = por %p66, %p67
      %p69 = scmp.ne.s32.totalorder %s61, %s63
      %p70 = scmp.eq.s32.totalorder %s37, 3
      %p71 = por %p69, %p70
      %p72 = scmp.ne.s32.totalorder %s63, %s64
      %p73 = scmp.eq.s32.totalorder %s37, 0
      %p74 = por %p72, %p73
      %p75 = scmp.ne.s32.totalorder %s63, %s64
      %p76 = scmp.eq.s32.totalorder %s38, 3
      %p77 = por %p75, %p76
      %p79 = scmp.ne.s32.totalorder %s64, %s78
      %p80 = scmp.eq.s32.totalorder %s38, 0
      %p81 = por %p79, %p80
      %s83 = sadd.s32 %s82, 1
      %p86 = scmp.eq.s32.totalorder %s32, 3
      %p87 = scmp.ne.s32.totalorder %s82, %s84
      %p88 = scmp.eq.s32.totalorder %s32, 0
      %p89 = por %p87, %p88
      %p90 = scmp.ne.s32.totalorder %s82, %s84
      %p91 = scmp.eq.s32.totalorder %s37, 3
      %p92 = por %p90, %p91
      %p93 = scmp.ne.s32.totalorder %s84, %s85
      %p94 = scmp.eq.s32.totalorder %s37, 0
      %p95 = por %p93, %p94
      %p96 = scmp.ne.s32.totalorder %s84, %s85
      %p97 = scmp.eq.s32.totalorder %s38, 3
      %p98 = por %p96, %p97
      %p100 = scmp.ne.s32.totalorder %s85, %s99
      %p101 = scmp.eq.s32.totalorder %s38, 0
      %p102 = por %p100, %p101
      %s104 = sadd.s32 %s103, 1
      %p107 = scmp.eq.s32.totalorder %s32, 3
      %p108 = scmp.ne.s32.totalorder %s103, %s105
      %p109 = scmp.eq.s32.totalorder %s32, 0
      %p110 = por %p108, %p109
      %p111 = scmp.ne.s32.totalorder %s103, %s105
      %p112 = scmp.eq.s32.totalorder %s37, 3
      %p113 = por %p111, %p112
      %p114 = scmp.ne.s32.totalorder %s105, %s106
      %p115 = scmp.eq.s32.totalorder %s37, 0
      %p116 = por %p114, %p115
      %p117 = scmp.ne.s32.totalorder %s105, %s106
      %p118 = scmp.eq.s32.totalorder %s38, 3
      %p119 = por %p117, %p118
      %p121 = scmp.ne.s32.totalorder %s106, %s120
      %p122 = scmp.eq.s32.totalorder %s38, 0
      %p123 = por %p121, %p122
      %s125 = sadd.s32 %s124, 1
      %p128 = scmp.eq.s32.totalorder %s32, 3
      %p129 = scmp.ne.s32.totalorder %s124, %s126
      %p130 = scmp.eq.s32.totalorder %s32, 0
      %p131 = por %p129, %p130
      %p132 = scmp.ne.s32.totalorder %s124, %s126
      %p133 = scmp.eq.s32.totalorder %s37, 3
      %p134 = por %p132, %p133
      %p135 = scmp.ne.s32.totalorder %s126, %s127
      %p136 = scmp.eq.s32.totalorder %s37, 0
      %p137 = por %p135, %p136
      %p138 = scmp.ne.s32.totalorder %s126, %s127
      %p139 = scmp.eq.s32.totalorder %s38, 3
      %p140 = por %p138, %p139
      %p142 = scmp.ne.s32.totalorder %s127, %s141
      %p143 = scmp.eq.s32.totalorder %s38, 0
      %p144 = por %p142, %p143
      %s146 = sadd.s32 %s145, 1
      %p149 = scmp.eq.s32.totalorder %s32, 3
      %p150 = scmp.ne.s32.totalorder %s145, %s147
      %p151 = scmp.eq.s32.totalorder %s32, 0
      %p152 = por %p150, %p151
      %p153 = scmp.ne.s32.totalorder %s145, %s147
      %p154 = scmp.eq.s32.totalorder %s37, 3
      %p155 = por %p153, %p154
      %p156 = scmp.ne.s32.totalorder %s147, %s148
      %p157 = scmp.eq.s32.totalorder %s37, 0
      %p158 = por %p156, %p157
      %p159 = scmp.ne.s32.totalorder %s147, %s148
      %p160 = scmp.eq.s32.totalorder %s38, 3
      %p161 = por %p159, %p160
      %p163 = scmp.ne.s32.totalorder %s148, %s162
      %p164 = scmp.eq.s32.totalorder %s38, 0
      %p165 = por %p163, %p164
      %s167 = sadd.s32 %s166, 1
      %p170 = scmp.eq.s32.totalorder %s32, 3
      %p171 = scmp.ne.s32.totalorder %s166, %s168
      %p172 = scmp.eq.s32.totalorder %s32, 0
      %p173 = por %p171, %p172
      %p174 = scmp.ne.s32.totalorder %s166, %s168
      %p175 = scmp.eq.s32.totalorder %s37, 3
      %p176 = por %p174, %p175
      %p177 = scmp.ne.s32.totalorder %s168, %s169
      %p178 = scmp.eq.s32.totalorder %s37, 0
      %p179 = por %p177, %p178
      %p180 = scmp.ne.s32.totalorder %s168, %s169
      %p181 = scmp.eq.s32.totalorder %s38, 3
      %p182 = por %p180, %p181
      %p184 = scmp.ne.s32.totalorder %s169, %s183
      %p185 = scmp.eq.s32.totalorder %s38, 0
      %p186 = por %p184, %p185
      %s188 = sadd.s32 %s187, 1
      %p191 = scmp.eq.s32.totalorder %s32, 3
      %p192 = scmp.ne.s32.totalorder %s187, %s189
      %p193 = scmp.eq.s32.totalorder %s32, 0
      %p194 = por %p192, %p193
      %p195 = scmp.ne.s32.totalorder %s187, %s189
      %p196 = scmp.eq.s32.totalorder %s37, 3
      %p197 = por %p195, %p196
      %p198 = scmp.ne.s32.totalorder %s189, %s190
      %p199 = scmp.eq.s32.totalorder %s37, 0
      %p200 = por %p198, %p199
      %p201 = scmp.ne.s32.totalorder %s189, %s190
      %p202 = scmp.eq.s32.totalorder %s38, 3
      %p203 = por %p201, %p202
      %p205 = scmp.ne.s32.totalorder %s190, %s204
      %p206 = scmp.eq.s32.totalorder %s38, 0
      %p207 = por %p205, %p206
      %s209 = sadd.s32 %s208, 1
      %p212 = scmp.eq.s32.totalorder %s32, 3
      %p213 = scmp.ne.s32.totalorder %s208, %s210
      %p214 = scmp.eq.s32.totalorder %s32, 0
      %p215 = por %p213, %p214
      %p216 = scmp.ne.s32.totalorder %s208, %s210
      %p217 = scmp.eq.s32.totalorder %s37, 3
      %p218 = por %p216, %p217
      %p219 = scmp.ne.s32.totalorder %s210, %s211
      %p220 = scmp.eq.s32.totalorder %s37, 0
      %p221 = por %p219, %p220
      %p222 = scmp.ne.s32.totalorder %s210, %s211
      %p223 = scmp.eq.s32.totalorder %s38, 3
      %p224 = por %p222, %p223
      %p226 = scmp.ne.s32.totalorder %s211, %s225
      %p227 = scmp.eq.s32.totalorder %s38, 0
      %p228 = por %p226, %p227
      %s229 = ssub.s32 %s32, %s39
      %p230 = scmp.eq.s32.totalorder %s229, 0
      %s232 = sadd.s32 %s231, 1
      %s233 = scalar_select %p230, %s231, %s232
      %p236 = pneg %p230
      %p237 = scmp.eq.s32.totalorder %s32, 3
      %p238 = por %p236, %p237
      %p239 = scmp.ne.s32.totalorder %s231, %s234
      %p240 = scmp.eq.s32.totalorder %s32, 0
      %p241 = por %p239, %p240
      %p242 = scmp.ne.s32.totalorder %s231, %s234
      %p243 = scmp.eq.s32.totalorder %s37, 3
      %p244 = por %p242, %p243
      %p245 = scmp.ne.s32.totalorder %s234, %s235
      %p246 = scmp.eq.s32.totalorder %s37, 0
      %p247 = por %p245, %p246
      %p248 = scmp.ne.s32.totalorder %s234, %s235
      %p249 = scmp.eq.s32.totalorder %s38, 3
      %p250 = por %p248, %p249
      %p252 = scmp.ne.s32.totalorder %s235, %s251
      %p253 = scmp.eq.s32.totalorder %s38, 0
      %p254 = por %p252, %p253
      %s255 = ssub.s32 %s32, %s39
      %p256 = scmp.eq.s32.totalorder %s255, 0
      %s258 = sadd.s32 %s257, 1
      %s259 = scalar_select %p256, %s257, %s258
      %p262 = pneg %p256
      %p263 = scmp.eq.s32.totalorder %s32, 3
      %p264 = por %p262, %p263
      %p265 = scmp.ne.s32.totalorder %s257, %s260
      %p266 = scmp.eq.s32.totalorder %s32, 0
      %p267 = por %p265, %p266
      %p268 = scmp.ne.s32.totalorder %s257, %s260
      %p269 = scmp.eq.s32.totalorder %s37, 3
      %p270 = por %p268, %p269
      %p271 = scmp.ne.s32.totalorder %s260, %s261
      %p272 = scmp.eq.s32.totalorder %s37, 0
      %p273 = por %p271, %p272
      %p274 = scmp.ne.s32.totalorder %s260, %s261
      %p275 = scmp.eq.s32.totalorder %s38, 3
      %p276 = por %p274, %p275
      %p278 = scmp.ne.s32.totalorder %s261, %s277
      %p279 = scmp.eq.s32.totalorder %s38, 0
      %p280 = por %p278, %p279
      %s281 = ssub.s32 %s32, %s39
      %p282 = scmp.eq.s32.totalorder %s281, 0
      %s284 = sadd.s32 %s283, 1
      %s285 = scalar_select %p282, %s283, %s284
      %p288 = pneg %p282
      %p289 = scmp.eq.s32.totalorder %s32, 3
      %p290 = por %p288, %p289
      %p291 = scmp.ne.s32.totalorder %s283, %s286
      %p292 = scmp.eq.s32.totalorder %s32, 0
      %p293 = por %p291, %p292
      %p294 = scmp.ne.s32.totalorder %s283, %s286
      %p295 = scmp.eq.s32.totalorder %s37, 3
      %p296 = por %p294, %p295
      %p297 = scmp.ne.s32.totalorder %s286, %s287
      %p298 = scmp.eq.s32.totalorder %s37, 0
      %p299 = por %p297, %p298
      %p300 = scmp.ne.s32.totalorder %s286, %s287
      %p301 = scmp.eq.s32.totalorder %s38, 3
      %p302 = por %p300, %p301
      %p304 = scmp.ne.s32.totalorder %s287, %s303
      %p305 = scmp.eq.s32.totalorder %s38, 0
      %p306 = por %p304, %p305
      %s307 = ssub.s32 %s32, %s39
      %p308 = scmp.eq.s32.totalorder %s307, 0
      %s310 = sadd.s32 %s309, 1
      %s311 = scalar_select %p308, %s309, %s310
      %p314 = pneg %p308
      %p315 = scmp.eq.s32.totalorder %s32, 3
      %p316 = por %p314, %p315
      %p317 = scmp.ne.s32.totalorder %s309, %s312
      %p318 = scmp.eq.s32.totalorder %s32, 0
      %p319 = por %p317, %p318
      %p320 = scmp.ne.s32.totalorder %s309, %s312
      %p321 = scmp.eq.s32.totalorder %s37, 3
      %p322 = por %p320, %p321
      %p323 = scmp.ne.s32.totalorder %s312, %s313
      %p324 = scmp.eq.s32.totalorder %s37, 0
      %p325 = por %p323, %p324
      %p326 = scmp.ne.s32.totalorder %s312, %s313
      %p327 = scmp.eq.s32.totalorder %s38, 3
      %p328 = por %p326, %p327
      %p330 = scmp.ne.s32.totalorder %s313, %s329
      %p331 = scmp.eq.s32.totalorder %s38, 0
      %p332 = por %p330, %p331
      %s333 = ssub.s32 %s32, %s39
      %p334 = scmp.eq.s32.totalorder %s333, 0
      %s336 = sadd.s32 %s335, 1
      %s337 = scalar_select %p334, %s335, %s336
      %p340 = pneg %p334
      %p341 = scmp.eq.s32.totalorder %s32, 3
      %p342 = por %p340, %p341
      %p343 = scmp.ne.s32.totalorder %s335, %s338
      %p344 = scmp.eq.s32.totalorder %s32, 0
      %p345 = por %p343, %p344
      %p346 = scmp.ne.s32.totalorder %s335, %s338
      %p347 = scmp.eq.s32.totalorder %s37, 3
      %p348 = por %p346, %p347
      %p349 = scmp.ne.s32.totalorder %s338, %s339
      %p350 = scmp.eq.s32.totalorder %s37, 0
      %p351 = por %p349, %p350
      %p352 = scmp.ne.s32.totalorder %s338, %s339
      %p353 = scmp.eq.s32.totalorder %s38, 3
      %p354 = por %p352, %p353
      %p356 = scmp.ne.s32.totalorder %s339, %s355
      %p357 = scmp.eq.s32.totalorder %s38, 0
      %p358 = por %p356, %p357
      %s359 = ssub.s32 %s32, %s39
      %p360 = scmp.eq.s32.totalorder %s359, 0
      %s362 = sadd.s32 %s361, 1
      %s363 = scalar_select %p360, %s361, %s362
      %p366 = pneg %p360
      %p367 = scmp.eq.s32.totalorder %s32, 3
      %p368 = por %p366, %p367
      %p369 = scmp.ne.s32.totalorder %s361, %s364
      %p370 = scmp.eq.s32.totalorder %s32, 0
      %p371 = por %p369, %p370
      %p372 = scmp.ne.s32.totalorder %s361, %s364
      %p373 = scmp.eq.s32.totalorder %s37, 3
      %p374 = por %p372, %p373
      %p375 = scmp.ne.s32.totalorder %s364, %s365
      %p376 = scmp.eq.s32.totalorder %s37, 0
      %p377 = por %p375, %p376
      %p378 = scmp.ne.s32.totalorder %s364, %s365
      %p379 = scmp.eq.s32.totalorder %s38, 3
      %p380 = por %p378, %p379
      %p382 = scmp.ne.s32.totalorder %s365, %s381
      %p383 = scmp.eq.s32.totalorder %s38, 0
      %p384 = por %p382, %p383
      %s385 = ssub.s32 %s32, %s39
      %p386 = scmp.eq.s32.totalorder %s385, 0
      %s388 = sadd.s32 %s387, 1
      %s389 = scalar_select %p386, %s387, %s388
      %p392 = pneg %p386
      %p393 = scmp.eq.s32.totalorder %s32, 3
      %p394 = por %p392, %p393
      %p395 = scmp.ne.s32.totalorder %s387, %s390
      %p396 = scmp.eq.s32.totalorder %s32, 0
      %p397 = por %p395, %p396
      %p398 = scmp.ne.s32.totalorder %s387, %s390
      %p399 = scmp.eq.s32.totalorder %s37, 3
      %p400 = por %p398, %p399
      %p401 = scmp.ne.s32.totalorder %s390, %s391
      %p402 = scmp.eq.s32.totalorder %s37, 0
      %p403 = por %p401, %p402
      %p404 = scmp.ne.s32.totalorder %s390, %s391
      %p405 = scmp.eq.s32.totalorder %s38, 3
      %p406 = por %p404, %p405
      %p408 = scmp.ne.s32.totalorder %s391, %s407
      %p409 = scmp.eq.s32.totalorder %s38, 0
      %p410 = por %p408, %p409
      %s411 = ssub.s32 %s32, %s39
      %p412 = scmp.eq.s32.totalorder %s411, 0
      %s414 = sadd.s32 %s413, 1
      %s415 = scalar_select %p412, %s413, %s414
      %p418 = pneg %p412
      %p419 = scmp.eq.s32.totalorder %s32, 3
      %p420 = por %p418, %p419
      %p421 = scmp.ne.s32.totalorder %s413, %s416
      %p422 = scmp.eq.s32.totalorder %s32, 0
      %p423 = por %p421, %p422
      %p424 = scmp.ne.s32.totalorder %s413, %s416
      %p425 = scmp.eq.s32.totalorder %s37, 3
      %p426 = por %p424, %p425
      %p427 = scmp.ne.s32.totalorder %s416, %s417
      %p428 = scmp.eq.s32.totalorder %s37, 0
      %p429 = por %p427, %p428
      %p430 = scmp.ne.s32.totalorder %s416, %s417
      %p431 = scmp.eq.s32.totalorder %s38, 3
      %p432 = por %p430, %p431
      %p434 = scmp.ne.s32.totalorder %s417, %s433
      %p435 = scmp.eq.s32.totalorder %s38, 0
      %p436 = por %p434, %p435
      %s438 = sadd.s32 %s437, 1
      %p441 = scmp.eq.s32.totalorder %s32, 3
      %p442 = scmp.ne.s32.totalorder %s437, %s439
      %p443 = scmp.eq.s32.totalorder %s32, 0
      %p444 = por %p442, %p443
      %p445 = scmp.ne.s32.totalorder %s437, %s439
      %p446 = scmp.eq.s32.totalorder %s37, 3
      %p447 = por %p445, %p446
      %p448 = scmp.ne.s32.totalorder %s439, %s440
      %p449 = scmp.eq.s32.totalorder %s37, 0
      %p450 = por %p448, %p449
      %p451 = scmp.ne.s32.totalorder %s439, %s440
      %p452 = scmp.eq.s32.totalorder %s38, 3
      %p453 = por %p451, %p452
      %p455 = scmp.ne.s32.totalorder %s440, %s454
      %p456 = scmp.eq.s32.totalorder %s38, 0
      %p457 = por %p455, %p456
      %s458 = ssub.s32 %s32, %s39
      %p459 = scmp.eq.s32.totalorder %s458, 0
      %s461 = sadd.s32 %s460, 1
      %s462 = scalar_select %p459, %s460, %s461
      %p465 = pneg %p459
      %p466 = scmp.eq.s32.totalorder %s32, 3
      %p467 = por %p465, %p466
      %p468 = scmp.ne.s32.totalorder %s460, %s463
      %p469 = scmp.eq.s32.totalorder %s32, 0
      %p470 = por %p468, %p469
      %p471 = scmp.ne.s32.totalorder %s460, %s463
      %p472 = scmp.eq.s32.totalorder %s37, 3
      %p473 = por %p471, %p472
      %p474 = scmp.ne.s32.totalorder %s463, %s464
      %p475 = scmp.eq.s32.totalorder %s37, 0
      %p476 = por %p474, %p475
      %p477 = scmp.ne.s32.totalorder %s463, %s464
      %p478 = scmp.eq.s32.totalorder %s38, 3
      %p479 = por %p477, %p478
      %p481 = scmp.ne.s32.totalorder %s464, %s480
      %p482 = scmp.eq.s32.totalorder %s38, 0
      %p483 = por %p481, %p482
      %p484 = scmp.le.s32.totalorder 1, %s32
      %p485 = scmp.lt.s32.totalorder %s32, 5
      %p486 = pnand %p484, %p485
      %p487 = pneg %p486
      // Predicated region
      $region9: #{tpu_custom_call.1} parent=5 // pred_check
        _
      $region10: #{tpu_custom_call.1} parent=5 // pred_check_branch
        %489 = sbr.rel (%p486) target = $region12
      $region11: #{tpu_custom_call.1} parent=5 // pred_region
        %s490 = ssub.s32 %s32, 1
        // Predicated region
        $region13: #{tpu_custom_call.1} parent=11 // pred_check
          %p491 = pneg %p53
        $region14: #{tpu_custom_call.1} parent=11 // pred_check_branch
          %493 = sbr.rel (%p491) target = $region16
        $region15: #{tpu_custom_call.1} parent=11 // pred_region
          _
        $region16: #{tpu_custom_call.1} parent=11 // pred_fallthru
          _
        // Predicated region
        $region17: #{tpu_custom_call.1} parent=11 // pred_check
          %p494 = pneg %p74
        $region18: #{tpu_custom_call.1} parent=11 // pred_check_branch
          %496 = sbr.rel (%p494) target = $region20
        $region19: #{tpu_custom_call.1} parent=11 // pred_region
          _
        $region20: #{tpu_custom_call.1} parent=11 // pred_fallthru
          _
        // Predicated region
        $region21: #{tpu_custom_call.1} parent=11 // pred_check
          %p497 = pneg %p95
        $region22: #{tpu_custom_call.1} parent=11 // pred_check_branch
          %499 = sbr.rel (%p497) target = $region24
        $region23: #{tpu_custom_call.1} parent=11 // pred_region
          _
        $region24: #{tpu_custom_call.1} parent=11 // pred_fallthru
          _
        // Predicated region
        $region25: #{tpu_custom_call.1} parent=11 // pred_check
          %p500 = pneg %p116
        $region26: #{tpu_custom_call.1} parent=11 // pred_check_branch
          %502 = sbr.rel (%p500) target = $region28
        $region27: #{tpu_custom_call.1} parent=11 // pred_region
          _
        $region28: #{tpu_custom_call.1} parent=11 // pred_fallthru
          _
        // Predicated region
        $region29: #{tpu_custom_call.1} parent=11 // pred_check
          %p503 = pneg %p137
        $region30: #{tpu_custom_call.1} parent=11 // pred_check_branch
          %505 = sbr.rel (%p503) target = $region32
        $region31: #{tpu_custom_call.1} parent=11 // pred_region
          _
        $region32: #{tpu_custom_call.1} parent=11 // pred_fallthru
          _
        // Predicated region
        $region33: #{tpu_custom_call.1} parent=11 // pred_check
          %p506 = pneg %p158
        $region34: #{tpu_custom_call.1} parent=11 // pred_check_branch
          %508 = sbr.rel (%p506) target = $region36
        $region35: #{tpu_custom_call.1} parent=11 // pred_region
          _
        $region36: #{tpu_custom_call.1} parent=11 // pred_fallthru
          _
        // Predicated region
        $region37: #{tpu_custom_call.1} parent=11 // pred_check
          %p509 = pneg %p179
        $region38: #{tpu_custom_call.1} parent=11 // pred_check_branch
          %511 = sbr.rel (%p509) target = $region40
        $region39: #{tpu_custom_call.1} parent=11 // pred_region
          _
        $region40: #{tpu_custom_call.1} parent=11 // pred_fallthru
          _
        // Predicated region
        $region41: #{tpu_custom_call.1} parent=11 // pred_check
          %p512 = pneg %p200
        $region42: #{tpu_custom_call.1} parent=11 // pred_check_branch
          %514 = sbr.rel (%p512) target = $region44
        $region43: #{tpu_custom_call.1} parent=11 // pred_region
          _
        $region44: #{tpu_custom_call.1} parent=11 // pred_fallthru
          _
        // Predicated region
        $region45: #{tpu_custom_call.1} parent=11 // pred_check
          %p515 = pneg %p221
        $region46: #{tpu_custom_call.1} parent=11 // pred_check_branch
          %517 = sbr.rel (%p515) target = $region48
        $region47: #{tpu_custom_call.1} parent=11 // pred_region
          _
        $region48: #{tpu_custom_call.1} parent=11 // pred_fallthru
          _
      $region12: #{tpu_custom_call.1} parent=5 // pred_fallthru
        _
      %p518 = scmp.lt.s32.totalorder %s32, 4
      // Predicated region
      $region49: #{tpu_custom_call.1} parent=5 // pred_check
        %p519 = pneg %p518
      $region50: #{tpu_custom_call.1} parent=5 // pred_check_branch
        %521 = sbr.rel (%p519) target = $region52
      $region51: #{tpu_custom_call.1} parent=5 // pred_region
        // Predicated region
        $region53: #{tpu_custom_call.1} parent=51 // pred_check
          %p522 = pneg %p241
        $region54: #{tpu_custom_call.1} parent=51 // pred_check_branch
          %524 = sbr.rel (%p522) target = $region56
        $region55: #{tpu_custom_call.1} parent=51 // pred_region
          %s525 = sand.u32 %s231, 1
          %s526 = scalar_lea.sflag [#allocation5], %s525
          %s527 = sand.u32 %s231, 1
          %s528 = smul.addr %s527, 256
          %s529 = scalar_lea.vmem [#allocation4], %s528
          %s531 = ssub.s32 4096, 4096
          %532 = vsyncadd %s526, %s531
          %s533 = smul.addr %s32, 64
          %s534 = smul.addr %s533, 64
          %s535 = scalar_lea.hbm %s9, %s534
          %s536 = sshll.u32 %s529, 4
          %s537 = int_to_ptr.vmem [resolvable:$true] %s536
          %542 = dma.hbm_to_vmem [thread:$0]  %s535, 4096, %s537, %s526, 256, 256, 16
        $region56: #{tpu_custom_call.1} parent=51 // pred_fallthru
          _
        // Predicated region
        $region57: #{tpu_custom_call.1} parent=51 // pred_check
          %p543 = pneg %p267
        $region58: #{tpu_custom_call.1} parent=51 // pred_check_branch
          %545 = sbr.rel (%p543) target = $region60
        $region59: #{tpu_custom_call.1} parent=51 // pred_region
          %p546 = scmp.lt.s32.totalorder %s32, 3
          %s547 = scalar_select %p546, %s32, 3
          %s548 = smul.addr %s547, 4
          %s549 = scalar_lea.vmem %s10, %s548
        $region60: #{tpu_custom_call.1} parent=51 // pred_fallthru
          _
        // Predicated region
        $region61: #{tpu_custom_call.1} parent=51 // pred_check
          %p550 = pneg %p293
        $region62: #{tpu_custom_call.1} parent=51 // pred_check_branch
          %552 = sbr.rel (%p550) target = $region64
        $region63: #{tpu_custom_call.1} parent=51 // pred_region
          %p553 = scmp.lt.s32.totalorder %s32, 3
          %s554 = scalar_select %p553, %s32, 3
          %s555 = smul.addr %s554, 16
          %s556 = smul.addr %s555, 4
          %s557 = scalar_lea.vmem %s11, %s556
        $region64: #{tpu_custom_call.1} parent=51 // pred_fallthru
          _
        // Predicated region
        $region65: #{tpu_custom_call.1} parent=51 // pred_check
          %p558 = pneg %p319
        $region66: #{tpu_custom_call.1} parent=51 // pred_check_branch
          %560 = sbr.rel (%p558) target = $region68
        $region67: #{tpu_custom_call.1} parent=51 // pred_region
          %p561 = scmp.lt.s32.totalorder %s32, 3
          %s562 = scalar_select %p561, %s32, 3
          %s563 = scalar_lea.vmem %s12, %s562
        $region68: #{tpu_custom_call.1} parent=51 // pred_fallthru
          _
        // Predicated region
        $region69: #{tpu_custom_call.1} parent=51 // pred_check
          %p564 = pneg %p345
        $region70: #{tpu_custom_call.1} parent=51 // pred_check_branch
          %566 = sbr.rel (%p564) target = $region72
        $region71: #{tpu_custom_call.1} parent=51 // pred_region
          %p567 = scmp.lt.s32.totalorder %s32, 3
          %s568 = scalar_select %p567, %s32, 3
          %s569 = smul.addr %s568, 2
          %s570 = scalar_lea.vmem %s13, %s569
        $region72: #{tpu_custom_call.1} parent=51 // pred_fallthru
          _
        // Predicated region
        $region73: #{tpu_custom_call.1} parent=51 // pred_check
          %p571 = pneg %p371
        $region74: #{tpu_custom_call.1} parent=51 // pred_check_branch
          %573 = sbr.rel (%p571) target = $region76
        $region75: #{tpu_custom_call.1} parent=51 // pred_region
          %p574 = scmp.lt.s32.totalorder %s32, 3
          %s575 = scalar_select %p574, %s32, 3
          %s576 = smul.addr %s575, 2
          %s577 = scalar_lea.vmem %s14, %s576
        $region76: #{tpu_custom_call.1} parent=51 // pred_fallthru
          _
        // Predicated region
        $region77: #{tpu_custom_call.1} parent=51 // pred_check
          %p578 = pneg %p397
        $region78: #{tpu_custom_call.1} parent=51 // pred_check_branch
          %580 = sbr.rel (%p578) target = $region80
        $region79: #{tpu_custom_call.1} parent=51 // pred_region
          %p581 = scmp.lt.s32.totalorder %s32, 3
          %s582 = scalar_select %p581, %s32, 3
          %s583 = smul.addr %s582, 16
          %s584 = smul.addr %s583, 4
          %s585 = scalar_lea.vmem %s15, %s584
        $region80: #{tpu_custom_call.1} parent=51 // pred_fallthru
          _
        // Predicated region
        $region81: #{tpu_custom_call.1} parent=51 // pred_check
          %p586 = pneg %p423
        $region82: #{tpu_custom_call.1} parent=51 // pred_check_branch
          %588 = sbr.rel (%p586) target = $region84
        $region83: #{tpu_custom_call.1} parent=51 // pred_region
          %p589 = scmp.lt.s32.totalorder %s32, 3
          %s590 = scalar_select %p589, %s32, 3
          %s591 = scalar_lea.vmem %s16, %s590
        $region84: #{tpu_custom_call.1} parent=51 // pred_fallthru
          _
      $region52: #{tpu_custom_call.1} parent=5 // pred_fallthru
        _
      %p592 = scmp.le.s32.totalorder 1, %s32
      %p593 = scmp.lt.s32.totalorder %s32, 5
      %p594 = pnand %p592, %p593
      %p595 = pneg %p594
      // Predicated region
      $region85: #{tpu_custom_call.1} parent=5 // pred_check
        _
      $region86: #{tpu_custom_call.1} parent=5 // pred_check_branch
        %597 = sbr.rel (%p594) target = $region88
      $region87: #{tpu_custom_call.1} parent=5 // pred_region
        %s598 = ssub.s32 %s32, 1
        %s599 = sand.u32 %s234, 1
        %s600 = scalar_lea.sflag [#allocation5], %s599
        %s601 = sand.u32 %s234, 1
        %s602 = smul.addr %s601, 256
        %s603 = scalar_lea.vmem [#allocation4], %s602
        // Predicated region
        $region89: #{tpu_custom_call.1} parent=87 // pred_check
          %p604 = pneg %p247
        $region90: #{tpu_custom_call.1} parent=87 // pred_check_branch
          %606 = sbr.rel (%p604) target = $region92
        $region91: #{tpu_custom_call.1} parent=87 // pred_region
          %607 = dma.done %s600, 4096
        $region92: #{tpu_custom_call.1} parent=87 // pred_fallthru
          _
        %p608 = pneg %p53
        %p609 = pneg %p50
        %p610 = pneg %p74
        %p611 = pneg %p71
        %p612 = pneg %p95
        %p613 = pneg %p92
        %p614 = pneg %p116
        %p615 = pneg %p113
        %p616 = pneg %p137
        %p617 = pneg %p134
        %p618 = pneg %p158
        %p619 = pneg %p155
        %p620 = pneg %p179
        %p621 = pneg %p176
        %p622 = pneg %p200
        %p623 = pneg %p197
        %p624 = pneg %p221
        %p625 = pneg %p218
        %s626 = sand.u32 %s234, 1
        %s627 = scalar_lea.sflag [#allocation5], %s626
        %s628 = sand.u32 %s234, 1
        %s629 = smul.addr %s628, 256
        %s630 = scalar_lea.vmem [#allocation4], %s629
        %p631 = pneg %p247
        %p632 = pneg %p244
        %p633 = scmp.lt.s32.totalorder %s37, 3
        %s634 = scalar_select %p633, %s37, 3
        %s635 = smul.addr %s634, 4
        %s636 = scalar_lea.vmem %s10, %s635
        %p637 = pneg %p273
        %p638 = pneg %p270
        %p639 = scmp.lt.s32.totalorder %s37, 3
        %s640 = scalar_select %p639, %s37, 3
        %s641 = smul.addr %s640, 16
        %s642 = smul.addr %s641, 4
        %s643 = scalar_lea.vmem %s11, %s642
        %p644 = pneg %p299
        %p645 = pneg %p296
        %p646 = scmp.lt.s32.totalorder %s37, 3
        %s647 = scalar_select %p646, %s37, 3
        %s648 = scalar_lea.vmem %s12, %s647
        %p649 = pneg %p325
        %p650 = pneg %p322
        %p651 = scmp.lt.s32.totalorder %s37, 3
        %s652 = scalar_select %p651, %s37, 3
        %s653 = smul.addr %s652, 2
        %s654 = scalar_lea.vmem %s13, %s653
        %p655 = pneg %p351
        %p656 = pneg %p348
        %p657 = scmp.lt.s32.totalorder %s37, 3
        %s658 = scalar_select %p657, %s37, 3
        %s659 = smul.addr %s658, 2
        %s660 = scalar_lea.vmem %s14, %s659
        %p661 = pneg %p377
        %p662 = pneg %p374
        %p663 = scmp.lt.s32.totalorder %s37, 3
        %s664 = scalar_select %p663, %s37, 3
        %s665 = smul.addr %s664, 16
        %s666 = smul.addr %s665, 4
        %s667 = scalar_lea.vmem %s15, %s666
        %p668 = pneg %p403
        %p669 = pneg %p400
        %p670 = scmp.lt.s32.totalorder %s37, 3
        %s671 = scalar_select %p670, %s37, 3
        %s672 = scalar_lea.vmem %s16, %s671
        %p673 = pneg %p429
        %p674 = pneg %p426
        %p675 = pneg %p450
        %p676 = pneg %p447
        %p677 = pneg %p476
        %p678 = pneg %p473
        %s679 = sand.u32 %s463, 1
        %s680 = scalar_lea.sflag [#allocation9], %s679
        %s681 = sand.u32 %s463, 1
        %s682 = smul.addr %s681, 128
        %s683 = scalar_lea.vmem [#allocation8], %s682
        %p684 = scmp.lt.s32.totalorder %s37, 3
        %s685 = scalar_select %p684, %s37, 3
        %s686 = smul.addr %s685, 4
        %s687 = scalar_lea.vmem %s10, %s686
        %p688 = scmp.lt.s32.totalorder %s37, 3
        %s689 = scalar_select %p688, %s37, 3
        %s690 = smul.addr %s689, 16
        %s691 = smul.addr %s690, 4
        %s692 = scalar_lea.vmem %s11, %s691
        %p693 = scmp.lt.s32.totalorder %s37, 3
        %s694 = scalar_select %p693, %s37, 3
        %s695 = scalar_lea.vmem %s12, %s694
        %p696 = scmp.lt.s32.totalorder %s37, 3
        %s697 = scalar_select %p696, %s37, 3
        %s698 = smul.addr %s697, 2
        %s699 = scalar_lea.vmem %s13, %s698
        %p700 = scmp.lt.s32.totalorder %s37, 3
        %s701 = scalar_select %p700, %s37, 3
        %s702 = smul.addr %s701, 2
        %s703 = scalar_lea.vmem %s14, %s702
        %p704 = scmp.lt.s32.totalorder %s37, 3
        %s705 = scalar_select %p704, %s37, 3
        %s706 = smul.addr %s705, 16
        %s707 = smul.addr %s706, 4
        %s708 = scalar_lea.vmem %s15, %s707
        %p709 = scmp.lt.s32.totalorder %s37, 3
        %s710 = scalar_select %p709, %s37, 3
        %s711 = scalar_lea.vmem %s16, %s710
        %p713 = scmp.eq.s32.totalorder %s37, 0
        // Predicated region
        $region93: #{tpu_custom_call.1} parent=87 // pred_check
          %p714 = pneg %p713
        $region94: #{tpu_custom_call.1} parent=87 // pred_check_branch
          %716 = sbr.rel (%p714) target = $region96
        $region95: #{tpu_custom_call.1} parent=87 // pred_region
          %v717 = vld [vmem:[%s0] sm:$0xff]
          %v718 = vld [vmem:[%s0 + $0x8] sm:$0xff]
          %v719 = vld [vmem:[%s0 + $0x10] sm:$0xff]
          %v720 = vld [vmem:[%s0 + $0x18] sm:$0xff]
          %v721 = vld [vmem:[%s0 + $0x20] sm:$0xff]
          %v722 = vld [vmem:[%s0 + $0x28] sm:$0xff]
          %v723 = vld [vmem:[%s0 + $0x30] sm:$0xff]
          %v724 = vld [vmem:[%s0 + $0x38] sm:$0xff]
          %v725 = vld [vmem:[%s0 + $0x40] sm:$0xff]
          %v726 = vld [vmem:[%s0 + $0x48] sm:$0xff]
          %v727 = vld [vmem:[%s0 + $0x50] sm:$0xff]
          %v728 = vld [vmem:[%s0 + $0x58] sm:$0xff]
          %v729 = vld [vmem:[%s0 + $0x60] sm:$0xff]
          %v730 = vld [vmem:[%s0 + $0x68] sm:$0xff]
          %v731 = vld [vmem:[%s0 + $0x70] sm:$0xff]
          %v732 = vld [vmem:[%s0 + $0x78] sm:$0xff]
          %v733 = vpack.c.bf16 %v718, %v717
          %v734 = vpack.c.bf16 %v720, %v719
          %v735 = vpack.c.bf16 %v722, %v721
          %v736 = vpack.c.bf16 %v724, %v723
          %v737 = vpack.c.bf16 %v726, %v725
          %v738 = vpack.c.bf16 %v728, %v727
          %v739 = vpack.c.bf16 %v730, %v729
          %v740 = vpack.c.bf16 %v732, %v731
          %v741 = vld [vmem:[%s5] sm:$0x1]
          %v742 = vld [vmem:[%s6] sm:$0x1]
          %v744 = vlaneseq
          %v745 = vshrl.u32 %v744, 7
          %v746 = vsub.s32 0, %v745
          %v747 = vrot.slane %v742, %v746
          %vm749 = vcmask 15360
          %v751 = vsel %vm749, %v733, 0
          %v754 = vsel %vm749, %v734, 0
          %v757 = vsel %vm749, %v735, 0
          %v760 = vsel %vm749, %v736, 0
          %v763 = vsel %vm749, %v737, 0
          %v766 = vsel %vm749, %v738, 0
          %v769 = vsel %vm749, %v739, 0
          %v772 = vsel %vm749, %v740, 0
          %vm774 = vcmask 1040384
          %v776 = vsel %vm774, %v741, 0
          %778 = vmatprep.subr.bf16.mxu0 0
          %779 = vmatpush1.bf16.msra.mxu0 0
          %780 = vmatprep.subr.bf16.mxu0 0
          %781 = vmatpush1.bf16.msra.mxu0 0
          %782 = vmatprep.subr.bf16.mxu0 0
          %783 = vmatpush1.bf16.msra.mxu0 0
          %784 = vmatprep.subr.bf16.mxu0 0
          %785 = vmatpush1.bf16.msra.mxu0 0
          %786 = vmatprep.subr.bf16.mxu0 0
          %787 = vmatpush1.bf16.msra.mxu0 0
          %788 = vmatprep.subr.bf16.mxu0 0
          %789 = vmatpush1.bf16.msra.mxu0 0
          %790 = vmatprep.subr.bf16.mxu0 0
          %791 = vmatpush1.bf16.msra.mxu0 0
          %792 = vmatprep.subr.bf16.mxu0 0
          %793 = vmatpush1.bf16.msra.mxu0 %v776
          %794 = vmatprep.subr.bf16.mxu0 0
          %795 = vmatpush2.bf16.msra.mxu0 0
          %796 = vmatprep.subr.bf16.mxu0 0
          %797 = vmatpush2.bf16.msra.mxu0 0
          %798 = vmatprep.subr.bf16.mxu0 0
          %799 = vmatpush2.bf16.msra.mxu0 0
          %800 = vmatprep.subr.bf16.mxu0 0
          %801 = vmatpush2.bf16.msra.mxu0 0
          %802 = vmatprep.subr.bf16.mxu0 0
          %803 = vmatpush2.bf16.msra.mxu0 0
          %804 = vmatprep.subr.bf16.mxu0 0
          %805 = vmatpush2.bf16.msra.mxu0 0
          %806 = vmatprep.subr.bf16.mxu0 0
          %807 = vmatpush2.bf16.msra.mxu0 0
          %808 = vmatprep.subr.bf16.mxu0 0
          %809 = vmatpush2.bf16.msra.mxu0 0
          %810 = vmatprep.mubr.bf16.mxu0 0
          %811 = vmatmul.mubr.bf16.gmra.mxu0 %v751
          %v812 = vpop.f32.mrf.mxu0
          %v813 = vadd.f32 %v747, %v812
          %v814 = vpop.f32.mrf.mxu0
          %v815 = vpop.f32.mrf.mxu0
          %v816 = vadd.f32 %v747, %v815
          %v817 = vpop.f32.mrf.mxu0
          %818 = vmatprep.mubr.bf16.mxu0 0
          %819 = vmatmul.mubr.bf16.gmra.mxu0 %v754
          %v820 = vpop.f32.mrf.mxu0
          %v821 = vadd.f32 %v747, %v820
          %v822 = vpop.f32.mrf.mxu0
          %v823 = vpop.f32.mrf.mxu0
          %v824 = vadd.f32 %v747, %v823
          %v825 = vpop.f32.mrf.mxu0
          %826 = vmatprep.mubr.bf16.mxu0 0
          %827 = vmatmul.mubr.bf16.gmra.mxu0 %v757
          %v828 = vpop.f32.mrf.mxu0
          %v829 = vadd.f32 %v747, %v828
          %v830 = vpop.f32.mrf.mxu0
          %v831 = vpop.f32.mrf.mxu0
          %v832 = vadd.f32 %v747, %v831
          %v833 = vpop.f32.mrf.mxu0
          %834 = vmatprep.mubr.bf16.mxu0 0
          %835 = vmatmul.mubr.bf16.gmra.mxu0 %v760
          %v836 = vpop.f32.mrf.mxu0
          %v837 = vadd.f32 %v747, %v836
          %v838 = vpop.f32.mrf.mxu0
          %v839 = vpop.f32.mrf.mxu0
          %v840 = vadd.f32 %v747, %v839
          %v841 = vpop.f32.mrf.mxu0
          %842 = vmatprep.mubr.bf16.mxu0 0
          %843 = vmatmul.mubr.bf16.gmra.mxu0 %v763
          %v844 = vpop.f32.mrf.mxu0
          %v845 = vadd.f32 %v747, %v844
          %v846 = vpop.f32.mrf.mxu0
          %v847 = vpop.f32.mrf.mxu0
          %v848 = vadd.f32 %v747, %v847
          %v849 = vpop.f32.mrf.mxu0
          %850 = vmatprep.mubr.bf16.mxu0 0
          %851 = vmatmul.mubr.bf16.gmra.mxu0 %v766
          %v852 = vpop.f32.mrf.mxu0
          %v853 = vadd.f32 %v747, %v852
          %v854 = vpop.f32.mrf.mxu0
          %v855 = vpop.f32.mrf.mxu0
          %v856 = vadd.f32 %v747, %v855
          %v857 = vpop.f32.mrf.mxu0
          %858 = vmatprep.mubr.bf16.mxu0 0
          %859 = vmatmul.mubr.bf16.gmra.mxu0 %v769
          %v860 = vpop.f32.mrf.mxu0
          %v861 = vadd.f32 %v747, %v860
          %v862 = vpop.f32.mrf.mxu0
          %v863 = vpop.f32.mrf.mxu0
          %v864 = vadd.f32 %v747, %v863
          %v865 = vpop.f32.mrf.mxu0
          %866 = vmatprep.mubr.bf16.mxu0 0
          %867 = vmatmul.mubr.bf16.gmra.mxu0 %v772
          %v868 = vpop.f32.mrf.mxu0
          %v869 = vadd.f32 %v747, %v868
          %v870 = vpop.f32.mrf.mxu0
          %v871 = vpop.f32.mrf.mxu0
          %v872 = vadd.f32 %v747, %v871
          %v873 = vpop.f32.mrf.mxu0
          %874 = vdwg.mxu0
          %875 = vst [vmem:[#allocation2] sm:$0xff] %v813
          %876 = vst [vmem:[#allocation2 + $0x8] sm:$0xff] %v816
          %877 = vst [vmem:[#allocation2 + $0x10] sm:$0xff] %v821
          %878 = vst [vmem:[#allocation2 + $0x18] sm:$0xff] %v824
          %879 = vst [vmem:[#allocation2 + $0x20] sm:$0xff] %v829
          %880 = vst [vmem:[#allocation2 + $0x28] sm:$0xff] %v832
          %881 = vst [vmem:[#allocation2 + $0x30] sm:$0xff] %v837
          %882 = vst [vmem:[#allocation2 + $0x38] sm:$0xff] %v840
          %883 = vst [vmem:[#allocation2 + $0x40] sm:$0xff] %v845
          %884 = vst [vmem:[#allocation2 + $0x48] sm:$0xff] %v848
          %885 = vst [vmem:[#allocation2 + $0x50] sm:$0xff] %v853
          %886 = vst [vmem:[#allocation2 + $0x58] sm:$0xff] %v856
          %887 = vst [vmem:[#allocation2 + $0x60] sm:$0xff] %v861
          %888 = vst [vmem:[#allocation2 + $0x68] sm:$0xff] %v864
          %889 = vst [vmem:[#allocation2 + $0x70] sm:$0xff] %v869
          %890 = vst [vmem:[#allocation2 + $0x78] sm:$0xff] %v872
          %v891 = vld [vmem:[%s1] sm:$0xff]
          %v892 = vld [vmem:[%s1 + $0x8] sm:$0xff]
          %v893 = vld [vmem:[%s1 + $0x10] sm:$0xff]
          %v894 = vld [vmem:[%s1 + $0x18] sm:$0xff]
          %v895 = vld [vmem:[%s1 + $0x20] sm:$0xff]
          %v896 = vld [vmem:[%s1 + $0x28] sm:$0xff]
          %v897 = vld [vmem:[%s1 + $0x30] sm:$0xff]
          %v898 = vld [vmem:[%s1 + $0x38] sm:$0xff]
          %v899 = vld [vmem:[%s1 + $0x40] sm:$0xff]
          %v900 = vld [vmem:[%s1 + $0x48] sm:$0xff]
          %v901 = vld [vmem:[%s1 + $0x50] sm:$0xff]
          %v902 = vld [vmem:[%s1 + $0x58] sm:$0xff]
          %v903 = vld [vmem:[%s1 + $0x60] sm:$0xff]
          %v904 = vld [vmem:[%s1 + $0x68] sm:$0xff]
          %v905 = vld [vmem:[%s1 + $0x70] sm:$0xff]
          %v906 = vld [vmem:[%s1 + $0x78] sm:$0xff]
          %v907 = vld [vmem:[%s1 + $0x80] sm:$0xff]
          %v908 = vld [vmem:[%s1 + $0x88] sm:$0xff]
          %v909 = vld [vmem:[%s1 + $0x90] sm:$0xff]
          %v910 = vld [vmem:[%s1 + $0x98] sm:$0xff]
          %v911 = vld [vmem:[%s1 + $0xa0] sm:$0xff]
          %v912 = vld [vmem:[%s1 + $0xa8] sm:$0xff]
          %v913 = vld [vmem:[%s1 + $0xb0] sm:$0xff]
          %v914 = vld [vmem:[%s1 + $0xb8] sm:$0xff]
          %v915 = vld [vmem:[%s1 + $0xc0] sm:$0xff]
          %v916 = vld [vmem:[%s1 + $0xc8] sm:$0xff]
          %v917 = vld [vmem:[%s1 + $0xd0] sm:$0xff]
          %v918 = vld [vmem:[%s1 + $0xd8] sm:$0xff]
          %v919 = vld [vmem:[%s1 + $0xe0] sm:$0xff]
          %v920 = vld [vmem:[%s1 + $0xe8] sm:$0xff]
          %v921 = vld [vmem:[%s1 + $0xf0] sm:$0xff]
          %v922 = vld [vmem:[%s1 + $0xf8] sm:$0xff]
          %v923 = vpack.c.bf16 %v892, %v891
          %v924 = vpack.c.bf16 %v894, %v893
          %v925 = vpack.c.bf16 %v896, %v895
          %v926 = vpack.c.bf16 %v898, %v897
          %v927 = vpack.c.bf16 %v900, %v899
          %v928 = vpack.c.bf16 %v902, %v901
          %v929 = vpack.c.bf16 %v904, %v903
          %v930 = vpack.c.bf16 %v906, %v905
          %v931 = vpack.c.bf16 %v908, %v907
          %v932 = vpack.c.bf16 %v910, %v909
          %v933 = vpack.c.bf16 %v912, %v911
          %v934 = vpack.c.bf16 %v914, %v913
          %v935 = vpack.c.bf16 %v916, %v915
          %v936 = vpack.c.bf16 %v918, %v917
          %v937 = vpack.c.bf16 %v920, %v919
          %v938 = vpack.c.bf16 %v922, %v921
          %v939 = vld [vmem:[%s7] sm:$0x1]
          %v940 = vld [vmem:[%s8] sm:$0x1]
          %v942 = vlaneseq
          %v943 = vshrl.u32 %v942, 7
          %v944 = vsub.s32 0, %v943
          %v945 = vrot.slane %v940, %v944
          %vm947 = vcmask 7168
          %v949 = vsel %vm947, %v923, 0
          %v952 = vsel %vm947, %v924, 0
          %v955 = vsel %vm947, %v925, 0
          %v958 = vsel %vm947, %v926, 0
          %v961 = vsel %vm947, %v927, 0
          %v964 = vsel %vm947, %v928, 0
          %v967 = vsel %vm947, %v929, 0
          %v970 = vsel %vm947, %v930, 0
          %v973 = vsel %vm947, %v931, 0
          %v976 = vsel %vm947, %v932, 0
          %v979 = vsel %vm947, %v933, 0
          %v982 = vsel %vm947, %v934, 0
          %v985 = vsel %vm947, %v935, 0
          %v988 = vsel %vm947, %v936, 0
          %v991 = vsel %vm947, %v937, 0
          %v994 = vsel %vm947, %v938, 0
          %v996 = vsel 0, 4294967295, 65535
          %v997 = vsel %vm774, %v996, 0
          %v999 = vand.u32 %v939, %v997
          %1001 = vmatprep.subr.bf16.mxu0 0
          %1002 = vmatpush1.bf16.msra.mxu0 0
          %1003 = vmatprep.subr.bf16.mxu0 0
          %1004 = vmatpush1.bf16.msra.mxu0 0
          %1005 = vmatprep.subr.bf16.mxu0 0
          %1006 = vmatpush1.bf16.msra.mxu0 0
          %1007 = vmatprep.subr.bf16.mxu0 0
          %1008 = vmatpush1.bf16.msra.mxu0 0
          %1009 = vmatprep.subr.bf16.mxu0 0
          %1010 = vmatpush1.bf16.msra.mxu0 0
          %1011 = vmatprep.subr.bf16.mxu0 0
          %1012 = vmatpush1.bf16.msra.mxu0 0
          %1013 = vmatprep.subr.bf16.mxu0 0
          %1014 = vmatpush1.bf16.msra.mxu0 0
          %1015 = vmatprep.subr.bf16.mxu0 0
          %1016 = vmatpush1.bf16.msra.mxu0 %v999
          %1017 = vmatprep.subr.bf16.mxu0 0
          %1018 = vmatpush2.bf16.msra.mxu0 0
          %1019 = vmatprep.subr.bf16.mxu0 0
          %1020 = vmatpush2.bf16.msra.mxu0 0
          %1021 = vmatprep.subr.bf16.mxu0 0
          %1022 = vmatpush2.bf16.msra.mxu0 0
          %1023 = vmatprep.subr.bf16.mxu0 0
          %1024 = vmatpush2.bf16.msra.mxu0 0
          %1025 = vmatprep.subr.bf16.mxu0 0
          %1026 = vmatpush2.bf16.msra.mxu0 0
          %1027 = vmatprep.subr.bf16.mxu0 0
          %1028 = vmatpush2.bf16.msra.mxu0 0
          %1029 = vmatprep.subr.bf16.mxu0 0
          %1030 = vmatpush2.bf16.msra.mxu0 0
          %1031 = vmatprep.subr.bf16.mxu0 0
          %1032 = vmatpush2.bf16.msra.mxu0 0
          %1033 = vmatprep.mubr.bf16.mxu0 0
          %1034 = vmatmul.mubr.bf16.gmra.mxu0 %v949
          %v1035 = vpop.f32.mrf.mxu0
          %v1036 = vadd.f32 %v945, %v1035
          %v1037 = vpop.f32.mrf.mxu0
          %v1038 = vpop.f32.mrf.mxu0
          %v1039 = vadd.f32 %v945, %v1038
          %v1040 = vpop.f32.mrf.mxu0
          %1041 = vmatprep.mubr.bf16.mxu0 0
          %1042 = vmatmul.mubr.bf16.gmra.mxu0 %v952
          %v1043 = vpop.f32.mrf.mxu0
          %v1044 = vadd.f32 %v945, %v1043
          %v1045 = vpop.f32.mrf.mxu0
          %v1046 = vpop.f32.mrf.mxu0
          %v1047 = vadd.f32 %v945, %v1046
          %v1048 = vpop.f32.mrf.mxu0
          %1049 = vmatprep.mubr.bf16.mxu0 0
          %1050 = vmatmul.mubr.bf16.gmra.mxu0 %v955
          %v1051 = vpop.f32.mrf.mxu0
          %v1052 = vadd.f32 %v945, %v1051
          %v1053 = vpop.f32.mrf.mxu0
          %v1054 = vpop.f32.mrf.mxu0
          %v1055 = vadd.f32 %v945, %v1054
          %v1056 = vpop.f32.mrf.mxu0
          %1057 = vmatprep.mubr.bf16.mxu0 0
          %1058 = vmatmul.mubr.bf16.gmra.mxu0 %v958
          %v1059 = vpop.f32.mrf.mxu0
          %v1060 = vadd.f32 %v945, %v1059
          %v1061 = vpop.f32.mrf.mxu0
          %v1062 = vpop.f32.mrf.mxu0
          %v1063 = vadd.f32 %v945, %v1062
          %v1064 = vpop.f32.mrf.mxu0
          %1065 = vmatprep.mubr.bf16.mxu0 0
          %1066 = vmatmul.mubr.bf16.gmra.mxu0 %v961
          %v1067 = vpop.f32.mrf.mxu0
          %v1068 = vadd.f32 %v945, %v1067
          %v1069 = vpop.f32.mrf.mxu0
          %v1070 = vpop.f32.mrf.mxu0
          %v1071 = vadd.f32 %v945, %v1070
          %v1072 = vpop.f32.mrf.mxu0
          %1073 = vmatprep.mubr.bf16.mxu0 0
          %1074 = vmatmul.mubr.bf16.gmra.mxu0 %v964
          %v1075 = vpop.f32.mrf.mxu0
          %v1076 = vadd.f32 %v945, %v1075
          %v1077 = vpop.f32.mrf.mxu0
          %v1078 = vpop.f32.mrf.mxu0
          %v1079 = vadd.f32 %v945, %v1078
          %v1080 = vpop.f32.mrf.mxu0
          %1081 = vmatprep.mubr.bf16.mxu0 0
          %1082 = vmatmul.mubr.bf16.gmra.mxu0 %v967
          %v1083 = vpop.f32.mrf.mxu0
          %v1084 = vadd.f32 %v945, %v1083
          %v1085 = vpop.f32.mrf.mxu0
          %v1086 = vpop.f32.mrf.mxu0
          %v1087 = vadd.f32 %v945, %v1086
          %v1088 = vpop.f32.mrf.mxu0
          %1089 = vmatprep.mubr.bf16.mxu0 0
          %1090 = vmatmul.mubr.bf16.gmra.mxu0 %v970
          %v1091 = vpop.f32.mrf.mxu0
          %v1092 = vadd.f32 %v945, %v1091
          %v1093 = vpop.f32.mrf.mxu0
          %v1094 = vpop.f32.mrf.mxu0
          %v1095 = vadd.f32 %v945, %v1094
          %v1096 = vpop.f32.mrf.mxu0
          %1097 = vmatprep.mubr.bf16.mxu0 0
          %1098 = vmatmul.mubr.bf16.gmra.mxu0 %v973
          %v1099 = vpop.f32.mrf.mxu0
          %v1100 = vadd.f32 %v945, %v1099
          %v1101 = vpop.f32.mrf.mxu0
          %v1102 = vpop.f32.mrf.mxu0
          %v1103 = vadd.f32 %v945, %v1102
          %v1104 = vpop.f32.mrf.mxu0
          %1105 = vmatprep.mubr.bf16.mxu0 0
          %1106 = vmatmul.mubr.bf16.gmra.mxu0 %v976
          %v1107 = vpop.f32.mrf.mxu0
          %v1108 = vadd.f32 %v945, %v1107
          %v1109 = vpop.f32.mrf.mxu0
          %v1110 = vpop.f32.mrf.mxu0
          %v1111 = vadd.f32 %v945, %v1110
          %v1112 = vpop.f32.mrf.mxu0
          %1113 = vmatprep.mubr.bf16.mxu0 0
          %1114 = vmatmul.mubr.bf16.gmra.mxu0 %v979
          %v1115 = vpop.f32.mrf.mxu0
          %v1116 = vadd.f32 %v945, %v1115
          %v1117 = vpop.f32.mrf.mxu0
          %v1118 = vpop.f32.mrf.mxu0
          %v1119 = vadd.f32 %v945, %v1118
          %v1120 = vpop.f32.mrf.mxu0
          %1121 = vmatprep.mubr.bf16.mxu0 0
          %1122 = vmatmul.mubr.bf16.gmra.mxu0 %v982
          %v1123 = vpop.f32.mrf.mxu0
          %v1124 = vadd.f32 %v945, %v1123
          %v1125 = vpop.f32.mrf.mxu0
          %v1126 = vpop.f32.mrf.mxu0
          %v1127 = vadd.f32 %v945, %v1126
          %v1128 = vpop.f32.mrf.mxu0
          %1129 = vmatprep.mubr.bf16.mxu0 0
          %1130 = vmatmul.mubr.bf16.gmra.mxu0 %v985
          %v1131 = vpop.f32.mrf.mxu0
          %v1132 = vadd.f32 %v945, %v1131
          %v1133 = vpop.f32.mrf.mxu0
          %v1134 = vpop.f32.mrf.mxu0
          %v1135 = vadd.f32 %v945, %v1134
          %v1136 = vpop.f32.mrf.mxu0
          %1137 = vmatprep.mubr.bf16.mxu0 0
          %1138 = vmatmul.mubr.bf16.gmra.mxu0 %v988
          %v1139 = vpop.f32.mrf.mxu0
          %v1140 = vadd.f32 %v945, %v1139
          %v1141 = vpop.f32.mrf.mxu0
          %v1142 = vpop.f32.mrf.mxu0
          %v1143 = vadd.f32 %v945, %v1142
          %v1144 = vpop.f32.mrf.mxu0
          %1145 = vmatprep.mubr.bf16.mxu0 0
          %1146 = vmatmul.mubr.bf16.gmra.mxu0 %v991
          %v1147 = vpop.f32.mrf.mxu0
          %v1148 = vadd.f32 %v945, %v1147
          %v1149 = vpop.f32.mrf.mxu0
          %v1150 = vpop.f32.mrf.mxu0
          %v1151 = vadd.f32 %v945, %v1150
          %v1152 = vpop.f32.mrf.mxu0
          %1153 = vmatprep.mubr.bf16.mxu0 0
          %1154 = vmatmul.mubr.bf16.gmra.mxu0 %v994
          %v1155 = vpop.f32.mrf.mxu0
          %v1156 = vadd.f32 %v945, %v1155
          %v1157 = vpop.f32.mrf.mxu0
          %v1158 = vpop.f32.mrf.mxu0
          %v1159 = vadd.f32 %v945, %v1158
          %v1160 = vpop.f32.mrf.mxu0
          %1161 = vdwg.mxu0
          %1162 = vst [vmem:[#allocation3] sm:$0xff] %v1036
          %1163 = vst [vmem:[#allocation3 + $0x8] sm:$0xff] %v1039
          %1164 = vst [vmem:[#allocation3 + $0x10] sm:$0xff] %v1044
          %1165 = vst [vmem:[#allocation3 + $0x18] sm:$0xff] %v1047
          %1166 = vst [vmem:[#allocation3 + $0x20] sm:$0xff] %v1052
          %1167 = vst [vmem:[#allocation3 + $0x28] sm:$0xff] %v1055
          %1168 = vst [vmem:[#allocation3 + $0x30] sm:$0xff] %v1060
          %1169 = vst [vmem:[#allocation3 + $0x38] sm:$0xff] %v1063
          %1170 = vst [vmem:[#allocation3 + $0x40] sm:$0xff] %v1068
          %1171 = vst [vmem:[#allocation3 + $0x48] sm:$0xff] %v1071
          %1172 = vst [vmem:[#allocation3 + $0x50] sm:$0xff] %v1076
          %1173 = vst [vmem:[#allocation3 + $0x58] sm:$0xff] %v1079
          %1174 = vst [vmem:[#allocation3 + $0x60] sm:$0xff] %v1084
          %1175 = vst [vmem:[#allocation3 + $0x68] sm:$0xff] %v1087
          %1176 = vst [vmem:[#allocation3 + $0x70] sm:$0xff] %v1092
          %1177 = vst [vmem:[#allocation3 + $0x78] sm:$0xff] %v1095
          %1178 = vst [vmem:[#allocation3 + $0x80] sm:$0xff] %v1100
          %1179 = vst [vmem:[#allocation3 + $0x88] sm:$0xff] %v1103
          %1180 = vst [vmem:[#allocation3 + $0x90] sm:$0xff] %v1108
          %1181 = vst [vmem:[#allocation3 + $0x98] sm:$0xff] %v1111
          %1182 = vst [vmem:[#allocation3 + $0xa0] sm:$0xff] %v1116
          %1183 = vst [vmem:[#allocation3 + $0xa8] sm:$0xff] %v1119
          %1184 = vst [vmem:[#allocation3 + $0xb0] sm:$0xff] %v1124
          %1185 = vst [vmem:[#allocation3 + $0xb8] sm:$0xff] %v1127
          %1186 = vst [vmem:[#allocation3 + $0xc0] sm:$0xff] %v1132
          %1187 = vst [vmem:[#allocation3 + $0xc8] sm:$0xff] %v1135
          %1188 = vst [vmem:[#allocation3 + $0xd0] sm:$0xff] %v1140
          %1189 = vst [vmem:[#allocation3 + $0xd8] sm:$0xff] %v1143
          %1190 = vst [vmem:[#allocation3 + $0xe0] sm:$0xff] %v1148
          %1191 = vst [vmem:[#allocation3 + $0xe8] sm:$0xff] %v1151
          %1192 = vst [vmem:[#allocation3 + $0xf0] sm:$0xff] %v1156
          %1193 = vst [vmem:[#allocation3 + $0xf8] sm:$0xff] %v1159
        $region96: #{tpu_custom_call.1} parent=87 // pred_fallthru
          _
        %v1194 = vld [vmem:[#allocation2] sm:$0xff]
        %v1195 = vld [vmem:[#allocation2 + $0x8] sm:$0xff]
        %v1196 = vld [vmem:[#allocation2 + $0x10] sm:$0xff]
        %v1197 = vld [vmem:[#allocation2 + $0x18] sm:$0xff]
        %v1198 = vld [vmem:[#allocation2 + $0x20] sm:$0xff]
        %v1199 = vld [vmem:[#allocation2 + $0x28] sm:$0xff]
        %v1200 = vld [vmem:[#allocation2 + $0x30] sm:$0xff]
        %v1201 = vld [vmem:[#allocation2 + $0x38] sm:$0xff]
        %v1202 = vld [vmem:[#allocation2 + $0x40] sm:$0xff]
        %v1203 = vld [vmem:[#allocation2 + $0x48] sm:$0xff]
        %v1204 = vld [vmem:[#allocation2 + $0x50] sm:$0xff]
        %v1205 = vld [vmem:[#allocation2 + $0x58] sm:$0xff]
        %v1206 = vld [vmem:[#allocation2 + $0x60] sm:$0xff]
        %v1207 = vld [vmem:[#allocation2 + $0x68] sm:$0xff]
        %v1208 = vld [vmem:[#allocation2 + $0x70] sm:$0xff]
        %v1209 = vld [vmem:[#allocation2 + $0x78] sm:$0xff]
        %v1210 = vpack.c.bf16 %v1195, %v1194
        %v1211 = vpack.c.bf16 %v1197, %v1196
        %v1212 = vpack.c.bf16 %v1199, %v1198
        %v1213 = vpack.c.bf16 %v1201, %v1200
        %v1214 = vpack.c.bf16 %v1203, %v1202
        %v1215 = vpack.c.bf16 %v1205, %v1204
        %v1216 = vpack.c.bf16 %v1207, %v1206
        %v1217 = vpack.c.bf16 %v1209, %v1208
        %v1218 = vld [vmem:[%s603] sm:$0xff]
        %v1219 = vld [vmem:[%s603 + $0x8] sm:$0xff]
        %v1220 = vld [vmem:[%s603 + $0x10] sm:$0xff]
        %v1221 = vld [vmem:[%s603 + $0x18] sm:$0xff]
        %v1222 = vld [vmem:[%s603 + $0x20] sm:$0xff]
        %v1223 = vld [vmem:[%s603 + $0x28] sm:$0xff]
        %v1224 = vld [vmem:[%s603 + $0x30] sm:$0xff]
        %v1225 = vld [vmem:[%s603 + $0x38] sm:$0xff]
        %v1226 = vld [vmem:[%s603 + $0x40] sm:$0xff]
        %v1227 = vld [vmem:[%s603 + $0x48] sm:$0xff]
        %v1228 = vld [vmem:[%s603 + $0x50] sm:$0xff]
        %v1229 = vld [vmem:[%s603 + $0x58] sm:$0xff]
        %v1230 = vld [vmem:[%s603 + $0x60] sm:$0xff]
        %v1231 = vld [vmem:[%s603 + $0x68] sm:$0xff]
        %v1232 = vld [vmem:[%s603 + $0x70] sm:$0xff]
        %v1233 = vld [vmem:[%s603 + $0x78] sm:$0xff]
        %v1234 = vld [vmem:[%s603 + $0x80] sm:$0xff]
        %v1235 = vld [vmem:[%s603 + $0x88] sm:$0xff]
        %v1236 = vld [vmem:[%s603 + $0x90] sm:$0xff]
        %v1237 = vld [vmem:[%s603 + $0x98] sm:$0xff]
        %v1238 = vld [vmem:[%s603 + $0xa0] sm:$0xff]
        %v1239 = vld [vmem:[%s603 + $0xa8] sm:$0xff]
        %v1240 = vld [vmem:[%s603 + $0xb0] sm:$0xff]
        %v1241 = vld [vmem:[%s603 + $0xb8] sm:$0xff]
        %v1242 = vld [vmem:[%s603 + $0xc0] sm:$0xff]
        %v1243 = vld [vmem:[%s603 + $0xc8] sm:$0xff]
        %v1244 = vld [vmem:[%s603 + $0xd0] sm:$0xff]
        %v1245 = vld [vmem:[%s603 + $0xd8] sm:$0xff]
        %v1246 = vld [vmem:[%s603 + $0xe0] sm:$0xff]
        %v1247 = vld [vmem:[%s603 + $0xe8] sm:$0xff]
        %v1248 = vld [vmem:[%s603 + $0xf0] sm:$0xff]
        %v1249 = vld [vmem:[%s603 + $0xf8] sm:$0xff]
        %v1250 = vld [vmem:[%s687] sm:$0xf]
        %v1252 = vlaneseq
        %v1253 = vshrl.u32 %v1252, 7
        %v1254 = vsub.s32 0, %v1253
        %v1255 = vrot.slane %v1250, %v1254
        %v1256 = vlaneseq
        %v1257 = vshrl.u32 %v1256, 7
        %v1258 = vsub.s32 1, %v1257
        %v1259 = vrot.slane %v1250, %v1258
        %v1260 = vlaneseq
        %v1261 = vshrl.u32 %v1260, 7
        %v1262 = vsub.s32 2, %v1261
        %v1263 = vrot.slane %v1250, %v1262
        %v1264 = vlaneseq
        %v1265 = vshrl.u32 %v1264, 7
        %v1266 = vsub.s32 3, %v1265
        %v1267 = vrot.slane %v1250, %v1266
        %v1304 = vunpack.c.l.b16 %v1218
        %v1305 = vunpack.c.h.b16 %v1218
        %v1306 = vunpack.c.l.b16 %v1219
        %v1307 = vunpack.c.h.b16 %v1219
        %v1308 = vunpack.c.l.b16 %v1220
        %v1309 = vunpack.c.h.b16 %v1220
        %v1310 = vunpack.c.l.b16 %v1221
        %v1311 = vunpack.c.h.b16 %v1221
        %v1312 = vunpack.c.l.b16 %v1222
        %v1313 = vunpack.c.h.b16 %v1222
        %v1314 = vunpack.c.l.b16 %v1223
        %v1315 = vunpack.c.h.b16 %v1223
        %v1316 = vunpack.c.l.b16 %v1224
        %v1317 = vunpack.c.h.b16 %v1224
        %v1318 = vunpack.c.l.b16 %v1225
        %v1319 = vunpack.c.h.b16 %v1225
        %v1320 = vunpack.c.l.b16 %v1226
        %v1321 = vunpack.c.h.b16 %v1226
        %v1322 = vunpack.c.l.b16 %v1227
        %v1323 = vunpack.c.h.b16 %v1227
        %v1324 = vunpack.c.l.b16 %v1228
        %v1325 = vunpack.c.h.b16 %v1228
        %v1326 = vunpack.c.l.b16 %v1229
        %v1327 = vunpack.c.h.b16 %v1229
        %v1328 = vunpack.c.l.b16 %v1230
        %v1329 = vunpack.c.h.b16 %v1230
        %v1330 = vunpack.c.l.b16 %v1231
        %v1331 = vunpack.c.h.b16 %v1231
        %v1332 = vunpack.c.l.b16 %v1232
        %v1333 = vunpack.c.h.b16 %v1232
        %v1334 = vunpack.c.l.b16 %v1233
        %v1335 = vunpack.c.h.b16 %v1233
        %v1336 = vunpack.c.l.b16 %v1234
        %v1337 = vunpack.c.h.b16 %v1234
        %v1338 = vunpack.c.l.b16 %v1235
        %v1339 = vunpack.c.h.b16 %v1235
        %v1340 = vunpack.c.l.b16 %v1236
        %v1341 = vunpack.c.h.b16 %v1236
        %v1342 = vunpack.c.l.b16 %v1237
        %v1343 = vunpack.c.h.b16 %v1237
        %v1344 = vunpack.c.l.b16 %v1238
        %v1345 = vunpack.c.h.b16 %v1238
        %v1346 = vunpack.c.l.b16 %v1239
        %v1347 = vunpack.c.h.b16 %v1239
        %v1348 = vunpack.c.l.b16 %v1240
        %v1349 = vunpack.c.h.b16 %v1240
        %v1350 = vunpack.c.l.b16 %v1241
        %v1351 = vunpack.c.h.b16 %v1241
        %v1352 = vunpack.c.l.b16 %v1242
        %v1353 = vunpack.c.h.b16 %v1242
        %v1354 = vunpack.c.l.b16 %v1243
        %v1355 = vunpack.c.h.b16 %v1243
        %v1356 = vunpack.c.l.b16 %v1244
        %v1357 = vunpack.c.h.b16 %v1244
        %v1358 = vunpack.c.l.b16 %v1245
        %v1359 = vunpack.c.h.b16 %v1245
        %v1360 = vunpack.c.l.b16 %v1246
        %v1361 = vunpack.c.h.b16 %v1246
        %v1362 = vunpack.c.l.b16 %v1247
        %v1363 = vunpack.c.h.b16 %v1247
        %v1364 = vunpack.c.l.b16 %v1248
        %v1365 = vunpack.c.h.b16 %v1248
        %v1366 = vunpack.c.l.b16 %v1249
        %v1367 = vunpack.c.h.b16 %v1249
        %v1368 = vpack.c.b16 %v1308, %v1304
        %v1369 = vpack.c.b16 %v1309, %v1305
        %v1370 = vpack.c.b16 %v1310, %v1306
        %v1371 = vpack.c.b16 %v1311, %v1307
        %v1372 = vpack.c.b16 %v1316, %v1312
        %v1373 = vpack.c.b16 %v1317, %v1313
        %v1374 = vpack.c.b16 %v1318, %v1314
        %v1375 = vpack.c.b16 %v1319, %v1315
        %v1376 = vpack.c.b16 %v1324, %v1320
        %v1377 = vpack.c.b16 %v1325, %v1321
        %v1378 = vpack.c.b16 %v1326, %v1322
        %v1379 = vpack.c.b16 %v1327, %v1323
        %v1380 = vpack.c.b16 %v1332, %v1328
        %v1381 = vpack.c.b16 %v1333, %v1329
        %v1382 = vpack.c.b16 %v1334, %v1330
        %v1383 = vpack.c.b16 %v1335, %v1331
        %v1384 = vpack.c.b16 %v1340, %v1336
        %v1385 = vpack.c.b16 %v1341, %v1337
        %v1386 = vpack.c.b16 %v1342, %v1338
        %v1387 = vpack.c.b16 %v1343, %v1339
        %v1388 = vpack.c.b16 %v1348, %v1344
        %v1389 = vpack.c.b16 %v1349, %v1345
        %v1390 = vpack.c.b16 %v1350, %v1346
        %v1391 = vpack.c.b16 %v1351, %v1347
        %v1392 = vpack.c.b16 %v1356, %v1352
        %v1393 = vpack.c.b16 %v1357, %v1353
        %v1394 = vpack.c.b16 %v1358, %v1354
        %v1395 = vpack.c.b16 %v1359, %v1355
        %v1396 = vpack.c.b16 %v1364, %v1360
        %v1397 = vpack.c.b16 %v1365, %v1361
        %v1398 = vpack.c.b16 %v1366, %v1362
        %v1399 = vpack.c.b16 %v1367, %v1363
        %1432 = vmatprep.subr.bf16.mxu0 %v1397
        %1433 = vmatpush1.bf16.msra.mxu0 %v1396
        %1434 = vmatprep.subr.bf16.mxu0 %v1393
        %1435 = vmatpush1.bf16.msra.mxu0 %v1392
        %1436 = vmatprep.subr.bf16.mxu0 %v1389
        %1437 = vmatpush1.bf16.msra.mxu0 %v1388
        %1438 = vmatprep.subr.bf16.mxu0 %v1385
        %1439 = vmatpush1.bf16.msra.mxu0 %v1384
        %1440 = vmatprep.subr.bf16.mxu0 %v1381
        %1441 = vmatpush1.bf16.msra.mxu0 %v1380
        %1442 = vmatprep.subr.bf16.mxu0 %v1377
        %1443 = vmatpush1.bf16.msra.mxu0 %v1376
        %1444 = vmatprep.subr.bf16.mxu0 %v1373
        %1445 = vmatpush1.bf16.msra.mxu0 %v1372
        %1446 = vmatprep.subr.bf16.mxu0 %v1369
        %1447 = vmatpush1.bf16.msra.mxu0 %v1368
        %1448 = vmatprep.subr.bf16.mxu0 0
        %1449 = vmatpush2.bf16.msra.mxu0 0
        %1450 = vmatprep.subr.bf16.mxu0 0
        %1451 = vmatpush2.bf16.msra.mxu0 0
        %1452 = vmatprep.subr.bf16.mxu0 0
        %1453 = vmatpush2.bf16.msra.mxu0 0
        %1454 = vmatprep.subr.bf16.mxu0 0
        %1455 = vmatpush2.bf16.msra.mxu0 0
        %1456 = vmatprep.subr.bf16.mxu0 0
        %1457 = vmatpush2.bf16.msra.mxu0 0
        %1458 = vmatprep.subr.bf16.mxu0 0
        %1459 = vmatpush2.bf16.msra.mxu0 0
        %1460 = vmatprep.subr.bf16.mxu0 0
        %1461 = vmatpush2.bf16.msra.mxu0 0
        %1462 = vmatprep.subr.bf16.mxu0 0
        %1463 = vmatpush2.bf16.msra.mxu0 0
        %1464 = vmatprep.mubr.bf16.mxu0 0
        %1465 = vmatmul.mubr.bf16.gmra.mxu0 %v1210
        %v1466 = vpop.f32.mrf.mxu0
        %v1467 = vadd.f32 %v1255, %v1466
        %v1468 = vpop.f32.mrf.mxu0
        %v1469 = vadd.f32 %v1259, %v1468
        %v1470 = vpop.f32.mrf.mxu0
        %v1471 = vadd.f32 %v1255, %v1470
        %v1472 = vpop.f32.mrf.mxu0
        %v1473 = vadd.f32 %v1259, %v1472
        %1474 = vmatprep.mubr.bf16.mxu0 0
        %1475 = vmatmul.mubr.bf16.gmra.mxu0 %v1211
        %v1476 = vpop.f32.mrf.mxu0
        %v1477 = vadd.f32 %v1255, %v1476
        %v1478 = vpop.f32.mrf.mxu0
        %v1479 = vadd.f32 %v1259, %v1478
        %v1480 = vpop.f32.mrf.mxu0
        %v1481 = vadd.f32 %v1255, %v1480
        %v1482 = vpop.f32.mrf.mxu0
        %v1483 = vadd.f32 %v1259, %v1482
        %1484 = vmatprep.mubr.bf16.mxu0 0
        %1485 = vmatmul.mubr.bf16.gmra.mxu0 %v1212
        %v1486 = vpop.f32.mrf.mxu0
        %v1487 = vadd.f32 %v1255, %v1486
        %v1488 = vpop.f32.mrf.mxu0
        %v1489 = vadd.f32 %v1259, %v1488
        %v1490 = vpop.f32.mrf.mxu0
        %v1491 = vadd.f32 %v1255, %v1490
        %v1492 = vpop.f32.mrf.mxu0
        %v1493 = vadd.f32 %v1259, %v1492
        %1494 = vmatprep.mubr.bf16.mxu0 0
        %1495 = vmatmul.mubr.bf16.gmra.mxu0 %v1213
        %v1496 = vpop.f32.mrf.mxu0
        %v1497 = vadd.f32 %v1255, %v1496
        %v1498 = vpop.f32.mrf.mxu0
        %v1499 = vadd.f32 %v1259, %v1498
        %v1500 = vpop.f32.mrf.mxu0
        %v1501 = vadd.f32 %v1255, %v1500
        %v1502 = vpop.f32.mrf.mxu0
        %v1503 = vadd.f32 %v1259, %v1502
        %1504 = vmatprep.mubr.bf16.mxu0 0
        %1505 = vmatmul.mubr.bf16.gmra.mxu0 %v1214
        %v1506 = vpop.f32.mrf.mxu0
        %v1507 = vadd.f32 %v1255, %v1506
        %v1508 = vpop.f32.mrf.mxu0
        %v1509 = vadd.f32 %v1259, %v1508
        %v1510 = vpop.f32.mrf.mxu0
        %v1511 = vadd.f32 %v1255, %v1510
        %v1512 = vpop.f32.mrf.mxu0
        %v1513 = vadd.f32 %v1259, %v1512
        %1514 = vmatprep.mubr.bf16.mxu0 0
        %1515 = vmatmul.mubr.bf16.gmra.mxu0 %v1215
        %v1516 = vpop.f32.mrf.mxu0
        %v1517 = vadd.f32 %v1255, %v1516
        %v1518 = vpop.f32.mrf.mxu0
        %v1519 = vadd.f32 %v1259, %v1518
        %v1520 = vpop.f32.mrf.mxu0
        %v1521 = vadd.f32 %v1255, %v1520
        %v1522 = vpop.f32.mrf.mxu0
        %v1523 = vadd.f32 %v1259, %v1522
        %1524 = vmatprep.mubr.bf16.mxu0 0
        %1525 = vmatmul.mubr.bf16.gmra.mxu0 %v1216
        %v1526 = vpop.f32.mrf.mxu0
        %v1527 = vadd.f32 %v1255, %v1526
        %v1528 = vpop.f32.mrf.mxu0
        %v1529 = vadd.f32 %v1259, %v1528
        %v1530 = vpop.f32.mrf.mxu0
        %v1531 = vadd.f32 %v1255, %v1530
        %v1532 = vpop.f32.mrf.mxu0
        %v1533 = vadd.f32 %v1259, %v1532
        %1534 = vmatprep.mubr.bf16.mxu0 0
        %1535 = vmatmul.mubr.bf16.gmra.mxu0 %v1217
        %v1536 = vpop.f32.mrf.mxu0
        %v1537 = vadd.f32 %v1255, %v1536
        %v1538 = vpop.f32.mrf.mxu0
        %v1539 = vadd.f32 %v1259, %v1538
        %v1540 = vpop.f32.mrf.mxu0
        %v1541 = vadd.f32 %v1255, %v1540
        %v1542 = vpop.f32.mrf.mxu0
        %v1543 = vadd.f32 %v1259, %v1542
        %1544 = vdwg.mxu0
        %1545 = vmatprep.subr.bf16.mxu0 %v1399
        %1546 = vmatpush1.bf16.msra.mxu0 %v1398
        %1547 = vmatprep.subr.bf16.mxu0 %v1395
        %1548 = vmatpush1.bf16.msra.mxu0 %v1394
        %1549 = vmatprep.subr.bf16.mxu0 %v1391
        %1550 = vmatpush1.bf16.msra.mxu0 %v1390
        %1551 = vmatprep.subr.bf16.mxu0 %v1387
        %1552 = vmatpush1.bf16.msra.mxu0 %v1386
        %1553 = vmatprep.subr.bf16.mxu0 %v1383
        %1554 = vmatpush1.bf16.msra.mxu0 %v1382
        %1555 = vmatprep.subr.bf16.mxu0 %v1379
        %1556 = vmatpush1.bf16.msra.mxu0 %v1378
        %1557 = vmatprep.subr.bf16.mxu0 %v1375
        %1558 = vmatpush1.bf16.msra.mxu0 %v1374
        %1559 = vmatprep.subr.bf16.mxu0 %v1371
        %1560 = vmatpush1.bf16.msra.mxu0 %v1370
        %1561 = vmatprep.subr.bf16.mxu0 0
        %1562 = vmatpush2.bf16.msra.mxu0 0
        %1563 = vmatprep.subr.bf16.mxu0 0
        %1564 = vmatpush2.bf16.msra.mxu0 0
        %1565 = vmatprep.subr.bf16.mxu0 0
        %1566 = vmatpush2.bf16.msra.mxu0 0
        %1567 = vmatprep.subr.bf16.mxu0 0
        %1568 = vmatpush2.bf16.msra.mxu0 0
        %1569 = vmatprep.subr.bf16.mxu0 0
        %1570 = vmatpush2.bf16.msra.mxu0 0
        %1571 = vmatprep.subr.bf16.mxu0 0
        %1572 = vmatpush2.bf16.msra.mxu0 0
        %1573 = vmatprep.subr.bf16.mxu0 0
        %1574 = vmatpush2.bf16.msra.mxu0 0
        %1575 = vmatprep.subr.bf16.mxu0 0
        %1576 = vmatpush2.bf16.msra.mxu0 0
        %1577 = vmatprep.mubr.bf16.mxu0 0
        %1578 = vmatmul.mubr.bf16.gmra.mxu0 %v1210
        %v1579 = vpop.f32.mrf.mxu0
        %v1580 = vadd.f32 %v1263, %v1579
        %v1581 = vpop.f32.mrf.mxu0
        %v1582 = vadd.f32 %v1267, %v1581
        %v1583 = vpop.f32.mrf.mxu0
        %v1584 = vadd.f32 %v1263, %v1583
        %v1585 = vpop.f32.mrf.mxu0
        %v1586 = vadd.f32 %v1267, %v1585
        %1587 = vmatprep.mubr.bf16.mxu0 0
        %1588 = vmatmul.mubr.bf16.gmra.mxu0 %v1211
        %v1589 = vpop.f32.mrf.mxu0
        %v1590 = vadd.f32 %v1263, %v1589
        %v1591 = vpop.f32.mrf.mxu0
        %v1592 = vadd.f32 %v1267, %v1591
        %v1593 = vpop.f32.mrf.mxu0
        %v1594 = vadd.f32 %v1263, %v1593
        %v1595 = vpop.f32.mrf.mxu0
        %v1596 = vadd.f32 %v1267, %v1595
        %1597 = vmatprep.mubr.bf16.mxu0 0
        %1598 = vmatmul.mubr.bf16.gmra.mxu0 %v1212
        %v1599 = vpop.f32.mrf.mxu0
        %v1600 = vadd.f32 %v1263, %v1599
        %v1601 = vpop.f32.mrf.mxu0
        %v1602 = vadd.f32 %v1267, %v1601
        %v1603 = vpop.f32.mrf.mxu0
        %v1604 = vadd.f32 %v1263, %v1603
        %v1605 = vpop.f32.mrf.mxu0
        %v1606 = vadd.f32 %v1267, %v1605
        %1607 = vmatprep.mubr.bf16.mxu0 0
        %1608 = vmatmul.mubr.bf16.gmra.mxu0 %v1213
        %v1609 = vpop.f32.mrf.mxu0
        %v1610 = vadd.f32 %v1263, %v1609
        %v1611 = vpop.f32.mrf.mxu0
        %v1612 = vadd.f32 %v1267, %v1611
        %v1613 = vpop.f32.mrf.mxu0
        %v1614 = vadd.f32 %v1263, %v1613
        %v1615 = vpop.f32.mrf.mxu0
        %v1616 = vadd.f32 %v1267, %v1615
        %1617 = vmatprep.mubr.bf16.mxu0 0
        %1618 = vmatmul.mubr.bf16.gmra.mxu0 %v1214
        %v1619 = vpop.f32.mrf.mxu0
        %v1620 = vadd.f32 %v1263, %v1619
        %v1621 = vpop.f32.mrf.mxu0
        %v1622 = vadd.f32 %v1267, %v1621
        %v1623 = vpop.f32.mrf.mxu0
        %v1624 = vadd.f32 %v1263, %v1623
        %v1625 = vpop.f32.mrf.mxu0
        %v1626 = vadd.f32 %v1267, %v1625
        %1627 = vmatprep.mubr.bf16.mxu0 0
        %1628 = vmatmul.mubr.bf16.gmra.mxu0 %v1215
        %v1629 = vpop.f32.mrf.mxu0
        %v1630 = vadd.f32 %v1263, %v1629
        %v1631 = vpop.f32.mrf.mxu0
        %v1632 = vadd.f32 %v1267, %v1631
        %v1633 = vpop.f32.mrf.mxu0
        %v1634 = vadd.f32 %v1263, %v1633
        %v1635 = vpop.f32.mrf.mxu0
        %v1636 = vadd.f32 %v1267, %v1635
        %1637 = vmatprep.mubr.bf16.mxu0 0
        %1638 = vmatmul.mubr.bf16.gmra.mxu0 %v1216
        %v1639 = vpop.f32.mrf.mxu0
        %v1640 = vadd.f32 %v1263, %v1639
        %v1641 = vpop.f32.mrf.mxu0
        %v1642 = vadd.f32 %v1267, %v1641
        %v1643 = vpop.f32.mrf.mxu0
        %v1644 = vadd.f32 %v1263, %v1643
        %v1645 = vpop.f32.mrf.mxu0
        %v1646 = vadd.f32 %v1267, %v1645
        %1647 = vmatprep.mubr.bf16.mxu0 0
        %1648 = vmatmul.mubr.bf16.gmra.mxu0 %v1217
        %v1649 = vpop.f32.mrf.mxu0
        %v1650 = vadd.f32 %v1263, %v1649
        %v1651 = vpop.f32.mrf.mxu0
        %v1652 = vadd.f32 %v1267, %v1651
        %v1653 = vpop.f32.mrf.mxu0
        %v1654 = vadd.f32 %v1263, %v1653
        %v1655 = vpop.f32.mrf.mxu0
        %v1656 = vadd.f32 %v1267, %v1655
        %1657 = vdwg.mxu0
        %v1658 = vpack.c.bf16 %v1473, %v1469
        %v1659 = vpack.c.bf16 %v1584, %v1580
        %v1660 = vpack.c.bf16 %v1586, %v1582
        %v1661 = vpack.c.bf16 %v1483, %v1479
        %v1662 = vpack.c.bf16 %v1594, %v1590
        %v1663 = vpack.c.bf16 %v1596, %v1592
        %v1664 = vpack.c.bf16 %v1493, %v1489
        %v1665 = vpack.c.bf16 %v1604, %v1600
        %v1666 = vpack.c.bf16 %v1606, %v1602
        %v1667 = vpack.c.bf16 %v1503, %v1499
        %v1668 = vpack.c.bf16 %v1614, %v1610
        %v1669 = vpack.c.bf16 %v1616, %v1612
        %v1670 = vpack.c.bf16 %v1513, %v1509
        %v1671 = vpack.c.bf16 %v1624, %v1620
        %v1672 = vpack.c.bf16 %v1626, %v1622
        %v1673 = vpack.c.bf16 %v1523, %v1519
        %v1674 = vpack.c.bf16 %v1634, %v1630
        %v1675 = vpack.c.bf16 %v1636, %v1632
        %v1676 = vpack.c.bf16 %v1533, %v1529
        %v1677 = vpack.c.bf16 %v1644, %v1640
        %v1678 = vpack.c.bf16 %v1646, %v1642
        %v1679 = vpack.c.bf16 %v1543, %v1539
        %v1680 = vpack.c.bf16 %v1654, %v1650
        %v1681 = vpack.c.bf16 %v1656, %v1652
        %v1682 = vlaneseq
        %v1683 = vand.u32 %v1682, 127
        %v1684 = vlaneseq
        %v1685 = vshrl.u32 %v1684, 7
        %v1686 = vadd.s32 %v1685, 8
        %v1687 = vadd.s32 %v1685, 16
        %v1688 = vadd.s32 %v1685, 24
        %v1689 = vadd.s32 %v1685, 32
        %v1690 = vadd.s32 %v1685, 40
        %v1691 = vadd.s32 %v1685, 48
        %v1692 = vadd.s32 %v1685, 56
        %v1693 = vadd.s32 %v1685, 64
        %v1694 = vadd.s32 %v1685, 72
        %v1695 = vadd.s32 %v1685, 80
        %v1696 = vadd.s32 %v1685, 88
        %v1697 = vadd.s32 %v1685, 96
        %v1698 = vadd.s32 %v1685, 104
        %v1699 = vadd.s32 %v1685, 112
        %v1700 = vadd.s32 %v1685, 120
        %v1701 = vld [vmem:[#allocation3] sm:$0xff]
        %v1702 = vld [vmem:[#allocation3 + $0x8] sm:$0xff]
        %v1703 = vld [vmem:[#allocation3 + $0x10] sm:$0xff]
        %v1704 = vld [vmem:[#allocation3 + $0x18] sm:$0xff]
        %v1705 = vld [vmem:[#allocation3 + $0x20] sm:$0xff]
        %v1706 = vld [vmem:[#allocation3 + $0x28] sm:$0xff]
        %v1707 = vld [vmem:[#allocation3 + $0x30] sm:$0xff]
        %v1708 = vld [vmem:[#allocation3 + $0x38] sm:$0xff]
        %v1709 = vld [vmem:[#allocation3 + $0x40] sm:$0xff]
        %v1710 = vld [vmem:[#allocation3 + $0x48] sm:$0xff]
        %v1711 = vld [vmem:[#allocation3 + $0x50] sm:$0xff]
        %v1712 = vld [vmem:[#allocation3 + $0x58] sm:$0xff]
        %v1713 = vld [vmem:[#allocation3 + $0x60] sm:$0xff]
        %v1714 = vld [vmem:[#allocation3 + $0x68] sm:$0xff]
        %v1715 = vld [vmem:[#allocation3 + $0x70] sm:$0xff]
        %v1716 = vld [vmem:[#allocation3 + $0x78] sm:$0xff]
        %v1717 = vld [vmem:[#allocation3 + $0x80] sm:$0xff]
        %v1718 = vld [vmem:[#allocation3 + $0x88] sm:$0xff]
        %v1719 = vld [vmem:[#allocation3 + $0x90] sm:$0xff]
        %v1720 = vld [vmem:[#allocation3 + $0x98] sm:$0xff]
        %v1721 = vld [vmem:[#allocation3 + $0xa0] sm:$0xff]
        %v1722 = vld [vmem:[#allocation3 + $0xa8] sm:$0xff]
        %v1723 = vld [vmem:[#allocation3 + $0xb0] sm:$0xff]
        %v1724 = vld [vmem:[#allocation3 + $0xb8] sm:$0xff]
        %v1725 = vld [vmem:[#allocation3 + $0xc0] sm:$0xff]
        %v1726 = vld [vmem:[#allocation3 + $0xc8] sm:$0xff]
        %v1727 = vld [vmem:[#allocation3 + $0xd0] sm:$0xff]
        %v1728 = vld [vmem:[#allocation3 + $0xd8] sm:$0xff]
        %v1729 = vld [vmem:[#allocation3 + $0xe0] sm:$0xff]
        %v1730 = vld [vmem:[#allocation3 + $0xe8] sm:$0xff]
        %v1731 = vld [vmem:[#allocation3 + $0xf0] sm:$0xff]
        %v1732 = vld [vmem:[#allocation3 + $0xf8] sm:$0xff]
        %v1733 = vld [vmem:[%s2] sm:$0xff]
        %v1734 = vld [vmem:[%s2 + $0x8] sm:$0xff]
        %v1735 = vld [vmem:[%s2 + $0x10] sm:$0xff]
        %v1736 = vld [vmem:[%s2 + $0x18] sm:$0xff]
        %v1737 = vld [vmem:[%s2 + $0x20] sm:$0xff]
        %v1738 = vld [vmem:[%s2 + $0x28] sm:$0xff]
        %v1739 = vld [vmem:[%s2 + $0x30] sm:$0xff]
        %v1740 = vld [vmem:[%s2 + $0x38] sm:$0xff]
        %v1741 = vld [vmem:[%s2 + $0x40] sm:$0xff]
        %v1742 = vld [vmem:[%s2 + $0x48] sm:$0xff]
        %v1743 = vld [vmem:[%s2 + $0x50] sm:$0xff]
        %v1744 = vld [vmem:[%s2 + $0x58] sm:$0xff]
        %v1745 = vld [vmem:[%s2 + $0x60] sm:$0xff]
        %v1746 = vld [vmem:[%s2 + $0x68] sm:$0xff]
        %v1747 = vld [vmem:[%s2 + $0x70] sm:$0xff]
        %v1748 = vld [vmem:[%s2 + $0x78] sm:$0xff]
        %v1749 = vld [vmem:[%s2 + $0x80] sm:$0xff]
        %v1750 = vld [vmem:[%s2 + $0x88] sm:$0xff]
        %v1751 = vld [vmem:[%s2 + $0x90] sm:$0xff]
        %v1752 = vld [vmem:[%s2 + $0x98] sm:$0xff]
        %v1753 = vld [vmem:[%s2 + $0xa0] sm:$0xff]
        %v1754 = vld [vmem:[%s2 + $0xa8] sm:$0xff]
        %v1755 = vld [vmem:[%s2 + $0xb0] sm:$0xff]
        %v1756 = vld [vmem:[%s2 + $0xb8] sm:$0xff]
        %v1757 = vld [vmem:[%s2 + $0xc0] sm:$0xff]
        %v1758 = vld [vmem:[%s2 + $0xc8] sm:$0xff]
        %v1759 = vld [vmem:[%s2 + $0xd0] sm:$0xff]
        %v1760 = vld [vmem:[%s2 + $0xd8] sm:$0xff]
        %v1761 = vld [vmem:[%s2 + $0xe0] sm:$0xff]
        %v1762 = vld [vmem:[%s2 + $0xe8] sm:$0xff]
        %v1763 = vld [vmem:[%s2 + $0xf0] sm:$0xff]
        %v1764 = vld [vmem:[%s2 + $0xf8] sm:$0xff]
        %1765 = vset.pattern.permute.xlu0 0
        %1766 = vperm.xlu0 %1765, %v1733
        %v1767 = vpop.permute.xlu0 %1766
        %1768 = vset.pattern.permute.xlu0 0
        %1769 = vperm.xlu0 %1768, %v1734
        %v1770 = vpop.permute.xlu0 %1769
        %1771 = vset.pattern.permute.xlu0 0
        %1772 = vperm.xlu0 %1771, %v1735
        %v1773 = vpop.permute.xlu0 %1772
        %1774 = vset.pattern.permute.xlu0 0
        %1775 = vperm.xlu0 %1774, %v1736
        %v1776 = vpop.permute.xlu0 %1775
        %1777 = vset.pattern.permute.xlu0 0
        %1778 = vperm.xlu0 %1777, %v1737
        %v1779 = vpop.permute.xlu0 %1778
        %1780 = vset.pattern.permute.xlu0 0
        %1781 = vperm.xlu0 %1780, %v1738
        %v1782 = vpop.permute.xlu0 %1781
        %1783 = vset.pattern.permute.xlu0 0
        %1784 = vperm.xlu0 %1783, %v1739
        %v1785 = vpop.permute.xlu0 %1784
        %1786 = vset.pattern.permute.xlu0 0
        %1787 = vperm.xlu0 %1786, %v1740
        %v1788 = vpop.permute.xlu0 %1787
        %1789 = vset.pattern.permute.xlu0 0
        %1790 = vperm.xlu0 %1789, %v1741
        %v1791 = vpop.permute.xlu0 %1790
        %1792 = vset.pattern.permute.xlu0 0
        %1793 = vperm.xlu0 %1792, %v1742
        %v1794 = vpop.permute.xlu0 %1793
        %1795 = vset.pattern.permute.xlu0 0
        %1796 = vperm.xlu0 %1795, %v1743
        %v1797 = vpop.permute.xlu0 %1796
        %1798 = vset.pattern.permute.xlu0 0
        %1799 = vperm.xlu0 %1798, %v1744
        %v1800 = vpop.permute.xlu0 %1799
        %1801 = vset.pattern.permute.xlu0 0
        %1802 = vperm.xlu0 %1801, %v1745
        %v1803 = vpop.permute.xlu0 %1802
        %1804 = vset.pattern.permute.xlu0 0
        %1805 = vperm.xlu0 %1804, %v1746
        %v1806 = vpop.permute.xlu0 %1805
        %1807 = vset.pattern.permute.xlu0 0
        %1808 = vperm.xlu0 %1807, %v1747
        %v1809 = vpop.permute.xlu0 %1808
        %1810 = vset.pattern.permute.xlu0 0
        %1811 = vperm.xlu0 %1810, %v1748
        %v1812 = vpop.permute.xlu0 %1811
        %1813 = vset.pattern.permute.xlu0 0
        %1814 = vperm.xlu0 %1813, %v1749
        %v1815 = vpop.permute.xlu0 %1814
        %1816 = vset.pattern.permute.xlu0 0
        %1817 = vperm.xlu0 %1816, %v1750
        %v1818 = vpop.permute.xlu0 %1817
        %1819 = vset.pattern.permute.xlu0 0
        %1820 = vperm.xlu0 %1819, %v1751
        %v1821 = vpop.permute.xlu0 %1820
        %1822 = vset.pattern.permute.xlu0 0
        %1823 = vperm.xlu0 %1822, %v1752
        %v1824 = vpop.permute.xlu0 %1823
        %1825 = vset.pattern.permute.xlu0 0
        %1826 = vperm.xlu0 %1825, %v1753
        %v1827 = vpop.permute.xlu0 %1826
        %1828 = vset.pattern.permute.xlu0 0
        %1829 = vperm.xlu0 %1828, %v1754
        %v1830 = vpop.permute.xlu0 %1829
        %1831 = vset.pattern.permute.xlu0 0
        %1832 = vperm.xlu0 %1831, %v1755
        %v1833 = vpop.permute.xlu0 %1832
        %1834 = vset.pattern.permute.xlu0 0
        %1835 = vperm.xlu0 %1834, %v1756
        %v1836 = vpop.permute.xlu0 %1835
        %1837 = vset.pattern.permute.xlu0 0
        %1838 = vperm.xlu0 %1837, %v1757
        %v1839 = vpop.permute.xlu0 %1838
        %1840 = vset.pattern.permute.xlu0 0
        %1841 = vperm.xlu0 %1840, %v1758
        %v1842 = vpop.permute.xlu0 %1841
        %1843 = vset.pattern.permute.xlu0 0
        %1844 = vperm.xlu0 %1843, %v1759
        %v1845 = vpop.permute.xlu0 %1844
        %1846 = vset.pattern.permute.xlu0 0
        %1847 = vperm.xlu0 %1846, %v1760
        %v1848 = vpop.permute.xlu0 %1847
        %1849 = vset.pattern.permute.xlu0 0
        %1850 = vperm.xlu0 %1849, %v1761
        %v1851 = vpop.permute.xlu0 %1850
        %1852 = vset.pattern.permute.xlu0 0
        %1853 = vperm.xlu0 %1852, %v1762
        %v1854 = vpop.permute.xlu0 %1853
        %1855 = vset.pattern.permute.xlu0 0
        %1856 = vperm.xlu0 %1855, %v1763
        %v1857 = vpop.permute.xlu0 %1856
        %1858 = vset.pattern.permute.xlu0 0
        %1859 = vperm.xlu0 %1858, %v1764
        %v1860 = vpop.permute.xlu0 %1859
        %vm1861 = vcmp.eq.s32.totalorder %v1683, %v1767
        %vm1862 = vcmp.eq.s32.totalorder %v1683, %v1770
        %vm1863 = vcmp.eq.s32.totalorder %v1683, %v1773
        %vm1864 = vcmp.eq.s32.totalorder %v1683, %v1776
        %vm1865 = vcmp.eq.s32.totalorder %v1683, %v1779
        %vm1866 = vcmp.eq.s32.totalorder %v1683, %v1782
        %vm1867 = vcmp.eq.s32.totalorder %v1683, %v1785
        %vm1868 = vcmp.eq.s32.totalorder %v1683, %v1788
        %vm1869 = vcmp.eq.s32.totalorder %v1683, %v1791
        %vm1870 = vcmp.eq.s32.totalorder %v1683, %v1794
        %vm1871 = vcmp.eq.s32.totalorder %v1683, %v1797
        %vm1872 = vcmp.eq.s32.totalorder %v1683, %v1800
        %vm1873 = vcmp.eq.s32.totalorder %v1683, %v1803
        %vm1874 = vcmp.eq.s32.totalorder %v1683, %v1806
        %vm1875 = vcmp.eq.s32.totalorder %v1683, %v1809
        %vm1876 = vcmp.eq.s32.totalorder %v1683, %v1812
        %vm1877 = vcmp.eq.s32.totalorder %v1683, %v1815
        %vm1878 = vcmp.eq.s32.totalorder %v1683, %v1818
        %vm1879 = vcmp.eq.s32.totalorder %v1683, %v1821
        %vm1880 = vcmp.eq.s32.totalorder %v1683, %v1824
        %vm1881 = vcmp.eq.s32.totalorder %v1683, %v1827
        %vm1882 = vcmp.eq.s32.totalorder %v1683, %v1830
        %vm1883 = vcmp.eq.s32.totalorder %v1683, %v1833
        %vm1884 = vcmp.eq.s32.totalorder %v1683, %v1836
        %vm1885 = vcmp.eq.s32.totalorder %v1683, %v1839
        %vm1886 = vcmp.eq.s32.totalorder %v1683, %v1842
        %vm1887 = vcmp.eq.s32.totalorder %v1683, %v1845
        %vm1888 = vcmp.eq.s32.totalorder %v1683, %v1848
        %vm1889 = vcmp.eq.s32.totalorder %v1683, %v1851
        %vm1890 = vcmp.eq.s32.totalorder %v1683, %v1854
        %vm1891 = vcmp.eq.s32.totalorder %v1683, %v1857
        %vm1892 = vcmp.eq.s32.totalorder %v1683, %v1860
        %v1893 = vsel %vm1861, 1.0, 0.0
        %v1894 = vsel %vm1862, 1.0, 0.0
        %v1895 = vsel %vm1863, 1.0, 0.0
        %v1896 = vsel %vm1864, 1.0, 0.0
        %v1897 = vsel %vm1865, 1.0, 0.0
        %v1898 = vsel %vm1866, 1.0, 0.0
        %v1899 = vsel %vm1867, 1.0, 0.0
        %v1900 = vsel %vm1868, 1.0, 0.0
        %v1901 = vsel %vm1869, 1.0, 0.0
        %v1902 = vsel %vm1870, 1.0, 0.0
        %v1903 = vsel %vm1871, 1.0, 0.0
        %v1904 = vsel %vm1872, 1.0, 0.0
        %v1905 = vsel %vm1873, 1.0, 0.0
        %v1906 = vsel %vm1874, 1.0, 0.0
        %v1907 = vsel %vm1875, 1.0, 0.0
        %v1908 = vsel %vm1876, 1.0, 0.0
        %v1909 = vsel %vm1877, 1.0, 0.0
        %v1910 = vsel %vm1878, 1.0, 0.0
        %v1911 = vsel %vm1879, 1.0, 0.0
        %v1912 = vsel %vm1880, 1.0, 0.0
        %v1913 = vsel %vm1881, 1.0, 0.0
        %v1914 = vsel %vm1882, 1.0, 0.0
        %v1915 = vsel %vm1883, 1.0, 0.0
        %v1916 = vsel %vm1884, 1.0, 0.0
        %v1917 = vsel %vm1885, 1.0, 0.0
        %v1918 = vsel %vm1886, 1.0, 0.0
        %v1919 = vsel %vm1887, 1.0, 0.0
        %v1920 = vsel %vm1888, 1.0, 0.0
        %v1921 = vsel %vm1889, 1.0, 0.0
        %v1922 = vsel %vm1890, 1.0, 0.0
        %v1923 = vsel %vm1891, 1.0, 0.0
        %v1924 = vsel %vm1892, 1.0, 0.0
        %v1925 = vpack.c.bf16 %v1894, %v1893
        %v1926 = vpack.c.bf16 %v1896, %v1895
        %v1927 = vpack.c.bf16 %v1898, %v1897
        %v1928 = vpack.c.bf16 %v1900, %v1899
        %v1929 = vpack.c.bf16 %v1902, %v1901
        %v1930 = vpack.c.bf16 %v1904, %v1903
        %v1931 = vpack.c.bf16 %v1906, %v1905
        %v1932 = vpack.c.bf16 %v1908, %v1907
        %v1933 = vpack.c.bf16 %v1910, %v1909
        %v1934 = vpack.c.bf16 %v1912, %v1911
        %v1935 = vpack.c.bf16 %v1914, %v1913
        %v1936 = vpack.c.bf16 %v1916, %v1915
        %v1937 = vpack.c.bf16 %v1918, %v1917
        %v1938 = vpack.c.bf16 %v1920, %v1919
        %v1939 = vpack.c.bf16 %v1922, %v1921
        %v1940 = vpack.c.bf16 %v1924, %v1923
        %v1941 = vld [vmem:[%s3] sm:$0xff]
        %v1942 = vld [vmem:[%s3 + $0x8] sm:$0xff]
        %v1943 = vld [vmem:[%s3 + $0x10] sm:$0xff]
        %v1944 = vld [vmem:[%s3 + $0x18] sm:$0xff]
        %v1945 = vld [vmem:[%s3 + $0x20] sm:$0xff]
        %v1946 = vld [vmem:[%s3 + $0x28] sm:$0xff]
        %v1947 = vld [vmem:[%s3 + $0x30] sm:$0xff]
        %v1948 = vld [vmem:[%s3 + $0x38] sm:$0xff]
        %v1949 = vld [vmem:[%s3 + $0x40] sm:$0xff]
        %v1950 = vld [vmem:[%s3 + $0x48] sm:$0xff]
        %v1951 = vld [vmem:[%s3 + $0x50] sm:$0xff]
        %v1952 = vld [vmem:[%s3 + $0x58] sm:$0xff]
        %v1953 = vld [vmem:[%s3 + $0x60] sm:$0xff]
        %v1954 = vld [vmem:[%s3 + $0x68] sm:$0xff]
        %v1955 = vld [vmem:[%s3 + $0x70] sm:$0xff]
        %v1956 = vld [vmem:[%s3 + $0x78] sm:$0xff]
        %v1957 = vld [vmem:[%s3 + $0x80] sm:$0xff]
        %v1958 = vld [vmem:[%s3 + $0x88] sm:$0xff]
        %v1959 = vld [vmem:[%s3 + $0x90] sm:$0xff]
        %v1960 = vld [vmem:[%s3 + $0x98] sm:$0xff]
        %v1961 = vld [vmem:[%s3 + $0xa0] sm:$0xff]
        %v1962 = vld [vmem:[%s3 + $0xa8] sm:$0xff]
        %v1963 = vld [vmem:[%s3 + $0xb0] sm:$0xff]
        %v1964 = vld [vmem:[%s3 + $0xb8] sm:$0xff]
        %v1965 = vld [vmem:[%s3 + $0xc0] sm:$0xff]
        %v1966 = vld [vmem:[%s3 + $0xc8] sm:$0xff]
        %v1967 = vld [vmem:[%s3 + $0xd0] sm:$0xff]
        %v1968 = vld [vmem:[%s3 + $0xd8] sm:$0xff]
        %v1969 = vld [vmem:[%s3 + $0xe0] sm:$0xff]
        %v1970 = vld [vmem:[%s3 + $0xe8] sm:$0xff]
        %v1971 = vld [vmem:[%s3 + $0xf0] sm:$0xff]
        %v1972 = vld [vmem:[%s3 + $0xf8] sm:$0xff]
        %1973 = vset.pattern.permute.xlu0 0
        %1974 = vperm.xlu0 %1973, %v1941
        %v1975 = vpop.permute.xlu0 %1974
        %1976 = vset.pattern.permute.xlu0 0
        %1977 = vperm.xlu0 %1976, %v1942
        %v1978 = vpop.permute.xlu0 %1977
        %1979 = vset.pattern.permute.xlu0 0
        %1980 = vperm.xlu0 %1979, %v1943
        %v1981 = vpop.permute.xlu0 %1980
        %1982 = vset.pattern.permute.xlu0 0
        %1983 = vperm.xlu0 %1982, %v1944
        %v1984 = vpop.permute.xlu0 %1983
        %1985 = vset.pattern.permute.xlu0 0
        %1986 = vperm.xlu0 %1985, %v1945
        %v1987 = vpop.permute.xlu0 %1986
        %1988 = vset.pattern.permute.xlu0 0
        %1989 = vperm.xlu0 %1988, %v1946
        %v1990 = vpop.permute.xlu0 %1989
        %1991 = vset.pattern.permute.xlu0 0
        %1992 = vperm.xlu0 %1991, %v1947
        %v1993 = vpop.permute.xlu0 %1992
        %1994 = vset.pattern.permute.xlu0 0
        %1995 = vperm.xlu0 %1994, %v1948
        %v1996 = vpop.permute.xlu0 %1995
        %1997 = vset.pattern.permute.xlu0 0
        %1998 = vperm.xlu0 %1997, %v1949
        %v1999 = vpop.permute.xlu0 %1998
        %2000 = vset.pattern.permute.xlu0 0
        %2001 = vperm.xlu0 %2000, %v1950
        %v2002 = vpop.permute.xlu0 %2001
        %2003 = vset.pattern.permute.xlu0 0
        %2004 = vperm.xlu0 %2003, %v1951
        %v2005 = vpop.permute.xlu0 %2004
        %2006 = vset.pattern.permute.xlu0 0
        %2007 = vperm.xlu0 %2006, %v1952
        %v2008 = vpop.permute.xlu0 %2007
        %2009 = vset.pattern.permute.xlu0 0
        %2010 = vperm.xlu0 %2009, %v1953
        %v2011 = vpop.permute.xlu0 %2010
        %2012 = vset.pattern.permute.xlu0 0
        %2013 = vperm.xlu0 %2012, %v1954
        %v2014 = vpop.permute.xlu0 %2013
        %2015 = vset.pattern.permute.xlu0 0
        %2016 = vperm.xlu0 %2015, %v1955
        %v2017 = vpop.permute.xlu0 %2016
        %2018 = vset.pattern.permute.xlu0 0
        %2019 = vperm.xlu0 %2018, %v1956
        %v2020 = vpop.permute.xlu0 %2019
        %2021 = vset.pattern.permute.xlu0 0
        %2022 = vperm.xlu0 %2021, %v1957
        %v2023 = vpop.permute.xlu0 %2022
        %2024 = vset.pattern.permute.xlu0 0
        %2025 = vperm.xlu0 %2024, %v1958
        %v2026 = vpop.permute.xlu0 %2025
        %2027 = vset.pattern.permute.xlu0 0
        %2028 = vperm.xlu0 %2027, %v1959
        %v2029 = vpop.permute.xlu0 %2028
        %2030 = vset.pattern.permute.xlu0 0
        %2031 = vperm.xlu0 %2030, %v1960
        %v2032 = vpop.permute.xlu0 %2031
        %2033 = vset.pattern.permute.xlu0 0
        %2034 = vperm.xlu0 %2033, %v1961
        %v2035 = vpop.permute.xlu0 %2034
        %2036 = vset.pattern.permute.xlu0 0
        %2037 = vperm.xlu0 %2036, %v1962
        %v2038 = vpop.permute.xlu0 %2037
        %2039 = vset.pattern.permute.xlu0 0
        %2040 = vperm.xlu0 %2039, %v1963
        %v2041 = vpop.permute.xlu0 %2040
        %2042 = vset.pattern.permute.xlu0 0
        %2043 = vperm.xlu0 %2042, %v1964
        %v2044 = vpop.permute.xlu0 %2043
        %2045 = vset.pattern.permute.xlu0 0
        %2046 = vperm.xlu0 %2045, %v1965
        %v2047 = vpop.permute.xlu0 %2046
        %2048 = vset.pattern.permute.xlu0 0
        %2049 = vperm.xlu0 %2048, %v1966
        %v2050 = vpop.permute.xlu0 %2049
        %2051 = vset.pattern.permute.xlu0 0
        %2052 = vperm.xlu0 %2051, %v1967
        %v2053 = vpop.permute.xlu0 %2052
        %2054 = vset.pattern.permute.xlu0 0
        %2055 = vperm.xlu0 %2054, %v1968
        %v2056 = vpop.permute.xlu0 %2055
        %2057 = vset.pattern.permute.xlu0 0
        %2058 = vperm.xlu0 %2057, %v1969
        %v2059 = vpop.permute.xlu0 %2058
        %2060 = vset.pattern.permute.xlu0 0
        %2061 = vperm.xlu0 %2060, %v1970
        %v2062 = vpop.permute.xlu0 %2061
        %2063 = vset.pattern.permute.xlu0 0
        %2064 = vperm.xlu0 %2063, %v1971
        %v2065 = vpop.permute.xlu0 %2064
        %2066 = vset.pattern.permute.xlu0 0
        %2067 = vperm.xlu0 %2066, %v1972
        %v2068 = vpop.permute.xlu0 %2067
        %vm2069 = vcmp.eq.s32.totalorder %v1683, %v1975
        %vm2070 = vcmp.eq.s32.totalorder %v1683, %v1978
        %vm2071 = vcmp.eq.s32.totalorder %v1683, %v1981
        %vm2072 = vcmp.eq.s32.totalorder %v1683, %v1984
        %vm2073 = vcmp.eq.s32.totalorder %v1683, %v1987
        %vm2074 = vcmp.eq.s32.totalorder %v1683, %v1990
        %vm2075 = vcmp.eq.s32.totalorder %v1683, %v1993
        %vm2076 = vcmp.eq.s32.totalorder %v1683, %v1996
        %vm2077 = vcmp.eq.s32.totalorder %v1683, %v1999
        %vm2078 = vcmp.eq.s32.totalorder %v1683, %v2002
        %vm2079 = vcmp.eq.s32.totalorder %v1683, %v2005
        %vm2080 = vcmp.eq.s32.totalorder %v1683, %v2008
        %vm2081 = vcmp.eq.s32.totalorder %v1683, %v2011
        %vm2082 = vcmp.eq.s32.totalorder %v1683, %v2014
        %vm2083 = vcmp.eq.s32.totalorder %v1683, %v2017
        %vm2084 = vcmp.eq.s32.totalorder %v1683, %v2020
        %vm2085 = vcmp.eq.s32.totalorder %v1683, %v2023
        %vm2086 = vcmp.eq.s32.totalorder %v1683, %v2026
        %vm2087 = vcmp.eq.s32.totalorder %v1683, %v2029
        %vm2088 = vcmp.eq.s32.totalorder %v1683, %v2032
        %vm2089 = vcmp.eq.s32.totalorder %v1683, %v2035
        %vm2090 = vcmp.eq.s32.totalorder %v1683, %v2038
        %vm2091 = vcmp.eq.s32.totalorder %v1683, %v2041
        %vm2092 = vcmp.eq.s32.totalorder %v1683, %v2044
        %vm2093 = vcmp.eq.s32.totalorder %v1683, %v2047
        %vm2094 = vcmp.eq.s32.totalorder %v1683, %v2050
        %vm2095 = vcmp.eq.s32.totalorder %v1683, %v2053
        %vm2096 = vcmp.eq.s32.totalorder %v1683, %v2056
        %vm2097 = vcmp.eq.s32.totalorder %v1683, %v2059
        %vm2098 = vcmp.eq.s32.totalorder %v1683, %v2062
        %vm2099 = vcmp.eq.s32.totalorder %v1683, %v2065
        %vm2100 = vcmp.eq.s32.totalorder %v1683, %v2068
        %v2101 = vsel %vm2069, 1.0, 0.0
        %v2102 = vsel %vm2070, 1.0, 0.0
        %v2103 = vsel %vm2071, 1.0, 0.0
        %v2104 = vsel %vm2072, 1.0, 0.0
        %v2105 = vsel %vm2073, 1.0, 0.0
        %v2106 = vsel %vm2074, 1.0, 0.0
        %v2107 = vsel %vm2075, 1.0, 0.0
        %v2108 = vsel %vm2076, 1.0, 0.0
        %v2109 = vsel %vm2077, 1.0, 0.0
        %v2110 = vsel %vm2078, 1.0, 0.0
        %v2111 = vsel %vm2079, 1.0, 0.0
        %v2112 = vsel %vm2080, 1.0, 0.0
        %v2113 = vsel %vm2081, 1.0, 0.0
        %v2114 = vsel %vm2082, 1.0, 0.0
        %v2115 = vsel %vm2083, 1.0, 0.0
        %v2116 = vsel %vm2084, 1.0, 0.0
        %v2117 = vsel %vm2085, 1.0, 0.0
        %v2118 = vsel %vm2086, 1.0, 0.0
        %v2119 = vsel %vm2087, 1.0, 0.0
        %v2120 = vsel %vm2088, 1.0, 0.0
        %v2121 = vsel %vm2089, 1.0, 0.0
        %v2122 = vsel %vm2090, 1.0, 0.0
        %v2123 = vsel %vm2091, 1.0, 0.0
        %v2124 = vsel %vm2092, 1.0, 0.0
        %v2125 = vsel %vm2093, 1.0, 0.0
        %v2126 = vsel %vm2094, 1.0, 0.0
        %v2127 = vsel %vm2095, 1.0, 0.0
        %v2128 = vsel %vm2096, 1.0, 0.0
        %v2129 = vsel %vm2097, 1.0, 0.0
        %v2130 = vsel %vm2098, 1.0, 0.0
        %v2131 = vsel %vm2099, 1.0, 0.0
        %v2132 = vsel %vm2100, 1.0, 0.0
        %v2133 = vpack.c.bf16 %v2102, %v2101
        %v2134 = vpack.c.bf16 %v2104, %v2103
        %v2135 = vpack.c.bf16 %v2106, %v2105
        %v2136 = vpack.c.bf16 %v2108, %v2107
        %v2137 = vpack.c.bf16 %v2110, %v2109
        %v2138 = vpack.c.bf16 %v2112, %v2111
        %v2139 = vpack.c.bf16 %v2114, %v2113
        %v2140 = vpack.c.bf16 %v2116, %v2115
        %v2141 = vpack.c.bf16 %v2118, %v2117
        %v2142 = vpack.c.bf16 %v2120, %v2119
        %v2143 = vpack.c.bf16 %v2122, %v2121
        %v2144 = vpack.c.bf16 %v2124, %v2123
        %v2145 = vpack.c.bf16 %v2126, %v2125
        %v2146 = vpack.c.bf16 %v2128, %v2127
        %v2147 = vpack.c.bf16 %v2130, %v2129
        %v2148 = vpack.c.bf16 %v2132, %v2131
        %v2149 = vld [vmem:[%s4] sm:$0x3]
        %v2150 = vlaneseq
        %v2151 = vshrl.u32 %v2150, 7
        %v2152 = vsub.s32 0, %v2151
        %v2153 = vrot.slane %v2149, %v2152
        %v2154 = vlaneseq
        %v2155 = vshrl.u32 %v2154, 7
        %v2156 = vsub.s32 1, %v2155
        %v2157 = vrot.slane %v2149, %v2156
        %vm2158 = vcmp.eq.s32.totalorder %v1685, %v2153
        %vm2159 = vcmp.eq.s32.totalorder %v1685, %v2157
        %vm2160 = vcmp.eq.s32.totalorder %v1686, %v2153
        %vm2161 = vcmp.eq.s32.totalorder %v1686, %v2157
        %vm2162 = vcmp.eq.s32.totalorder %v1687, %v2153
        %vm2163 = vcmp.eq.s32.totalorder %v1687, %v2157
        %vm2164 = vcmp.eq.s32.totalorder %v1688, %v2153
        %vm2165 = vcmp.eq.s32.totalorder %v1688, %v2157
        %vm2166 = vcmp.eq.s32.totalorder %v1689, %v2153
        %vm2167 = vcmp.eq.s32.totalorder %v1689, %v2157
        %vm2168 = vcmp.eq.s32.totalorder %v1690, %v2153
        %vm2169 = vcmp.eq.s32.totalorder %v1690, %v2157
        %vm2170 = vcmp.eq.s32.totalorder %v1691, %v2153
        %vm2171 = vcmp.eq.s32.totalorder %v1691, %v2157
        %vm2172 = vcmp.eq.s32.totalorder %v1692, %v2153
        %vm2173 = vcmp.eq.s32.totalorder %v1692, %v2157
        %vm2174 = vcmp.eq.s32.totalorder %v1693, %v2153
        %vm2175 = vcmp.eq.s32.totalorder %v1693, %v2157
        %vm2176 = vcmp.eq.s32.totalorder %v1694, %v2153
        %vm2177 = vcmp.eq.s32.totalorder %v1694, %v2157
        %vm2178 = vcmp.eq.s32.totalorder %v1695, %v2153
        %vm2179 = vcmp.eq.s32.totalorder %v1695, %v2157
        %vm2180 = vcmp.eq.s32.totalorder %v1696, %v2153
        %vm2181 = vcmp.eq.s32.totalorder %v1696, %v2157
        %vm2182 = vcmp.eq.s32.totalorder %v1697, %v2153
        %vm2183 = vcmp.eq.s32.totalorder %v1697, %v2157
        %vm2184 = vcmp.eq.s32.totalorder %v1698, %v2153
        %vm2185 = vcmp.eq.s32.totalorder %v1698, %v2157
        %vm2186 = vcmp.eq.s32.totalorder %v1699, %v2153
        %vm2187 = vcmp.eq.s32.totalorder %v1699, %v2157
        %vm2188 = vcmp.eq.s32.totalorder %v1700, %v2153
        %vm2189 = vcmp.eq.s32.totalorder %v1700, %v2157
        %v2190 = vsel %vm2158, 1.0, 0.0
        %v2191 = vsel %vm2159, 1.0, 0.0
        %v2192 = vsel %vm2160, 1.0, 0.0
        %v2193 = vsel %vm2161, 1.0, 0.0
        %v2194 = vsel %vm2162, 1.0, 0.0
        %v2195 = vsel %vm2163, 1.0, 0.0
        %v2196 = vsel %vm2164, 1.0, 0.0
        %v2197 = vsel %vm2165, 1.0, 0.0
        %v2198 = vsel %vm2166, 1.0, 0.0
        %v2199 = vsel %vm2167, 1.0, 0.0
        %v2200 = vsel %vm2168, 1.0, 0.0
        %v2201 = vsel %vm2169, 1.0, 0.0
        %v2202 = vsel %vm2170, 1.0, 0.0
        %v2203 = vsel %vm2171, 1.0, 0.0
        %v2204 = vsel %vm2172, 1.0, 0.0
        %v2205 = vsel %vm2173, 1.0, 0.0
        %v2206 = vsel %vm2174, 1.0, 0.0
        %v2207 = vsel %vm2175, 1.0, 0.0
        %v2208 = vsel %vm2176, 1.0, 0.0
        %v2209 = vsel %vm2177, 1.0, 0.0
        %v2210 = vsel %vm2178, 1.0, 0.0
        %v2211 = vsel %vm2179, 1.0, 0.0
        %v2212 = vsel %vm2180, 1.0, 0.0
        %v2213 = vsel %vm2181, 1.0, 0.0
        %v2214 = vsel %vm2182, 1.0, 0.0
        %v2215 = vsel %vm2183, 1.0, 0.0
        %v2216 = vsel %vm2184, 1.0, 0.0
        %v2217 = vsel %vm2185, 1.0, 0.0
        %v2218 = vsel %vm2186, 1.0, 0.0
        %v2219 = vsel %vm2187, 1.0, 0.0
        %v2220 = vsel %vm2188, 1.0, 0.0
        %v2221 = vsel %vm2189, 1.0, 0.0
        %v2222 = vpack.c.bf16 %v2192, %v2190
        %v2223 = vpack.c.bf16 %v2193, %v2191
        %v2224 = vpack.c.bf16 %v2196, %v2194
        %v2225 = vpack.c.bf16 %v2197, %v2195
        %v2226 = vpack.c.bf16 %v2200, %v2198
        %v2227 = vpack.c.bf16 %v2201, %v2199
        %v2228 = vpack.c.bf16 %v2204, %v2202
        %v2229 = vpack.c.bf16 %v2205, %v2203
        %v2230 = vpack.c.bf16 %v2208, %v2206
        %v2231 = vpack.c.bf16 %v2209, %v2207
        %v2232 = vpack.c.bf16 %v2212, %v2210
        %v2233 = vpack.c.bf16 %v2213, %v2211
        %v2234 = vpack.c.bf16 %v2216, %v2214
        %v2235 = vpack.c.bf16 %v2217, %v2215
        %v2236 = vpack.c.bf16 %v2220, %v2218
        %v2237 = vpack.c.bf16 %v2221, %v2219
        %v2238 = vpack.c.bf16 %v1702, %v1701
        %v2239 = vpack.c.bf16 %v1704, %v1703
        %v2240 = vpack.c.bf16 %v1706, %v1705
        %v2241 = vpack.c.bf16 %v1708, %v1707
        %v2242 = vpack.c.bf16 %v1710, %v1709
        %v2243 = vpack.c.bf16 %v1712, %v1711
        %v2244 = vpack.c.bf16 %v1714, %v1713
        %v2245 = vpack.c.bf16 %v1716, %v1715
        %v2246 = vpack.c.bf16 %v1718, %v1717
        %v2247 = vpack.c.bf16 %v1720, %v1719
        %v2248 = vpack.c.bf16 %v1722, %v1721
        %v2249 = vpack.c.bf16 %v1724, %v1723
        %v2250 = vpack.c.bf16 %v1726, %v1725
        %v2251 = vpack.c.bf16 %v1728, %v1727
        %v2252 = vpack.c.bf16 %v1730, %v1729
        %v2253 = vpack.c.bf16 %v1732, %v1731
        %v2254 = vld [vmem:[%s692] sm:$0xf]
        %v2255 = vld [vmem:[%s692 + $0x4] sm:$0xf]
        %v2256 = vld [vmem:[%s692 + $0x8] sm:$0xf]
        %v2257 = vld [vmem:[%s692 + $0xc] sm:$0xf]
        %v2258 = vld [vmem:[%s692 + $0x10] sm:$0xf]
        %v2259 = vld [vmem:[%s692 + $0x14] sm:$0xf]
        %v2260 = vld [vmem:[%s692 + $0x18] sm:$0xf]
        %v2261 = vld [vmem:[%s692 + $0x1c] sm:$0xf]
        %v2262 = vld [vmem:[%s692 + $0x20] sm:$0xf]
        %v2263 = vld [vmem:[%s692 + $0x24] sm:$0xf]
        %v2264 = vld [vmem:[%s692 + $0x28] sm:$0xf]
        %v2265 = vld [vmem:[%s692 + $0x2c] sm:$0xf]
        %v2266 = vld [vmem:[%s692 + $0x30] sm:$0xf]
        %v2267 = vld [vmem:[%s692 + $0x34] sm:$0xf]
        %v2268 = vld [vmem:[%s692 + $0x38] sm:$0xf]
        %v2269 = vld [vmem:[%s692 + $0x3c] sm:$0xf]
        %v2270 = vld [vmem:[%s695] sm:$0x1]
        %v2272 = vlaneseq
        %v2273 = vshrl.u32 %v2272, 7
        %v2274 = vsub.s32 0, %v2273
        %v2275 = vrot.slane %v2270, %v2274
        %v2293 = vunpack.c.l.b16 %v2254
        %v2294 = vunpack.c.l.b16 %v2255
        %v2295 = vunpack.c.l.b16 %v2256
        %v2296 = vunpack.c.l.b16 %v2257
        %v2297 = vunpack.c.l.b16 %v2258
        %v2298 = vunpack.c.l.b16 %v2259
        %v2299 = vunpack.c.l.b16 %v2260
        %v2300 = vunpack.c.l.b16 %v2261
        %v2301 = vunpack.c.l.b16 %v2262
        %v2302 = vunpack.c.l.b16 %v2263
        %v2303 = vunpack.c.l.b16 %v2264
        %v2304 = vunpack.c.l.b16 %v2265
        %v2305 = vunpack.c.l.b16 %v2266
        %v2306 = vunpack.c.l.b16 %v2267
        %v2307 = vunpack.c.l.b16 %v2268
        %v2308 = vunpack.c.l.b16 %v2269
        %v2309 = vpack.c.b16 %v2294, %v2293
        %v2310 = vpack.c.b16 %v2296, %v2295
        %v2311 = vpack.c.b16 %v2298, %v2297
        %v2312 = vpack.c.b16 %v2300, %v2299
        %v2313 = vpack.c.b16 %v2302, %v2301
        %v2314 = vpack.c.b16 %v2304, %v2303
        %v2315 = vpack.c.b16 %v2306, %v2305
        %v2316 = vpack.c.b16 %v2308, %v2307
        %2325 = vmatprep.subr.bf16.mxu0 0
        %2326 = vmatpush1.bf16.msra.mxu0 %v2316
        %2327 = vmatprep.subr.bf16.mxu0 0
        %2328 = vmatpush1.bf16.msra.mxu0 %v2315
        %2329 = vmatprep.subr.bf16.mxu0 0
        %2330 = vmatpush1.bf16.msra.mxu0 %v2314
        %2331 = vmatprep.subr.bf16.mxu0 0
        %2332 = vmatpush1.bf16.msra.mxu0 %v2313
        %2333 = vmatprep.subr.bf16.mxu0 0
        %2334 = vmatpush1.bf16.msra.mxu0 %v2312
        %2335 = vmatprep.subr.bf16.mxu0 0
        %2336 = vmatpush1.bf16.msra.mxu0 %v2311
        %2337 = vmatprep.subr.bf16.mxu0 0
        %2338 = vmatpush1.bf16.msra.mxu0 %v2310
        %2339 = vmatprep.subr.bf16.mxu0 0
        %2340 = vmatpush1.bf16.msra.mxu0 %v2309
        %2341 = vmatprep.subr.bf16.mxu0 0
        %2342 = vmatpush2.bf16.msra.mxu0 0
        %2343 = vmatprep.subr.bf16.mxu0 0
        %2344 = vmatpush2.bf16.msra.mxu0 0
        %2345 = vmatprep.subr.bf16.mxu0 0
        %2346 = vmatpush2.bf16.msra.mxu0 0
        %2347 = vmatprep.subr.bf16.mxu0 0
        %2348 = vmatpush2.bf16.msra.mxu0 0
        %2349 = vmatprep.subr.bf16.mxu0 0
        %2350 = vmatpush2.bf16.msra.mxu0 0
        %2351 = vmatprep.subr.bf16.mxu0 0
        %2352 = vmatpush2.bf16.msra.mxu0 0
        %2353 = vmatprep.subr.bf16.mxu0 0
        %2354 = vmatpush2.bf16.msra.mxu0 0
        %2355 = vmatprep.subr.bf16.mxu0 0
        %2356 = vmatpush2.bf16.msra.mxu0 0
        %2357 = vmatprep.mubr.bf16.mxu0 0
        %2358 = vmatmul.mubr.bf16.gmra.mxu0 %v2238
        %v2359 = vpop.f32.mrf.mxu0
        %v2360 = vadd.f32 %v2275, %v2359
        %v2361 = vpop.f32.mrf.mxu0
        %v2362 = vpop.f32.mrf.mxu0
        %v2363 = vadd.f32 %v2275, %v2362
        %v2364 = vpop.f32.mrf.mxu0
        %2365 = vmatprep.mubr.bf16.mxu0 0
        %2366 = vmatmul.mubr.bf16.gmra.mxu0 %v2239
        %v2367 = vpop.f32.mrf.mxu0
        %v2368 = vadd.f32 %v2275, %v2367
        %v2369 = vpop.f32.mrf.mxu0
        %v2370 = vpop.f32.mrf.mxu0
        %v2371 = vadd.f32 %v2275, %v2370
        %v2372 = vpop.f32.mrf.mxu0
        %2373 = vmatprep.mubr.bf16.mxu0 0
        %2374 = vmatmul.mubr.bf16.gmra.mxu0 %v2240
        %v2375 = vpop.f32.mrf.mxu0
        %v2376 = vadd.f32 %v2275, %v2375
        %v2377 = vpop.f32.mrf.mxu0
        %v2378 = vpop.f32.mrf.mxu0
        %v2379 = vadd.f32 %v2275, %v2378
        %v2380 = vpop.f32.mrf.mxu0
        %2381 = vmatprep.mubr.bf16.mxu0 0
        %2382 = vmatmul.mubr.bf16.gmra.mxu0 %v2241
        %v2383 = vpop.f32.mrf.mxu0
        %v2384 = vadd.f32 %v2275, %v2383
        %v2385 = vpop.f32.mrf.mxu0
        %v2386 = vpop.f32.mrf.mxu0
        %v2387 = vadd.f32 %v2275, %v2386
        %v2388 = vpop.f32.mrf.mxu0
        %2389 = vmatprep.mubr.bf16.mxu0 0
        %2390 = vmatmul.mubr.bf16.gmra.mxu0 %v2242
        %v2391 = vpop.f32.mrf.mxu0
        %v2392 = vadd.f32 %v2275, %v2391
        %v2393 = vpop.f32.mrf.mxu0
        %v2394 = vpop.f32.mrf.mxu0
        %v2395 = vadd.f32 %v2275, %v2394
        %v2396 = vpop.f32.mrf.mxu0
        %2397 = vmatprep.mubr.bf16.mxu0 0
        %2398 = vmatmul.mubr.bf16.gmra.mxu0 %v2243
        %v2399 = vpop.f32.mrf.mxu0
        %v2400 = vadd.f32 %v2275, %v2399
        %v2401 = vpop.f32.mrf.mxu0
        %v2402 = vpop.f32.mrf.mxu0
        %v2403 = vadd.f32 %v2275, %v2402
        %v2404 = vpop.f32.mrf.mxu0
        %2405 = vmatprep.mubr.bf16.mxu0 0
        %2406 = vmatmul.mubr.bf16.gmra.mxu0 %v2244
        %v2407 = vpop.f32.mrf.mxu0
        %v2408 = vadd.f32 %v2275, %v2407
        %v2409 = vpop.f32.mrf.mxu0
        %v2410 = vpop.f32.mrf.mxu0
        %v2411 = vadd.f32 %v2275, %v2410
        %v2412 = vpop.f32.mrf.mxu0
        %2413 = vmatprep.mubr.bf16.mxu0 0
        %2414 = vmatmul.mubr.bf16.gmra.mxu0 %v2245
        %v2415 = vpop.f32.mrf.mxu0
        %v2416 = vadd.f32 %v2275, %v2415
        %v2417 = vpop.f32.mrf.mxu0
        %v2418 = vpop.f32.mrf.mxu0
        %v2419 = vadd.f32 %v2275, %v2418
        %v2420 = vpop.f32.mrf.mxu0
        %2421 = vmatprep.mubr.bf16.mxu0 0
        %2422 = vmatmul.mubr.bf16.gmra.mxu0 %v2246
        %v2423 = vpop.f32.mrf.mxu0
        %v2424 = vadd.f32 %v2275, %v2423
        %v2425 = vpop.f32.mrf.mxu0
        %v2426 = vpop.f32.mrf.mxu0
        %v2427 = vadd.f32 %v2275, %v2426
        %v2428 = vpop.f32.mrf.mxu0
        %2429 = vmatprep.mubr.bf16.mxu0 0
        %2430 = vmatmul.mubr.bf16.gmra.mxu0 %v2247
        %v2431 = vpop.f32.mrf.mxu0
        %v2432 = vadd.f32 %v2275, %v2431
        %v2433 = vpop.f32.mrf.mxu0
        %v2434 = vpop.f32.mrf.mxu0
        %v2435 = vadd.f32 %v2275, %v2434
        %v2436 = vpop.f32.mrf.mxu0
        %2437 = vmatprep.mubr.bf16.mxu0 0
        %2438 = vmatmul.mubr.bf16.gmra.mxu0 %v2248
        %v2439 = vpop.f32.mrf.mxu0
        %v2440 = vadd.f32 %v2275, %v2439
        %v2441 = vpop.f32.mrf.mxu0
        %v2442 = vpop.f32.mrf.mxu0
        %v2443 = vadd.f32 %v2275, %v2442
        %v2444 = vpop.f32.mrf.mxu0
        %2445 = vmatprep.mubr.bf16.mxu0 0
        %2446 = vmatmul.mubr.bf16.gmra.mxu0 %v2249
        %v2447 = vpop.f32.mrf.mxu0
        %v2448 = vadd.f32 %v2275, %v2447
        %v2449 = vpop.f32.mrf.mxu0
        %v2450 = vpop.f32.mrf.mxu0
        %v2451 = vadd.f32 %v2275, %v2450
        %v2452 = vpop.f32.mrf.mxu0
        %2453 = vmatprep.mubr.bf16.mxu0 0
        %2454 = vmatmul.mubr.bf16.gmra.mxu0 %v2250
        %v2455 = vpop.f32.mrf.mxu0
        %v2456 = vadd.f32 %v2275, %v2455
        %v2457 = vpop.f32.mrf.mxu0
        %v2458 = vpop.f32.mrf.mxu0
        %v2459 = vadd.f32 %v2275, %v2458
        %v2460 = vpop.f32.mrf.mxu0
        %2461 = vmatprep.mubr.bf16.mxu0 0
        %2462 = vmatmul.mubr.bf16.gmra.mxu0 %v2251
        %v2463 = vpop.f32.mrf.mxu0
        %v2464 = vadd.f32 %v2275, %v2463
        %v2465 = vpop.f32.mrf.mxu0
        %v2466 = vpop.f32.mrf.mxu0
        %v2467 = vadd.f32 %v2275, %v2466
        %v2468 = vpop.f32.mrf.mxu0
        %2469 = vmatprep.mubr.bf16.mxu0 0
        %2470 = vmatmul.mubr.bf16.gmra.mxu0 %v2252
        %v2471 = vpop.f32.mrf.mxu0
        %v2472 = vadd.f32 %v2275, %v2471
        %v2473 = vpop.f32.mrf.mxu0
        %v2474 = vpop.f32.mrf.mxu0
        %v2475 = vadd.f32 %v2275, %v2474
        %v2476 = vpop.f32.mrf.mxu0
        %2477 = vmatprep.mubr.bf16.mxu0 0
        %2478 = vmatmul.mubr.bf16.gmra.mxu0 %v2253
        %v2479 = vpop.f32.mrf.mxu0
        %v2480 = vadd.f32 %v2275, %v2479
        %v2481 = vpop.f32.mrf.mxu0
        %v2482 = vpop.f32.mrf.mxu0
        %v2483 = vadd.f32 %v2275, %v2482
        %v2484 = vpop.f32.mrf.mxu0
        %2485 = vdwg.mxu0
        %2486 = vmatprep.subr.bf16.mxu0 %v1680
        %2487 = vmatpush1.bf16.msra.mxu0 %v1679
        %2488 = vmatprep.subr.bf16.mxu0 %v1677
        %2489 = vmatpush1.bf16.msra.mxu0 %v1676
        %2490 = vmatprep.subr.bf16.mxu0 %v1674
        %2491 = vmatpush1.bf16.msra.mxu0 %v1673
        %2492 = vmatprep.subr.bf16.mxu0 %v1671
        %2493 = vmatpush1.bf16.msra.mxu0 %v1670
        %2494 = vmatprep.subr.bf16.mxu0 %v1668
        %2495 = vmatpush1.bf16.msra.mxu0 %v1667
        %2496 = vmatprep.subr.bf16.mxu0 %v1665
        %2497 = vmatpush1.bf16.msra.mxu0 %v1664
        %2498 = vmatprep.subr.bf16.mxu0 %v1662
        %2499 = vmatpush1.bf16.msra.mxu0 %v1661
        %2500 = vmatprep.subr.bf16.mxu0 %v1659
        %2501 = vmatpush1.bf16.msra.mxu0 %v1658
        %2502 = vmatprep.subr.bf16.mxu0 0
        %2503 = vmatpush2.bf16.msra.mxu0 0
        %2504 = vmatprep.subr.bf16.mxu0 0
        %2505 = vmatpush2.bf16.msra.mxu0 0
        %2506 = vmatprep.subr.bf16.mxu0 0
        %2507 = vmatpush2.bf16.msra.mxu0 0
        %2508 = vmatprep.subr.bf16.mxu0 0
        %2509 = vmatpush2.bf16.msra.mxu0 0
        %2510 = vmatprep.subr.bf16.mxu0 0
        %2511 = vmatpush2.bf16.msra.mxu0 0
        %2512 = vmatprep.subr.bf16.mxu0 0
        %2513 = vmatpush2.bf16.msra.mxu0 0
        %2514 = vmatprep.subr.bf16.mxu0 0
        %2515 = vmatpush2.bf16.msra.mxu0 0
        %2516 = vmatprep.subr.bf16.mxu0 0
        %2517 = vmatpush2.bf16.msra.mxu0 0
        %2518 = vmatprep.mubr.bf16.mxu0 0
        %2519 = vmatmul.mubr.bf16.gmra.mxu0 %v1925
        %v2520 = vpop.f32.mrf.mxu0
        %v2521 = vadd.f32 0.0, %v2520
        %v2522 = vpop.f32.mrf.mxu0
        %v2523 = vadd.f32 0.0, %v2522
        %v2524 = vpop.f32.mrf.mxu0
        %v2525 = vadd.f32 0.0, %v2524
        %v2526 = vpop.f32.mrf.mxu0
        %v2527 = vadd.f32 0.0, %v2526
        %2528 = vmatprep.mubr.bf16.mxu0 0
        %2529 = vmatmul.mubr.bf16.gmra.mxu0 %v1926
        %v2530 = vpop.f32.mrf.mxu0
        %v2531 = vadd.f32 0.0, %v2530
        %v2532 = vpop.f32.mrf.mxu0
        %v2533 = vadd.f32 0.0, %v2532
        %v2534 = vpop.f32.mrf.mxu0
        %v2535 = vadd.f32 0.0, %v2534
        %v2536 = vpop.f32.mrf.mxu0
        %v2537 = vadd.f32 0.0, %v2536
        %2538 = vmatprep.mubr.bf16.mxu0 0
        %2539 = vmatmul.mubr.bf16.gmra.mxu0 %v1927
        %v2540 = vpop.f32.mrf.mxu0
        %v2541 = vadd.f32 0.0, %v2540
        %v2542 = vpop.f32.mrf.mxu0
        %v2543 = vadd.f32 0.0, %v2542
        %v2544 = vpop.f32.mrf.mxu0
        %v2545 = vadd.f32 0.0, %v2544
        %v2546 = vpop.f32.mrf.mxu0
        %v2547 = vadd.f32 0.0, %v2546
        %2548 = vmatprep.mubr.bf16.mxu0 0
        %2549 = vmatmul.mubr.bf16.gmra.mxu0 %v1928
        %v2550 = vpop.f32.mrf.mxu0
        %v2551 = vadd.f32 0.0, %v2550
        %v2552 = vpop.f32.mrf.mxu0
        %v2553 = vadd.f32 0.0, %v2552
        %v2554 = vpop.f32.mrf.mxu0
        %v2555 = vadd.f32 0.0, %v2554
        %v2556 = vpop.f32.mrf.mxu0
        %v2557 = vadd.f32 0.0, %v2556
        %2558 = vmatprep.mubr.bf16.mxu0 0
        %2559 = vmatmul.mubr.bf16.gmra.mxu0 %v1929
        %v2560 = vpop.f32.mrf.mxu0
        %v2561 = vadd.f32 0.0, %v2560
        %v2562 = vpop.f32.mrf.mxu0
        %v2563 = vadd.f32 0.0, %v2562
        %v2564 = vpop.f32.mrf.mxu0
        %v2565 = vadd.f32 0.0, %v2564
        %v2566 = vpop.f32.mrf.mxu0
        %v2567 = vadd.f32 0.0, %v2566
        %2568 = vmatprep.mubr.bf16.mxu0 0
        %2569 = vmatmul.mubr.bf16.gmra.mxu0 %v1930
        %v2570 = vpop.f32.mrf.mxu0
        %v2571 = vadd.f32 0.0, %v2570
        %v2572 = vpop.f32.mrf.mxu0
        %v2573 = vadd.f32 0.0, %v2572
        %v2574 = vpop.f32.mrf.mxu0
        %v2575 = vadd.f32 0.0, %v2574
        %v2576 = vpop.f32.mrf.mxu0
        %v2577 = vadd.f32 0.0, %v2576
        %2578 = vmatprep.mubr.bf16.mxu0 0
        %2579 = vmatmul.mubr.bf16.gmra.mxu0 %v1931
        %v2580 = vpop.f32.mrf.mxu0
        %v2581 = vadd.f32 0.0, %v2580
        %v2582 = vpop.f32.mrf.mxu0
        %v2583 = vadd.f32 0.0, %v2582
        %v2584 = vpop.f32.mrf.mxu0
        %v2585 = vadd.f32 0.0, %v2584
        %v2586 = vpop.f32.mrf.mxu0
        %v2587 = vadd.f32 0.0, %v2586
        %2588 = vmatprep.mubr.bf16.mxu0 0
        %2589 = vmatmul.mubr.bf16.gmra.mxu0 %v1932
        %v2590 = vpop.f32.mrf.mxu0
        %v2591 = vadd.f32 0.0, %v2590
        %v2592 = vpop.f32.mrf.mxu0
        %v2593 = vadd.f32 0.0, %v2592
        %v2594 = vpop.f32.mrf.mxu0
        %v2595 = vadd.f32 0.0, %v2594
        %v2596 = vpop.f32.mrf.mxu0
        %v2597 = vadd.f32 0.0, %v2596
        %2598 = vmatprep.mubr.bf16.mxu0 0
        %2599 = vmatmul.mubr.bf16.gmra.mxu0 %v1933
        %v2600 = vpop.f32.mrf.mxu0
        %v2601 = vadd.f32 0.0, %v2600
        %v2602 = vpop.f32.mrf.mxu0
        %v2603 = vadd.f32 0.0, %v2602
        %v2604 = vpop.f32.mrf.mxu0
        %v2605 = vadd.f32 0.0, %v2604
        %v2606 = vpop.f32.mrf.mxu0
        %v2607 = vadd.f32 0.0, %v2606
        %2608 = vmatprep.mubr.bf16.mxu0 0
        %2609 = vmatmul.mubr.bf16.gmra.mxu0 %v1934
        %v2610 = vpop.f32.mrf.mxu0
        %v2611 = vadd.f32 0.0, %v2610
        %v2612 = vpop.f32.mrf.mxu0
        %v2613 = vadd.f32 0.0, %v2612
        %v2614 = vpop.f32.mrf.mxu0
        %v2615 = vadd.f32 0.0, %v2614
        %v2616 = vpop.f32.mrf.mxu0
        %v2617 = vadd.f32 0.0, %v2616
        %2618 = vmatprep.mubr.bf16.mxu0 0
        %2619 = vmatmul.mubr.bf16.gmra.mxu0 %v1935
        %v2620 = vpop.f32.mrf.mxu0
        %v2621 = vadd.f32 0.0, %v2620
        %v2622 = vpop.f32.mrf.mxu0
        %v2623 = vadd.f32 0.0, %v2622
        %v2624 = vpop.f32.mrf.mxu0
        %v2625 = vadd.f32 0.0, %v2624
        %v2626 = vpop.f32.mrf.mxu0
        %v2627 = vadd.f32 0.0, %v2626
        %2628 = vmatprep.mubr.bf16.mxu0 0
        %2629 = vmatmul.mubr.bf16.gmra.mxu0 %v1936
        %v2630 = vpop.f32.mrf.mxu0
        %v2631 = vadd.f32 0.0, %v2630
        %v2632 = vpop.f32.mrf.mxu0
        %v2633 = vadd.f32 0.0, %v2632
        %v2634 = vpop.f32.mrf.mxu0
        %v2635 = vadd.f32 0.0, %v2634
        %v2636 = vpop.f32.mrf.mxu0
        %v2637 = vadd.f32 0.0, %v2636
        %2638 = vmatprep.mubr.bf16.mxu0 0
        %2639 = vmatmul.mubr.bf16.gmra.mxu0 %v1937
        %v2640 = vpop.f32.mrf.mxu0
        %v2641 = vadd.f32 0.0, %v2640
        %v2642 = vpop.f32.mrf.mxu0
        %v2643 = vadd.f32 0.0, %v2642
        %v2644 = vpop.f32.mrf.mxu0
        %v2645 = vadd.f32 0.0, %v2644
        %v2646 = vpop.f32.mrf.mxu0
        %v2647 = vadd.f32 0.0, %v2646
        %2648 = vmatprep.mubr.bf16.mxu0 0
        %2649 = vmatmul.mubr.bf16.gmra.mxu0 %v1938
        %v2650 = vpop.f32.mrf.mxu0
        %v2651 = vadd.f32 0.0, %v2650
        %v2652 = vpop.f32.mrf.mxu0
        %v2653 = vadd.f32 0.0, %v2652
        %v2654 = vpop.f32.mrf.mxu0
        %v2655 = vadd.f32 0.0, %v2654
        %v2656 = vpop.f32.mrf.mxu0
        %v2657 = vadd.f32 0.0, %v2656
        %2658 = vmatprep.mubr.bf16.mxu0 0
        %2659 = vmatmul.mubr.bf16.gmra.mxu0 %v1939
        %v2660 = vpop.f32.mrf.mxu0
        %v2661 = vadd.f32 0.0, %v2660
        %v2662 = vpop.f32.mrf.mxu0
        %v2663 = vadd.f32 0.0, %v2662
        %v2664 = vpop.f32.mrf.mxu0
        %v2665 = vadd.f32 0.0, %v2664
        %v2666 = vpop.f32.mrf.mxu0
        %v2667 = vadd.f32 0.0, %v2666
        %2668 = vmatprep.mubr.bf16.mxu0 0
        %2669 = vmatmul.mubr.bf16.gmra.mxu0 %v1940
        %v2670 = vpop.f32.mrf.mxu0
        %v2671 = vadd.f32 0.0, %v2670
        %v2672 = vpop.f32.mrf.mxu0
        %v2673 = vadd.f32 0.0, %v2672
        %v2674 = vpop.f32.mrf.mxu0
        %v2675 = vadd.f32 0.0, %v2674
        %v2676 = vpop.f32.mrf.mxu0
        %v2677 = vadd.f32 0.0, %v2676
        %2678 = vdwg.mxu0
        %2679 = vmatprep.subr.bf16.mxu0 0
        %2680 = vmatpush1.bf16.msra.mxu0 %v1681
        %2681 = vmatprep.subr.bf16.mxu0 0
        %2682 = vmatpush1.bf16.msra.mxu0 %v1678
        %2683 = vmatprep.subr.bf16.mxu0 0
        %2684 = vmatpush1.bf16.msra.mxu0 %v1675
        %2685 = vmatprep.subr.bf16.mxu0 0
        %2686 = vmatpush1.bf16.msra.mxu0 %v1672
        %2687 = vmatprep.subr.bf16.mxu0 0
        %2688 = vmatpush1.bf16.msra.mxu0 %v1669
        %2689 = vmatprep.subr.bf16.mxu0 0
        %2690 = vmatpush1.bf16.msra.mxu0 %v1666
        %2691 = vmatprep.subr.bf16.mxu0 0
        %2692 = vmatpush1.bf16.msra.mxu0 %v1663
        %2693 = vmatprep.subr.bf16.mxu0 0
        %2694 = vmatpush1.bf16.msra.mxu0 %v1660
        %2695 = vmatprep.subr.bf16.mxu0 0
        %2696 = vmatpush2.bf16.msra.mxu0 0
        %2697 = vmatprep.subr.bf16.mxu0 0
        %2698 = vmatpush2.bf16.msra.mxu0 0
        %2699 = vmatprep.subr.bf16.mxu0 0
        %2700 = vmatpush2.bf16.msra.mxu0 0
        %2701 = vmatprep.subr.bf16.mxu0 0
        %2702 = vmatpush2.bf16.msra.mxu0 0
        %2703 = vmatprep.subr.bf16.mxu0 0
        %2704 = vmatpush2.bf16.msra.mxu0 0
        %2705 = vmatprep.subr.bf16.mxu0 0
        %2706 = vmatpush2.bf16.msra.mxu0 0
        %2707 = vmatprep.subr.bf16.mxu0 0
        %2708 = vmatpush2.bf16.msra.mxu0 0
        %2709 = vmatprep.subr.bf16.mxu0 0
        %2710 = vmatpush2.bf16.msra.mxu0 0
        %2711 = vmatprep.mubr.bf16.mxu0 0
        %2712 = vmatmul.mubr.bf16.gmra.mxu0 %v2133
        %v2713 = vpop.f32.mrf.mxu0
        %v2714 = vadd.f32 0.0, %v2713
        %v2715 = vpop.f32.mrf.mxu0
        %v2716 = vpop.f32.mrf.mxu0
        %v2717 = vadd.f32 0.0, %v2716
        %v2718 = vpop.f32.mrf.mxu0
        %2719 = vmatprep.mubr.bf16.mxu0 0
        %2720 = vmatmul.mubr.bf16.gmra.mxu0 %v2134
        %v2721 = vpop.f32.mrf.mxu0
        %v2722 = vadd.f32 0.0, %v2721
        %v2723 = vpop.f32.mrf.mxu0
        %v2724 = vpop.f32.mrf.mxu0
        %v2725 = vadd.f32 0.0, %v2724
        %v2726 = vpop.f32.mrf.mxu0
        %2727 = vmatprep.mubr.bf16.mxu0 0
        %2728 = vmatmul.mubr.bf16.gmra.mxu0 %v2135
        %v2729 = vpop.f32.mrf.mxu0
        %v2730 = vadd.f32 0.0, %v2729
        %v2731 = vpop.f32.mrf.mxu0
        %v2732 = vpop.f32.mrf.mxu0
        %v2733 = vadd.f32 0.0, %v2732
        %v2734 = vpop.f32.mrf.mxu0
        %2735 = vmatprep.mubr.bf16.mxu0 0
        %2736 = vmatmul.mubr.bf16.gmra.mxu0 %v2136
        %v2737 = vpop.f32.mrf.mxu0
        %v2738 = vadd.f32 0.0, %v2737
        %v2739 = vpop.f32.mrf.mxu0
        %v2740 = vpop.f32.mrf.mxu0
        %v2741 = vadd.f32 0.0, %v2740
        %v2742 = vpop.f32.mrf.mxu0
        %2743 = vmatprep.mubr.bf16.mxu0 0
        %2744 = vmatmul.mubr.bf16.gmra.mxu0 %v2137
        %v2745 = vpop.f32.mrf.mxu0
        %v2746 = vadd.f32 0.0, %v2745
        %v2747 = vpop.f32.mrf.mxu0
        %v2748 = vpop.f32.mrf.mxu0
        %v2749 = vadd.f32 0.0, %v2748
        %v2750 = vpop.f32.mrf.mxu0
        %2751 = vmatprep.mubr.bf16.mxu0 0
        %2752 = vmatmul.mubr.bf16.gmra.mxu0 %v2138
        %v2753 = vpop.f32.mrf.mxu0
        %v2754 = vadd.f32 0.0, %v2753
        %v2755 = vpop.f32.mrf.mxu0
        %v2756 = vpop.f32.mrf.mxu0
        %v2757 = vadd.f32 0.0, %v2756
        %v2758 = vpop.f32.mrf.mxu0
        %2759 = vmatprep.mubr.bf16.mxu0 0
        %2760 = vmatmul.mubr.bf16.gmra.mxu0 %v2139
        %v2761 = vpop.f32.mrf.mxu0
        %v2762 = vadd.f32 0.0, %v2761
        %v2763 = vpop.f32.mrf.mxu0
        %v2764 = vpop.f32.mrf.mxu0
        %v2765 = vadd.f32 0.0, %v2764
        %v2766 = vpop.f32.mrf.mxu0
        %2767 = vmatprep.mubr.bf16.mxu0 0
        %2768 = vmatmul.mubr.bf16.gmra.mxu0 %v2140
        %v2769 = vpop.f32.mrf.mxu0
        %v2770 = vadd.f32 0.0, %v2769
        %v2771 = vpop.f32.mrf.mxu0
        %v2772 = vpop.f32.mrf.mxu0
        %v2773 = vadd.f32 0.0, %v2772
        %v2774 = vpop.f32.mrf.mxu0
        %2775 = vmatprep.mubr.bf16.mxu0 0
        %2776 = vmatmul.mubr.bf16.gmra.mxu0 %v2141
        %v2777 = vpop.f32.mrf.mxu0
        %v2778 = vadd.f32 0.0, %v2777
        %v2779 = vpop.f32.mrf.mxu0
        %v2780 = vpop.f32.mrf.mxu0
        %v2781 = vadd.f32 0.0, %v2780
        %v2782 = vpop.f32.mrf.mxu0
        %2783 = vmatprep.mubr.bf16.mxu0 0
        %2784 = vmatmul.mubr.bf16.gmra.mxu0 %v2142
        %v2785 = vpop.f32.mrf.mxu0
        %v2786 = vadd.f32 0.0, %v2785
        %v2787 = vpop.f32.mrf.mxu0
        %v2788 = vpop.f32.mrf.mxu0
        %v2789 = vadd.f32 0.0, %v2788
        %v2790 = vpop.f32.mrf.mxu0
        %2791 = vmatprep.mubr.bf16.mxu0 0
        %2792 = vmatmul.mubr.bf16.gmra.mxu0 %v2143
        %v2793 = vpop.f32.mrf.mxu0
        %v2794 = vadd.f32 0.0, %v2793
        %v2795 = vpop.f32.mrf.mxu0
        %v2796 = vpop.f32.mrf.mxu0
        %v2797 = vadd.f32 0.0, %v2796
        %v2798 = vpop.f32.mrf.mxu0
        %2799 = vmatprep.mubr.bf16.mxu0 0
        %2800 = vmatmul.mubr.bf16.gmra.mxu0 %v2144
        %v2801 = vpop.f32.mrf.mxu0
        %v2802 = vadd.f32 0.0, %v2801
        %v2803 = vpop.f32.mrf.mxu0
        %v2804 = vpop.f32.mrf.mxu0
        %v2805 = vadd.f32 0.0, %v2804
        %v2806 = vpop.f32.mrf.mxu0
        %2807 = vmatprep.mubr.bf16.mxu0 0
        %2808 = vmatmul.mubr.bf16.gmra.mxu0 %v2145
        %v2809 = vpop.f32.mrf.mxu0
        %v2810 = vadd.f32 0.0, %v2809
        %v2811 = vpop.f32.mrf.mxu0
        %v2812 = vpop.f32.mrf.mxu0
        %v2813 = vadd.f32 0.0, %v2812
        %v2814 = vpop.f32.mrf.mxu0
        %2815 = vmatprep.mubr.bf16.mxu0 0
        %2816 = vmatmul.mubr.bf16.gmra.mxu0 %v2146
        %v2817 = vpop.f32.mrf.mxu0
        %v2818 = vadd.f32 0.0, %v2817
        %v2819 = vpop.f32.mrf.mxu0
        %v2820 = vpop.f32.mrf.mxu0
        %v2821 = vadd.f32 0.0, %v2820
        %v2822 = vpop.f32.mrf.mxu0
        %2823 = vmatprep.mubr.bf16.mxu0 0
        %2824 = vmatmul.mubr.bf16.gmra.mxu0 %v2147
        %v2825 = vpop.f32.mrf.mxu0
        %v2826 = vadd.f32 0.0, %v2825
        %v2827 = vpop.f32.mrf.mxu0
        %v2828 = vpop.f32.mrf.mxu0
        %v2829 = vadd.f32 0.0, %v2828
        %v2830 = vpop.f32.mrf.mxu0
        %2831 = vmatprep.mubr.bf16.mxu0 0
        %2832 = vmatmul.mubr.bf16.gmra.mxu0 %v2148
        %v2833 = vpop.f32.mrf.mxu0
        %v2834 = vadd.f32 0.0, %v2833
        %v2835 = vpop.f32.mrf.mxu0
        %v2836 = vpop.f32.mrf.mxu0
        %v2837 = vadd.f32 0.0, %v2836
        %v2838 = vpop.f32.mrf.mxu0
        %2839 = vdwg.mxu0
        %v2840 = vadd.f32 %v2360, %v2523
        %v2841 = vadd.f32 %v2363, %v2527
        %v2842 = vadd.f32 %v2368, %v2533
        %v2843 = vadd.f32 %v2371, %v2537
        %v2844 = vadd.f32 %v2376, %v2543
        %v2845 = vadd.f32 %v2379, %v2547
        %v2846 = vadd.f32 %v2384, %v2553
        %v2847 = vadd.f32 %v2387, %v2557
        %v2848 = vadd.f32 %v2392, %v2563
        %v2849 = vadd.f32 %v2395, %v2567
        %v2850 = vadd.f32 %v2400, %v2573
        %v2851 = vadd.f32 %v2403, %v2577
        %v2852 = vadd.f32 %v2408, %v2583
        %v2853 = vadd.f32 %v2411, %v2587
        %v2854 = vadd.f32 %v2416, %v2593
        %v2855 = vadd.f32 %v2419, %v2597
        %v2856 = vadd.f32 %v2424, %v2603
        %v2857 = vadd.f32 %v2427, %v2607
        %v2858 = vadd.f32 %v2432, %v2613
        %v2859 = vadd.f32 %v2435, %v2617
        %v2860 = vadd.f32 %v2440, %v2623
        %v2861 = vadd.f32 %v2443, %v2627
        %v2862 = vadd.f32 %v2448, %v2633
        %v2863 = vadd.f32 %v2451, %v2637
        %v2864 = vadd.f32 %v2456, %v2643
        %v2865 = vadd.f32 %v2459, %v2647
        %v2866 = vadd.f32 %v2464, %v2653
        %v2867 = vadd.f32 %v2467, %v2657
        %v2868 = vadd.f32 %v2472, %v2663
        %v2869 = vadd.f32 %v2475, %v2667
        %v2870 = vadd.f32 %v2480, %v2673
        %v2871 = vadd.f32 %v2483, %v2677
        %v2872 = vadd.f32 %v2840, %v2714
        %v2873 = vadd.f32 %v2841, %v2717
        %v2874 = vadd.f32 %v2842, %v2722
        %v2875 = vadd.f32 %v2843, %v2725
        %v2876 = vadd.f32 %v2844, %v2730
        %v2877 = vadd.f32 %v2845, %v2733
        %v2878 = vadd.f32 %v2846, %v2738
        %v2879 = vadd.f32 %v2847, %v2741
        %v2880 = vadd.f32 %v2848, %v2746
        %v2881 = vadd.f32 %v2849, %v2749
        %v2882 = vadd.f32 %v2850, %v2754
        %v2883 = vadd.f32 %v2851, %v2757
        %v2884 = vadd.f32 %v2852, %v2762
        %v2885 = vadd.f32 %v2853, %v2765
        %v2886 = vadd.f32 %v2854, %v2770
        %v2887 = vadd.f32 %v2855, %v2773
        %v2888 = vadd.f32 %v2856, %v2778
        %v2889 = vadd.f32 %v2857, %v2781
        %v2890 = vadd.f32 %v2858, %v2786
        %v2891 = vadd.f32 %v2859, %v2789
        %v2892 = vadd.f32 %v2860, %v2794
        %v2893 = vadd.f32 %v2861, %v2797
        %v2894 = vadd.f32 %v2862, %v2802
        %v2895 = vadd.f32 %v2863, %v2805
        %v2896 = vadd.f32 %v2864, %v2810
        %v2897 = vadd.f32 %v2865, %v2813
        %v2898 = vadd.f32 %v2866, %v2818
        %v2899 = vadd.f32 %v2867, %v2821
        %v2900 = vadd.f32 %v2868, %v2826
        %v2901 = vadd.f32 %v2869, %v2829
        %v2902 = vadd.f32 %v2870, %v2834
        %v2903 = vadd.f32 %v2871, %v2837
        %v2904 = vxor.u32 %v2872, 2147483648
        %v2905 = vxor.u32 %v2873, 2147483648
        %v2906 = vxor.u32 %v2874, 2147483648
        %v2907 = vxor.u32 %v2875, 2147483648
        %v2908 = vxor.u32 %v2876, 2147483648
        %v2909 = vxor.u32 %v2877, 2147483648
        %v2910 = vxor.u32 %v2878, 2147483648
        %v2911 = vxor.u32 %v2879, 2147483648
        %v2912 = vxor.u32 %v2880, 2147483648
        %v2913 = vxor.u32 %v2881, 2147483648
        %v2914 = vxor.u32 %v2882, 2147483648
        %v2915 = vxor.u32 %v2883, 2147483648
        %v2916 = vxor.u32 %v2884, 2147483648
        %v2917 = vxor.u32 %v2885, 2147483648
        %v2918 = vxor.u32 %v2886, 2147483648
        %v2919 = vxor.u32 %v2887, 2147483648
        %v2920 = vxor.u32 %v2888, 2147483648
        %v2921 = vxor.u32 %v2889, 2147483648
        %v2922 = vxor.u32 %v2890, 2147483648
        %v2923 = vxor.u32 %v2891, 2147483648
        %v2924 = vxor.u32 %v2892, 2147483648
        %v2925 = vxor.u32 %v2893, 2147483648
        %v2926 = vxor.u32 %v2894, 2147483648
        %v2927 = vxor.u32 %v2895, 2147483648
        %v2928 = vxor.u32 %v2896, 2147483648
        %v2929 = vxor.u32 %v2897, 2147483648
        %v2930 = vxor.u32 %v2898, 2147483648
        %v2931 = vxor.u32 %v2899, 2147483648
        %v2932 = vxor.u32 %v2900, 2147483648
        %v2933 = vxor.u32 %v2901, 2147483648
        %v2934 = vxor.u32 %v2902, 2147483648
        %v2935 = vxor.u32 %v2903, 2147483648
        %v2936 = vmul.f32 %v2904, 1.442695
        %v2937 = vpow.pop %v2936
        %v2938 = vmul.f32 %v2905, 1.442695
        %v2939 = vpow.pop %v2938
        %v2940 = vmul.f32 %v2906, 1.442695
        %v2941 = vpow.pop %v2940
        %v2942 = vmul.f32 %v2907, 1.442695
        %v2943 = vpow.pop %v2942
        %v2944 = vmul.f32 %v2908, 1.442695
        %v2945 = vpow.pop %v2944
        %v2946 = vmul.f32 %v2909, 1.442695
        %v2947 = vpow.pop %v2946
        %v2948 = vmul.f32 %v2910, 1.442695
        %v2949 = vpow.pop %v2948
        %v2950 = vmul.f32 %v2911, 1.442695
        %v2951 = vpow.pop %v2950
        %v2952 = vmul.f32 %v2912, 1.442695
        %v2953 = vpow.pop %v2952
        %v2954 = vmul.f32 %v2913, 1.442695
        %v2955 = vpow.pop %v2954
        %v2956 = vmul.f32 %v2914, 1.442695
        %v2957 = vpow.pop %v2956
        %v2958 = vmul.f32 %v2915, 1.442695
        %v2959 = vpow.pop %v2958
        %v2960 = vmul.f32 %v2916, 1.442695
        %v2961 = vpow.pop %v2960
        %v2962 = vmul.f32 %v2917, 1.442695
        %v2963 = vpow.pop %v2962
        %v2964 = vmul.f32 %v2918, 1.442695
        %v2965 = vpow.pop %v2964
        %v2966 = vmul.f32 %v2919, 1.442695
        %v2967 = vpow.pop %v2966
        %v2968 = vmul.f32 %v2920, 1.442695
        %v2969 = vpow.pop %v2968
        %v2970 = vmul.f32 %v2921, 1.442695
        %v2971 = vpow.pop %v2970
        %v2972 = vmul.f32 %v2922, 1.442695
        %v2973 = vpow.pop %v2972
        %v2974 = vmul.f32 %v2923, 1.442695
        %v2975 = vpow.pop %v2974
        %v2976 = vmul.f32 %v2924, 1.442695
        %v2977 = vpow.pop %v2976
        %v2978 = vmul.f32 %v2925, 1.442695
        %v2979 = vpow.pop %v2978
        %v2980 = vmul.f32 %v2926, 1.442695
        %v2981 = vpow.pop %v2980
        %v2982 = vmul.f32 %v2927, 1.442695
        %v2983 = vpow.pop %v2982
        %v2984 = vmul.f32 %v2928, 1.442695
        %v2985 = vpow.pop %v2984
        %v2986 = vmul.f32 %v2929, 1.442695
        %v2987 = vpow.pop %v2986
        %v2988 = vmul.f32 %v2930, 1.442695
        %v2989 = vpow.pop %v2988
        %v2990 = vmul.f32 %v2931, 1.442695
        %v2991 = vpow.pop %v2990
        %v2992 = vmul.f32 %v2932, 1.442695
        %v2993 = vpow.pop %v2992
        %v2994 = vmul.f32 %v2933, 1.442695
        %v2995 = vpow.pop %v2994
        %v2996 = vmul.f32 %v2934, 1.442695
        %v2997 = vpow.pop %v2996
        %v2998 = vmul.f32 %v2935, 1.442695
        %v2999 = vpow.pop %v2998
        %v3000 = vadd.f32 %v2937, 1.0
        %v3001 = vadd.f32 %v2939, 1.0
        %v3002 = vadd.f32 %v2941, 1.0
        %v3003 = vadd.f32 %v2943, 1.0
        %v3004 = vadd.f32 %v2945, 1.0
        %v3005 = vadd.f32 %v2947, 1.0
        %v3006 = vadd.f32 %v2949, 1.0
        %v3007 = vadd.f32 %v2951, 1.0
        %v3008 = vadd.f32 %v2953, 1.0
        %v3009 = vadd.f32 %v2955, 1.0
        %v3010 = vadd.f32 %v2957, 1.0
        %v3011 = vadd.f32 %v2959, 1.0
        %v3012 = vadd.f32 %v2961, 1.0
        %v3013 = vadd.f32 %v2963, 1.0
        %v3014 = vadd.f32 %v2965, 1.0
        %v3015 = vadd.f32 %v2967, 1.0
        %v3016 = vadd.f32 %v2969, 1.0
        %v3017 = vadd.f32 %v2971, 1.0
        %v3018 = vadd.f32 %v2973, 1.0
        %v3019 = vadd.f32 %v2975, 1.0
        %v3020 = vadd.f32 %v2977, 1.0
        %v3021 = vadd.f32 %v2979, 1.0
        %v3022 = vadd.f32 %v2981, 1.0
        %v3023 = vadd.f32 %v2983, 1.0
        %v3024 = vadd.f32 %v2985, 1.0
        %v3025 = vadd.f32 %v2987, 1.0
        %v3026 = vadd.f32 %v2989, 1.0
        %v3027 = vadd.f32 %v2991, 1.0
        %v3028 = vadd.f32 %v2993, 1.0
        %v3029 = vadd.f32 %v2995, 1.0
        %v3030 = vadd.f32 %v2997, 1.0
        %v3031 = vadd.f32 %v2999, 1.0
        %v3032 = vrcp.pop %v3000
        %v3033 = vmul.f32 1.0, %v3032
        %v3034 = vrcp.pop %v3001
        %v3035 = vmul.f32 1.0, %v3034
        %v3036 = vrcp.pop %v3002
        %v3037 = vmul.f32 1.0, %v3036
        %v3038 = vrcp.pop %v3003
        %v3039 = vmul.f32 1.0, %v3038
        %v3040 = vrcp.pop %v3004
        %v3041 = vmul.f32 1.0, %v3040
        %v3042 = vrcp.pop %v3005
        %v3043 = vmul.f32 1.0, %v3042
        %v3044 = vrcp.pop %v3006
        %v3045 = vmul.f32 1.0, %v3044
        %v3046 = vrcp.pop %v3007
        %v3047 = vmul.f32 1.0, %v3046
        %v3048 = vrcp.pop %v3008
        %v3049 = vmul.f32 1.0, %v3048
        %v3050 = vrcp.pop %v3009
        %v3051 = vmul.f32 1.0, %v3050
        %v3052 = vrcp.pop %v3010
        %v3053 = vmul.f32 1.0, %v3052
        %v3054 = vrcp.pop %v3011
        %v3055 = vmul.f32 1.0, %v3054
        %v3056 = vrcp.pop %v3012
        %v3057 = vmul.f32 1.0, %v3056
        %v3058 = vrcp.pop %v3013
        %v3059 = vmul.f32 1.0, %v3058
        %v3060 = vrcp.pop %v3014
        %v3061 = vmul.f32 1.0, %v3060
        %v3062 = vrcp.pop %v3015
        %v3063 = vmul.f32 1.0, %v3062
        %v3064 = vrcp.pop %v3016
        %v3065 = vmul.f32 1.0, %v3064
        %v3066 = vrcp.pop %v3017
        %v3067 = vmul.f32 1.0, %v3066
        %v3068 = vrcp.pop %v3018
        %v3069 = vmul.f32 1.0, %v3068
        %v3070 = vrcp.pop %v3019
        %v3071 = vmul.f32 1.0, %v3070
        %v3072 = vrcp.pop %v3020
        %v3073 = vmul.f32 1.0, %v3072
        %v3074 = vrcp.pop %v3021
        %v3075 = vmul.f32 1.0, %v3074
        %v3076 = vrcp.pop %v3022
        %v3077 = vmul.f32 1.0, %v3076
        %v3078 = vrcp.pop %v3023
        %v3079 = vmul.f32 1.0, %v3078
        %v3080 = vrcp.pop %v3024
        %v3081 = vmul.f32 1.0, %v3080
        %v3082 = vrcp.pop %v3025
        %v3083 = vmul.f32 1.0, %v3082
        %v3084 = vrcp.pop %v3026
        %v3085 = vmul.f32 1.0, %v3084
        %v3086 = vrcp.pop %v3027
        %v3087 = vmul.f32 1.0, %v3086
        %v3088 = vrcp.pop %v3028
        %v3089 = vmul.f32 1.0, %v3088
        %v3090 = vrcp.pop %v3029
        %v3091 = vmul.f32 1.0, %v3090
        %v3092 = vrcp.pop %v3030
        %v3093 = vmul.f32 1.0, %v3092
        %v3094 = vrcp.pop %v3031
        %v3095 = vmul.f32 1.0, %v3094
        %v3096 = vmul.f32 %v3033, %v2521
        %v3097 = vmul.f32 %v3035, %v2525
        %v3098 = vmul.f32 %v3037, %v2531
        %v3099 = vmul.f32 %v3039, %v2535
        %v3100 = vmul.f32 %v3041, %v2541
        %v3101 = vmul.f32 %v3043, %v2545
        %v3102 = vmul.f32 %v3045, %v2551
        %v3103 = vmul.f32 %v3047, %v2555
        %v3104 = vmul.f32 %v3049, %v2561
        %v3105 = vmul.f32 %v3051, %v2565
        %v3106 = vmul.f32 %v3053, %v2571
        %v3107 = vmul.f32 %v3055, %v2575
        %v3108 = vmul.f32 %v3057, %v2581
        %v3109 = vmul.f32 %v3059, %v2585
        %v3110 = vmul.f32 %v3061, %v2591
        %v3111 = vmul.f32 %v3063, %v2595
        %v3112 = vmul.f32 %v3065, %v2601
        %v3113 = vmul.f32 %v3067, %v2605
        %v3114 = vmul.f32 %v3069, %v2611
        %v3115 = vmul.f32 %v3071, %v2615
        %v3116 = vmul.f32 %v3073, %v2621
        %v3117 = vmul.f32 %v3075, %v2625
        %v3118 = vmul.f32 %v3077, %v2631
        %v3119 = vmul.f32 %v3079, %v2635
        %v3120 = vmul.f32 %v3081, %v2641
        %v3121 = vmul.f32 %v3083, %v2645
        %v3122 = vmul.f32 %v3085, %v2651
        %v3123 = vmul.f32 %v3087, %v2655
        %v3124 = vmul.f32 %v3089, %v2661
        %v3125 = vmul.f32 %v3091, %v2665
        %v3126 = vmul.f32 %v3093, %v2671
        %v3127 = vmul.f32 %v3095, %v2675
        %v3128 = vpack.c.bf16 %v3097, %v3096
        %v3129 = vpack.c.bf16 %v3035, %v3033
        %v3130 = vpack.c.bf16 %v3099, %v3098
        %v3131 = vpack.c.bf16 %v3039, %v3037
        %v3132 = vpack.c.bf16 %v3101, %v3100
        %v3133 = vpack.c.bf16 %v3043, %v3041
        %v3134 = vpack.c.bf16 %v3103, %v3102
        %v3135 = vpack.c.bf16 %v3047, %v3045
        %v3136 = vpack.c.bf16 %v3105, %v3104
        %v3137 = vpack.c.bf16 %v3051, %v3049
        %v3138 = vpack.c.bf16 %v3107, %v3106
        %v3139 = vpack.c.bf16 %v3055, %v3053
        %v3140 = vpack.c.bf16 %v3109, %v3108
        %v3141 = vpack.c.bf16 %v3059, %v3057
        %v3142 = vpack.c.bf16 %v3111, %v3110
        %v3143 = vpack.c.bf16 %v3063, %v3061
        %v3144 = vpack.c.bf16 %v3113, %v3112
        %v3145 = vpack.c.bf16 %v3067, %v3065
        %v3146 = vpack.c.bf16 %v3115, %v3114
        %v3147 = vpack.c.bf16 %v3071, %v3069
        %v3148 = vpack.c.bf16 %v3117, %v3116
        %v3149 = vpack.c.bf16 %v3075, %v3073
        %v3150 = vpack.c.bf16 %v3119, %v3118
        %v3151 = vpack.c.bf16 %v3079, %v3077
        %v3152 = vpack.c.bf16 %v3121, %v3120
        %v3153 = vpack.c.bf16 %v3083, %v3081
        %v3154 = vpack.c.bf16 %v3123, %v3122
        %v3155 = vpack.c.bf16 %v3087, %v3085
        %v3156 = vpack.c.bf16 %v3125, %v3124
        %v3157 = vpack.c.bf16 %v3091, %v3089
        %v3158 = vpack.c.bf16 %v3127, %v3126
        %v3159 = vpack.c.bf16 %v3095, %v3093
        %3160 = vmatprep.subr.bf16.mxu0 %v3143
        %3161 = vmatpush1.bf16.msra.mxu0 %v3142
        %3162 = vmatprep.subr.bf16.mxu0 %v3141
        %3163 = vmatpush1.bf16.msra.mxu0 %v3140
        %3164 = vmatprep.subr.bf16.mxu0 %v3139
        %3165 = vmatpush1.bf16.msra.mxu0 %v3138
        %3166 = vmatprep.subr.bf16.mxu0 %v3137
        %3167 = vmatpush1.bf16.msra.mxu0 %v3136
        %3168 = vmatprep.subr.bf16.mxu0 %v3135
        %3169 = vmatpush1.bf16.msra.mxu0 %v3134
        %3170 = vmatprep.subr.bf16.mxu0 %v3133
        %3171 = vmatpush1.bf16.msra.mxu0 %v3132
        %3172 = vmatprep.subr.bf16.mxu0 %v3131
        %3173 = vmatpush1.bf16.msra.mxu0 %v3130
        %3174 = vmatprep.subr.bf16.mxu0 %v3129
        %3175 = vmatpush1.bf16.msra.mxu0 %v3128
        %3176 = vmatprep.subr.bf16.mxu0 %v3159
        %3177 = vmatpush2.bf16.msra.mxu0 %v3158
        %3178 = vmatprep.subr.bf16.mxu0 %v3157
        %3179 = vmatpush2.bf16.msra.mxu0 %v3156
        %3180 = vmatprep.subr.bf16.mxu0 %v3155
        %3181 = vmatpush2.bf16.msra.mxu0 %v3154
        %3182 = vmatprep.subr.bf16.mxu0 %v3153
        %3183 = vmatpush2.bf16.msra.mxu0 %v3152
        %3184 = vmatprep.subr.bf16.mxu0 %v3151
        %3185 = vmatpush2.bf16.msra.mxu0 %v3150
        %3186 = vmatprep.subr.bf16.mxu0 %v3149
        %3187 = vmatpush2.bf16.msra.mxu0 %v3148
        %3188 = vmatprep.subr.bf16.mxu0 %v3147
        %3189 = vmatpush2.bf16.msra.mxu0 %v3146
        %3190 = vmatprep.subr.bf16.mxu0 %v3145
        %3191 = vmatpush2.bf16.msra.mxu0 %v3144
        %3192 = vmatprep.mubr.bf16.mxu0 %v2223
        %3193 = vmatmul.mubr.bf16.gmra.mxu0 %v2222
        %v3194 = vpop.f32.mrf.mxu0
        %v3195 = vadd.f32 0.0, %v3194
        %v3196 = vpop.f32.mrf.mxu0
        %v3197 = vadd.f32 0.0, %v3196
        %v3198 = vpop.f32.mrf.mxu0
        %v3199 = vadd.f32 0.0, %v3198
        %v3200 = vpop.f32.mrf.mxu0
        %v3201 = vadd.f32 0.0, %v3200
        %3202 = vmatprep.mubr.bf16.mxu0 %v2225
        %3203 = vmatmul.mubr.bf16.gmra.mxu0 %v2224
        %v3204 = vpop.f32.mrf.mxu0
        %v3205 = vadd.f32 0.0, %v3204
        %v3206 = vpop.f32.mrf.mxu0
        %v3207 = vadd.f32 0.0, %v3206
        %v3208 = vpop.f32.mrf.mxu0
        %v3209 = vadd.f32 0.0, %v3208
        %v3210 = vpop.f32.mrf.mxu0
        %v3211 = vadd.f32 0.0, %v3210
        %3212 = vmatprep.mubr.bf16.mxu0 %v2227
        %3213 = vmatmul.mubr.bf16.gmra.mxu0 %v2226
        %v3214 = vpop.f32.mrf.mxu0
        %v3215 = vadd.f32 0.0, %v3214
        %v3216 = vpop.f32.mrf.mxu0
        %v3217 = vadd.f32 0.0, %v3216
        %v3218 = vpop.f32.mrf.mxu0
        %v3219 = vadd.f32 0.0, %v3218
        %v3220 = vpop.f32.mrf.mxu0
        %v3221 = vadd.f32 0.0, %v3220
        %3222 = vmatprep.mubr.bf16.mxu0 %v2229
        %3223 = vmatmul.mubr.bf16.gmra.mxu0 %v2228
        %v3224 = vpop.f32.mrf.mxu0
        %v3225 = vadd.f32 0.0, %v3224
        %v3226 = vpop.f32.mrf.mxu0
        %v3227 = vadd.f32 0.0, %v3226
        %v3228 = vpop.f32.mrf.mxu0
        %v3229 = vadd.f32 0.0, %v3228
        %v3230 = vpop.f32.mrf.mxu0
        %v3231 = vadd.f32 0.0, %v3230
        %3232 = vmatprep.mubr.bf16.mxu0 %v2231
        %3233 = vmatmul.mubr.bf16.gmra.mxu0 %v2230
        %v3234 = vpop.f32.mrf.mxu0
        %v3235 = vadd.f32 0.0, %v3234
        %v3236 = vpop.f32.mrf.mxu0
        %v3237 = vadd.f32 0.0, %v3236
        %v3238 = vpop.f32.mrf.mxu0
        %v3239 = vadd.f32 0.0, %v3238
        %v3240 = vpop.f32.mrf.mxu0
        %v3241 = vadd.f32 0.0, %v3240
        %3242 = vmatprep.mubr.bf16.mxu0 %v2233
        %3243 = vmatmul.mubr.bf16.gmra.mxu0 %v2232
        %v3244 = vpop.f32.mrf.mxu0
        %v3245 = vadd.f32 0.0, %v3244
        %v3246 = vpop.f32.mrf.mxu0
        %v3247 = vadd.f32 0.0, %v3246
        %v3248 = vpop.f32.mrf.mxu0
        %v3249 = vadd.f32 0.0, %v3248
        %v3250 = vpop.f32.mrf.mxu0
        %v3251 = vadd.f32 0.0, %v3250
        %3252 = vmatprep.mubr.bf16.mxu0 %v2235
        %3253 = vmatmul.mubr.bf16.gmra.mxu0 %v2234
        %v3254 = vpop.f32.mrf.mxu0
        %v3255 = vadd.f32 0.0, %v3254
        %v3256 = vpop.f32.mrf.mxu0
        %v3257 = vadd.f32 0.0, %v3256
        %v3258 = vpop.f32.mrf.mxu0
        %v3259 = vadd.f32 0.0, %v3258
        %v3260 = vpop.f32.mrf.mxu0
        %v3261 = vadd.f32 0.0, %v3260
        %3262 = vmatprep.mubr.bf16.mxu0 %v2237
        %3263 = vmatmul.mubr.bf16.gmra.mxu0 %v2236
        %v3264 = vpop.f32.mrf.mxu0
        %v3265 = vadd.f32 0.0, %v3264
        %v3266 = vpop.f32.mrf.mxu0
        %v3267 = vadd.f32 0.0, %v3266
        %v3268 = vpop.f32.mrf.mxu0
        %v3269 = vadd.f32 0.0, %v3268
        %v3270 = vpop.f32.mrf.mxu0
        %v3271 = vadd.f32 0.0, %v3270
        %3272 = vdwg.mxu0
        %v3273 = vld [vmem:[%s703] sm:$0x1]
        %v3274 = vlaneseq
        %v3275 = vshrl.u32 %v3274, 7
        %v3276 = vsub.s32 0, %v3275
        %v3277 = vrot.slane %v3273, %v3276
        %v3278 = vmul.f32 %v2872, %v3277
        %v3279 = vmul.f32 %v2873, %v3277
        %v3280 = vmul.f32 %v2874, %v3277
        %v3281 = vmul.f32 %v2875, %v3277
        %v3282 = vmul.f32 %v2876, %v3277
        %v3283 = vmul.f32 %v2877, %v3277
        %v3284 = vmul.f32 %v2878, %v3277
        %v3285 = vmul.f32 %v2879, %v3277
        %v3286 = vmul.f32 %v2880, %v3277
        %v3287 = vmul.f32 %v2881, %v3277
        %v3288 = vmul.f32 %v2882, %v3277
        %v3289 = vmul.f32 %v2883, %v3277
        %v3290 = vmul.f32 %v2884, %v3277
        %v3291 = vmul.f32 %v2885, %v3277
        %v3292 = vmul.f32 %v2886, %v3277
        %v3293 = vmul.f32 %v2887, %v3277
        %v3294 = vmul.f32 %v2888, %v3277
        %v3295 = vmul.f32 %v2889, %v3277
        %v3296 = vmul.f32 %v2890, %v3277
        %v3297 = vmul.f32 %v2891, %v3277
        %v3298 = vmul.f32 %v2892, %v3277
        %v3299 = vmul.f32 %v2893, %v3277
        %v3300 = vmul.f32 %v2894, %v3277
        %v3301 = vmul.f32 %v2895, %v3277
        %v3302 = vmul.f32 %v2896, %v3277
        %v3303 = vmul.f32 %v2897, %v3277
        %v3304 = vmul.f32 %v2898, %v3277
        %v3305 = vmul.f32 %v2899, %v3277
        %v3306 = vmul.f32 %v2900, %v3277
        %v3307 = vmul.f32 %v2901, %v3277
        %v3308 = vmul.f32 %v2902, %v3277
        %v3309 = vmul.f32 %v2903, %v3277
        %v3310 = vld [vmem:[%s703 + $0x1] sm:$0x1]
        %v3311 = vlaneseq
        %v3312 = vshrl.u32 %v3311, 7
        %v3313 = vsub.s32 0, %v3312
        %v3314 = vrot.slane %v3310, %v3313
        %v3315 = vadd.f32 %v3278, %v3314
        %v3316 = vadd.f32 %v3279, %v3314
        %v3317 = vadd.f32 %v3280, %v3314
        %v3318 = vadd.f32 %v3281, %v3314
        %v3319 = vadd.f32 %v3282, %v3314
        %v3320 = vadd.f32 %v3283, %v3314
        %v3321 = vadd.f32 %v3284, %v3314
        %v3322 = vadd.f32 %v3285, %v3314
        %v3323 = vadd.f32 %v3286, %v3314
        %v3324 = vadd.f32 %v3287, %v3314
        %v3325 = vadd.f32 %v3288, %v3314
        %v3326 = vadd.f32 %v3289, %v3314
        %v3327 = vadd.f32 %v3290, %v3314
        %v3328 = vadd.f32 %v3291, %v3314
        %v3329 = vadd.f32 %v3292, %v3314
        %v3330 = vadd.f32 %v3293, %v3314
        %v3331 = vadd.f32 %v3294, %v3314
        %v3332 = vadd.f32 %v3295, %v3314
        %v3333 = vadd.f32 %v3296, %v3314
        %v3334 = vadd.f32 %v3297, %v3314
        %v3335 = vadd.f32 %v3298, %v3314
        %v3336 = vadd.f32 %v3299, %v3314
        %v3337 = vadd.f32 %v3300, %v3314
        %v3338 = vadd.f32 %v3301, %v3314
        %v3339 = vadd.f32 %v3302, %v3314
        %v3340 = vadd.f32 %v3303, %v3314
        %v3341 = vadd.f32 %v3304, %v3314
        %v3342 = vadd.f32 %v3305, %v3314
        %v3343 = vadd.f32 %v3306, %v3314
        %v3344 = vadd.f32 %v3307, %v3314
        %v3345 = vadd.f32 %v3308, %v3314
        %v3346 = vadd.f32 %v3309, %v3314
        %v3347 = vmax.f32 %v3315, 0.0
        %v3348 = vmax.f32 %v3316, 0.0
        %v3349 = vmax.f32 %v3317, 0.0
        %v3350 = vmax.f32 %v3318, 0.0
        %v3351 = vmax.f32 %v3319, 0.0
        %v3352 = vmax.f32 %v3320, 0.0
        %v3353 = vmax.f32 %v3321, 0.0
        %v3354 = vmax.f32 %v3322, 0.0
        %v3355 = vmax.f32 %v3323, 0.0
        %v3356 = vmax.f32 %v3324, 0.0
        %v3357 = vmax.f32 %v3325, 0.0
        %v3358 = vmax.f32 %v3326, 0.0
        %v3359 = vmax.f32 %v3327, 0.0
        %v3360 = vmax.f32 %v3328, 0.0
        %v3361 = vmax.f32 %v3329, 0.0
        %v3362 = vmax.f32 %v3330, 0.0
        %v3363 = vmax.f32 %v3331, 0.0
        %v3364 = vmax.f32 %v3332, 0.0
        %v3365 = vmax.f32 %v3333, 0.0
        %v3366 = vmax.f32 %v3334, 0.0
        %v3367 = vmax.f32 %v3335, 0.0
        %v3368 = vmax.f32 %v3336, 0.0
        %v3369 = vmax.f32 %v3337, 0.0
        %v3370 = vmax.f32 %v3338, 0.0
        %v3371 = vmax.f32 %v3339, 0.0
        %v3372 = vmax.f32 %v3340, 0.0
        %v3373 = vmax.f32 %v3341, 0.0
        %v3374 = vmax.f32 %v3342, 0.0
        %v3375 = vmax.f32 %v3343, 0.0
        %v3376 = vmax.f32 %v3344, 0.0
        %v3377 = vmax.f32 %v3345, 0.0
        %v3378 = vmax.f32 %v3346, 0.0
        %v3379 = vadd.f32 %v1701, %v3347
        %v3380 = vadd.f32 %v1702, %v3348
        %v3381 = vadd.f32 %v1703, %v3349
        %v3382 = vadd.f32 %v1704, %v3350
        %v3383 = vadd.f32 %v1705, %v3351
        %v3384 = vadd.f32 %v1706, %v3352
        %v3385 = vadd.f32 %v1707, %v3353
        %v3386 = vadd.f32 %v1708, %v3354
        %v3387 = vadd.f32 %v1709, %v3355
        %v3388 = vadd.f32 %v1710, %v3356
        %v3389 = vadd.f32 %v1711, %v3357
        %v3390 = vadd.f32 %v1712, %v3358
        %v3391 = vadd.f32 %v1713, %v3359
        %v3392 = vadd.f32 %v1714, %v3360
        %v3393 = vadd.f32 %v1715, %v3361
        %v3394 = vadd.f32 %v1716, %v3362
        %v3395 = vadd.f32 %v1717, %v3363
        %v3396 = vadd.f32 %v1718, %v3364
        %v3397 = vadd.f32 %v1719, %v3365
        %v3398 = vadd.f32 %v1720, %v3366
        %v3399 = vadd.f32 %v1721, %v3367
        %v3400 = vadd.f32 %v1722, %v3368
        %v3401 = vadd.f32 %v1723, %v3369
        %v3402 = vadd.f32 %v1724, %v3370
        %v3403 = vadd.f32 %v1725, %v3371
        %v3404 = vadd.f32 %v1726, %v3372
        %v3405 = vadd.f32 %v1727, %v3373
        %v3406 = vadd.f32 %v1728, %v3374
        %v3407 = vadd.f32 %v1729, %v3375
        %v3408 = vadd.f32 %v1730, %v3376
        %v3409 = vadd.f32 %v1731, %v3377
        %v3410 = vadd.f32 %v1732, %v3378
        %3411 = vst [vmem:[#allocation3] sm:$0xff] %v3379
        %3412 = vst [vmem:[#allocation3 + $0x8] sm:$0xff] %v3380
        %3413 = vst [vmem:[#allocation3 + $0x10] sm:$0xff] %v3381
        %3414 = vst [vmem:[#allocation3 + $0x18] sm:$0xff] %v3382
        %3415 = vst [vmem:[#allocation3 + $0x20] sm:$0xff] %v3383
        %3416 = vst [vmem:[#allocation3 + $0x28] sm:$0xff] %v3384
        %3417 = vst [vmem:[#allocation3 + $0x30] sm:$0xff] %v3385
        %3418 = vst [vmem:[#allocation3 + $0x38] sm:$0xff] %v3386
        %3419 = vst [vmem:[#allocation3 + $0x40] sm:$0xff] %v3387
        %3420 = vst [vmem:[#allocation3 + $0x48] sm:$0xff] %v3388
        %3421 = vst [vmem:[#allocation3 + $0x50] sm:$0xff] %v3389
        %3422 = vst [vmem:[#allocation3 + $0x58] sm:$0xff] %v3390
        %3423 = vst [vmem:[#allocation3 + $0x60] sm:$0xff] %v3391
        %3424 = vst [vmem:[#allocation3 + $0x68] sm:$0xff] %v3392
        %3425 = vst [vmem:[#allocation3 + $0x70] sm:$0xff] %v3393
        %3426 = vst [vmem:[#allocation3 + $0x78] sm:$0xff] %v3394
        %3427 = vst [vmem:[#allocation3 + $0x80] sm:$0xff] %v3395
        %3428 = vst [vmem:[#allocation3 + $0x88] sm:$0xff] %v3396
        %3429 = vst [vmem:[#allocation3 + $0x90] sm:$0xff] %v3397
        %3430 = vst [vmem:[#allocation3 + $0x98] sm:$0xff] %v3398
        %3431 = vst [vmem:[#allocation3 + $0xa0] sm:$0xff] %v3399
        %3432 = vst [vmem:[#allocation3 + $0xa8] sm:$0xff] %v3400
        %3433 = vst [vmem:[#allocation3 + $0xb0] sm:$0xff] %v3401
        %3434 = vst [vmem:[#allocation3 + $0xb8] sm:$0xff] %v3402
        %3435 = vst [vmem:[#allocation3 + $0xc0] sm:$0xff] %v3403
        %3436 = vst [vmem:[#allocation3 + $0xc8] sm:$0xff] %v3404
        %3437 = vst [vmem:[#allocation3 + $0xd0] sm:$0xff] %v3405
        %3438 = vst [vmem:[#allocation3 + $0xd8] sm:$0xff] %v3406
        %3439 = vst [vmem:[#allocation3 + $0xe0] sm:$0xff] %v3407
        %3440 = vst [vmem:[#allocation3 + $0xe8] sm:$0xff] %v3408
        %3441 = vst [vmem:[#allocation3 + $0xf0] sm:$0xff] %v3409
        %3442 = vst [vmem:[#allocation3 + $0xf8] sm:$0xff] %v3410
        %v3443 = vadd.f32 %v3197, 1e-06
        %v3444 = vadd.f32 %v3201, 1e-06
        %v3445 = vadd.f32 %v3207, 1e-06
        %v3446 = vadd.f32 %v3211, 1e-06
        %v3447 = vadd.f32 %v3217, 1e-06
        %v3448 = vadd.f32 %v3221, 1e-06
        %v3449 = vadd.f32 %v3227, 1e-06
        %v3450 = vadd.f32 %v3231, 1e-06
        %v3451 = vadd.f32 %v3237, 1e-06
        %v3452 = vadd.f32 %v3241, 1e-06
        %v3453 = vadd.f32 %v3247, 1e-06
        %v3454 = vadd.f32 %v3251, 1e-06
        %v3455 = vadd.f32 %v3257, 1e-06
        %v3456 = vadd.f32 %v3261, 1e-06
        %v3457 = vadd.f32 %v3267, 1e-06
        %v3458 = vadd.f32 %v3271, 1e-06
        %v3459 = vrcp.pop %v3443
        %v3460 = vrcp.pop %v3444
        %v3461 = vrcp.pop %v3445
        %v3462 = vrcp.pop %v3446
        %v3463 = vrcp.pop %v3447
        %v3464 = vrcp.pop %v3448
        %v3465 = vrcp.pop %v3449
        %v3466 = vrcp.pop %v3450
        %v3467 = vrcp.pop %v3451
        %v3468 = vrcp.pop %v3452
        %v3469 = vrcp.pop %v3453
        %v3470 = vrcp.pop %v3454
        %v3471 = vrcp.pop %v3455
        %v3472 = vrcp.pop %v3456
        %v3473 = vrcp.pop %v3457
        %v3474 = vrcp.pop %v3458
        %v3475 = vmul.f32 %v3195, %v3459
        %v3476 = vmul.f32 %v3199, %v3460
        %v3477 = vmul.f32 %v3205, %v3461
        %v3478 = vmul.f32 %v3209, %v3462
        %v3479 = vmul.f32 %v3215, %v3463
        %v3480 = vmul.f32 %v3219, %v3464
        %v3481 = vmul.f32 %v3225, %v3465
        %v3482 = vmul.f32 %v3229, %v3466
        %v3483 = vmul.f32 %v3235, %v3467
        %v3484 = vmul.f32 %v3239, %v3468
        %v3485 = vmul.f32 %v3245, %v3469
        %v3486 = vmul.f32 %v3249, %v3470
        %v3487 = vmul.f32 %v3255, %v3471
        %v3488 = vmul.f32 %v3259, %v3472
        %v3489 = vmul.f32 %v3265, %v3473
        %v3490 = vmul.f32 %v3269, %v3474
        %v3491 = vadd.f32 %v1467, %v3475
        %v3492 = vadd.f32 %v1471, %v3476
        %v3493 = vadd.f32 %v1477, %v3477
        %v3494 = vadd.f32 %v1481, %v3478
        %v3495 = vadd.f32 %v1487, %v3479
        %v3496 = vadd.f32 %v1491, %v3480
        %v3497 = vadd.f32 %v1497, %v3481
        %v3498 = vadd.f32 %v1501, %v3482
        %v3499 = vadd.f32 %v1507, %v3483
        %v3500 = vadd.f32 %v1511, %v3484
        %v3501 = vadd.f32 %v1517, %v3485
        %v3502 = vadd.f32 %v1521, %v3486
        %v3503 = vadd.f32 %v1527, %v3487
        %v3504 = vadd.f32 %v1531, %v3488
        %v3505 = vadd.f32 %v1537, %v3489
        %v3506 = vadd.f32 %v1541, %v3490
        %v3507 = vld [vmem:[%s699] sm:$0x1]
        %v3508 = vlaneseq
        %v3509 = vshrl.u32 %v3508, 7
        %v3510 = vsub.s32 0, %v3509
        %v3511 = vrot.slane %v3507, %v3510
        %v3512 = vmul.f32 %v3491, %v3511
        %v3513 = vmul.f32 %v3492, %v3511
        %v3514 = vmul.f32 %v3493, %v3511
        %v3515 = vmul.f32 %v3494, %v3511
        %v3516 = vmul.f32 %v3495, %v3511
        %v3517 = vmul.f32 %v3496, %v3511
        %v3518 = vmul.f32 %v3497, %v3511
        %v3519 = vmul.f32 %v3498, %v3511
        %v3520 = vmul.f32 %v3499, %v3511
        %v3521 = vmul.f32 %v3500, %v3511
        %v3522 = vmul.f32 %v3501, %v3511
        %v3523 = vmul.f32 %v3502, %v3511
        %v3524 = vmul.f32 %v3503, %v3511
        %v3525 = vmul.f32 %v3504, %v3511
        %v3526 = vmul.f32 %v3505, %v3511
        %v3527 = vmul.f32 %v3506, %v3511
        %v3528 = vld [vmem:[%s699 + $0x1] sm:$0x1]
        %v3529 = vlaneseq
        %v3530 = vshrl.u32 %v3529, 7
        %v3531 = vsub.s32 0, %v3530
        %v3532 = vrot.slane %v3528, %v3531
        %v3533 = vadd.f32 %v3512, %v3532
        %v3534 = vadd.f32 %v3513, %v3532
        %v3535 = vadd.f32 %v3514, %v3532
        %v3536 = vadd.f32 %v3515, %v3532
        %v3537 = vadd.f32 %v3516, %v3532
        %v3538 = vadd.f32 %v3517, %v3532
        %v3539 = vadd.f32 %v3518, %v3532
        %v3540 = vadd.f32 %v3519, %v3532
        %v3541 = vadd.f32 %v3520, %v3532
        %v3542 = vadd.f32 %v3521, %v3532
        %v3543 = vadd.f32 %v3522, %v3532
        %v3544 = vadd.f32 %v3523, %v3532
        %v3545 = vadd.f32 %v3524, %v3532
        %v3546 = vadd.f32 %v3525, %v3532
        %v3547 = vadd.f32 %v3526, %v3532
        %v3548 = vadd.f32 %v3527, %v3532
        %v3549 = vmax.f32 %v3533, 0.0
        %v3550 = vmax.f32 %v3534, 0.0
        %v3551 = vmax.f32 %v3535, 0.0
        %v3552 = vmax.f32 %v3536, 0.0
        %v3553 = vmax.f32 %v3537, 0.0
        %v3554 = vmax.f32 %v3538, 0.0
        %v3555 = vmax.f32 %v3539, 0.0
        %v3556 = vmax.f32 %v3540, 0.0
        %v3557 = vmax.f32 %v3541, 0.0
        %v3558 = vmax.f32 %v3542, 0.0
        %v3559 = vmax.f32 %v3543, 0.0
        %v3560 = vmax.f32 %v3544, 0.0
        %v3561 = vmax.f32 %v3545, 0.0
        %v3562 = vmax.f32 %v3546, 0.0
        %v3563 = vmax.f32 %v3547, 0.0
        %v3564 = vmax.f32 %v3548, 0.0
        %v3565 = vadd.f32 %v1194, %v3549
        %v3566 = vadd.f32 %v1195, %v3550
        %v3567 = vadd.f32 %v1196, %v3551
        %v3568 = vadd.f32 %v1197, %v3552
        %v3569 = vadd.f32 %v1198, %v3553
        %v3570 = vadd.f32 %v1199, %v3554
        %v3571 = vadd.f32 %v1200, %v3555
        %v3572 = vadd.f32 %v1201, %v3556
        %v3573 = vadd.f32 %v1202, %v3557
        %v3574 = vadd.f32 %v1203, %v3558
        %v3575 = vadd.f32 %v1204, %v3559
        %v3576 = vadd.f32 %v1205, %v3560
        %v3577 = vadd.f32 %v1206, %v3561
        %v3578 = vadd.f32 %v1207, %v3562
        %v3579 = vadd.f32 %v1208, %v3563
        %v3580 = vadd.f32 %v1209, %v3564
        %3581 = vst [vmem:[#allocation2] sm:$0xff] %v3565
        %3582 = vst [vmem:[#allocation2 + $0x8] sm:$0xff] %v3566
        %3583 = vst [vmem:[#allocation2 + $0x10] sm:$0xff] %v3567
        %3584 = vst [vmem:[#allocation2 + $0x18] sm:$0xff] %v3568
        %3585 = vst [vmem:[#allocation2 + $0x20] sm:$0xff] %v3569
        %3586 = vst [vmem:[#allocation2 + $0x28] sm:$0xff] %v3570
        %3587 = vst [vmem:[#allocation2 + $0x30] sm:$0xff] %v3571
        %3588 = vst [vmem:[#allocation2 + $0x38] sm:$0xff] %v3572
        %3589 = vst [vmem:[#allocation2 + $0x40] sm:$0xff] %v3573
        %3590 = vst [vmem:[#allocation2 + $0x48] sm:$0xff] %v3574
        %3591 = vst [vmem:[#allocation2 + $0x50] sm:$0xff] %v3575
        %3592 = vst [vmem:[#allocation2 + $0x58] sm:$0xff] %v3576
        %3593 = vst [vmem:[#allocation2 + $0x60] sm:$0xff] %v3577
        %3594 = vst [vmem:[#allocation2 + $0x68] sm:$0xff] %v3578
        %3595 = vst [vmem:[#allocation2 + $0x70] sm:$0xff] %v3579
        %3596 = vst [vmem:[#allocation2 + $0x78] sm:$0xff] %v3580
        %v3597 = vpack.c.bf16 %v3566, %v3565
        %v3598 = vpack.c.bf16 %v3568, %v3567
        %v3599 = vpack.c.bf16 %v3570, %v3569
        %v3600 = vpack.c.bf16 %v3572, %v3571
        %v3601 = vpack.c.bf16 %v3574, %v3573
        %v3602 = vpack.c.bf16 %v3576, %v3575
        %v3603 = vpack.c.bf16 %v3578, %v3577
        %v3604 = vpack.c.bf16 %v3580, %v3579
        %v3613 = vunpack.c.l.b16 %v3597
        %v3614 = vunpack.c.h.b16 %v3597
        %v3615 = vunpack.c.l.b16 %v3598
        %v3616 = vunpack.c.h.b16 %v3598
        %v3617 = vunpack.c.l.b16 %v3599
        %v3618 = vunpack.c.h.b16 %v3599
        %v3619 = vunpack.c.l.b16 %v3600
        %v3620 = vunpack.c.h.b16 %v3600
        %v3621 = vunpack.c.l.b16 %v3601
        %v3622 = vunpack.c.h.b16 %v3601
        %v3623 = vunpack.c.l.b16 %v3602
        %v3624 = vunpack.c.h.b16 %v3602
        %v3625 = vunpack.c.l.b16 %v3603
        %v3626 = vunpack.c.h.b16 %v3603
        %v3627 = vunpack.c.l.b16 %v3604
        %v3628 = vunpack.c.h.b16 %v3604
        %v3629 = vpack.c.b16 %v3613, %v3613
        %v3630 = vpack.c.b16 %v3614, %v3614
        %v3631 = vpack.c.b16 %v3615, %v3615
        %v3632 = vpack.c.b16 %v3616, %v3616
        %v3633 = vpack.c.b16 %v3617, %v3617
        %v3634 = vpack.c.b16 %v3618, %v3618
        %v3635 = vpack.c.b16 %v3619, %v3619
        %v3636 = vpack.c.b16 %v3620, %v3620
        %v3637 = vpack.c.b16 %v3621, %v3621
        %v3638 = vpack.c.b16 %v3622, %v3622
        %v3639 = vpack.c.b16 %v3623, %v3623
        %v3640 = vpack.c.b16 %v3624, %v3624
        %v3641 = vpack.c.b16 %v3625, %v3625
        %v3642 = vpack.c.b16 %v3626, %v3626
        %v3643 = vpack.c.b16 %v3627, %v3627
        %v3644 = vpack.c.b16 %v3628, %v3628
        %3661 = vst [vmem:[#allocation7] sm:$0xf] %v3629
        %3662 = vst [vmem:[#allocation7 + $0x4] sm:$0xf] %v3630
        %3663 = vst [vmem:[#allocation7 + $0x8] sm:$0xf] %v3631
        %3664 = vst [vmem:[#allocation7 + $0xc] sm:$0xf] %v3632
        %3665 = vst [vmem:[#allocation7 + $0x10] sm:$0xf] %v3633
        %3666 = vst [vmem:[#allocation7 + $0x14] sm:$0xf] %v3634
        %3667 = vst [vmem:[#allocation7 + $0x18] sm:$0xf] %v3635
        %3668 = vst [vmem:[#allocation7 + $0x1c] sm:$0xf] %v3636
        %3669 = vst [vmem:[#allocation7 + $0x20] sm:$0xf] %v3637
        %3670 = vst [vmem:[#allocation7 + $0x24] sm:$0xf] %v3638
        %3671 = vst [vmem:[#allocation7 + $0x28] sm:$0xf] %v3639
        %3672 = vst [vmem:[#allocation7 + $0x2c] sm:$0xf] %v3640
        %3673 = vst [vmem:[#allocation7 + $0x30] sm:$0xf] %v3641
        %3674 = vst [vmem:[#allocation7 + $0x34] sm:$0xf] %v3642
        %3675 = vst [vmem:[#allocation7 + $0x38] sm:$0xf] %v3643
        %3676 = vst [vmem:[#allocation7 + $0x3c] sm:$0xf] %v3644
        %v3677 = vld [vmem:[%s708] sm:$0xf]
        %v3678 = vld [vmem:[%s708 + $0x4] sm:$0xf]
        %v3679 = vld [vmem:[%s708 + $0x8] sm:$0xf]
        %v3680 = vld [vmem:[%s708 + $0xc] sm:$0xf]
        %v3681 = vld [vmem:[%s708 + $0x10] sm:$0xf]
        %v3682 = vld [vmem:[%s708 + $0x14] sm:$0xf]
        %v3683 = vld [vmem:[%s708 + $0x18] sm:$0xf]
        %v3684 = vld [vmem:[%s708 + $0x1c] sm:$0xf]
        %v3685 = vld [vmem:[%s708 + $0x20] sm:$0xf]
        %v3686 = vld [vmem:[%s708 + $0x24] sm:$0xf]
        %v3687 = vld [vmem:[%s708 + $0x28] sm:$0xf]
        %v3688 = vld [vmem:[%s708 + $0x2c] sm:$0xf]
        %v3689 = vld [vmem:[%s708 + $0x30] sm:$0xf]
        %v3690 = vld [vmem:[%s708 + $0x34] sm:$0xf]
        %v3691 = vld [vmem:[%s708 + $0x38] sm:$0xf]
        %v3692 = vld [vmem:[%s708 + $0x3c] sm:$0xf]
        %v3693 = vld [vmem:[%s711] sm:$0x1]
        %v3695 = vlaneseq
        %v3696 = vshrl.u32 %v3695, 7
        %v3697 = vsub.s32 0, %v3696
        %v3698 = vrot.slane %v3693, %v3697
        %v3716 = vunpack.c.l.b16 %v3677
        %v3717 = vunpack.c.l.b16 %v3678
        %v3718 = vunpack.c.l.b16 %v3679
        %v3719 = vunpack.c.l.b16 %v3680
        %v3720 = vunpack.c.l.b16 %v3681
        %v3721 = vunpack.c.l.b16 %v3682
        %v3722 = vunpack.c.l.b16 %v3683
        %v3723 = vunpack.c.l.b16 %v3684
        %v3724 = vunpack.c.l.b16 %v3685
        %v3725 = vunpack.c.l.b16 %v3686
        %v3726 = vunpack.c.l.b16 %v3687
        %v3727 = vunpack.c.l.b16 %v3688
        %v3728 = vunpack.c.l.b16 %v3689
        %v3729 = vunpack.c.l.b16 %v3690
        %v3730 = vunpack.c.l.b16 %v3691
        %v3731 = vunpack.c.l.b16 %v3692
        %v3732 = vpack.c.b16 %v3717, %v3716
        %v3733 = vpack.c.b16 %v3719, %v3718
        %v3734 = vpack.c.b16 %v3721, %v3720
        %v3735 = vpack.c.b16 %v3723, %v3722
        %v3736 = vpack.c.b16 %v3725, %v3724
        %v3737 = vpack.c.b16 %v3727, %v3726
        %v3738 = vpack.c.b16 %v3729, %v3728
        %v3739 = vpack.c.b16 %v3731, %v3730
        %3748 = vmatprep.subr.bf16.mxu0 0
        %3749 = vmatpush1.bf16.msra.mxu0 %v3739
        %3750 = vmatprep.subr.bf16.mxu0 0
        %3751 = vmatpush1.bf16.msra.mxu0 %v3738
        %3752 = vmatprep.subr.bf16.mxu0 0
        %3753 = vmatpush1.bf16.msra.mxu0 %v3737
        %3754 = vmatprep.subr.bf16.mxu0 0
        %3755 = vmatpush1.bf16.msra.mxu0 %v3736
        %3756 = vmatprep.subr.bf16.mxu0 0
        %3757 = vmatpush1.bf16.msra.mxu0 %v3735
        %3758 = vmatprep.subr.bf16.mxu0 0
        %3759 = vmatpush1.bf16.msra.mxu0 %v3734
        %3760 = vmatprep.subr.bf16.mxu0 0
        %3761 = vmatpush1.bf16.msra.mxu0 %v3733
        %3762 = vmatprep.subr.bf16.mxu0 0
        %3763 = vmatpush1.bf16.msra.mxu0 %v3732
        %3764 = vmatprep.subr.bf16.mxu0 0
        %3765 = vmatpush2.bf16.msra.mxu0 0
        %3766 = vmatprep.subr.bf16.mxu0 0
        %3767 = vmatpush2.bf16.msra.mxu0 0
        %3768 = vmatprep.subr.bf16.mxu0 0
        %3769 = vmatpush2.bf16.msra.mxu0 0
        %3770 = vmatprep.subr.bf16.mxu0 0
        %3771 = vmatpush2.bf16.msra.mxu0 0
        %3772 = vmatprep.subr.bf16.mxu0 0
        %3773 = vmatpush2.bf16.msra.mxu0 0
        %3774 = vmatprep.subr.bf16.mxu0 0
        %3775 = vmatpush2.bf16.msra.mxu0 0
        %3776 = vmatprep.subr.bf16.mxu0 0
        %3777 = vmatpush2.bf16.msra.mxu0 0
        %3778 = vmatprep.subr.bf16.mxu0 0
        %3779 = vmatpush2.bf16.msra.mxu0 0
        %3780 = vmatprep.mubr.bf16.mxu0 0
        %3781 = vmatmul.mubr.bf16.gmra.mxu0 %v3597
        %v3782 = vpop.f32.mrf.mxu0
        %v3783 = vadd.f32 %v3698, %v3782
        %v3784 = vpop.f32.mrf.mxu0
        %v3785 = vpop.f32.mrf.mxu0
        %v3786 = vadd.f32 %v3698, %v3785
        %v3787 = vpop.f32.mrf.mxu0
        %3788 = vmatprep.mubr.bf16.mxu0 0
        %3789 = vmatmul.mubr.bf16.gmra.mxu0 %v3598
        %v3790 = vpop.f32.mrf.mxu0
        %v3791 = vadd.f32 %v3698, %v3790
        %v3792 = vpop.f32.mrf.mxu0
        %v3793 = vpop.f32.mrf.mxu0
        %v3794 = vadd.f32 %v3698, %v3793
        %v3795 = vpop.f32.mrf.mxu0
        %3796 = vmatprep.mubr.bf16.mxu0 0
        %3797 = vmatmul.mubr.bf16.gmra.mxu0 %v3599
        %v3798 = vpop.f32.mrf.mxu0
        %v3799 = vadd.f32 %v3698, %v3798
        %v3800 = vpop.f32.mrf.mxu0
        %v3801 = vpop.f32.mrf.mxu0
        %v3802 = vadd.f32 %v3698, %v3801
        %v3803 = vpop.f32.mrf.mxu0
        %3804 = vmatprep.mubr.bf16.mxu0 0
        %3805 = vmatmul.mubr.bf16.gmra.mxu0 %v3600
        %v3806 = vpop.f32.mrf.mxu0
        %v3807 = vadd.f32 %v3698, %v3806
        %v3808 = vpop.f32.mrf.mxu0
        %v3809 = vpop.f32.mrf.mxu0
        %v3810 = vadd.f32 %v3698, %v3809
        %v3811 = vpop.f32.mrf.mxu0
        %3812 = vmatprep.mubr.bf16.mxu0 0
        %3813 = vmatmul.mubr.bf16.gmra.mxu0 %v3601
        %v3814 = vpop.f32.mrf.mxu0
        %v3815 = vadd.f32 %v3698, %v3814
        %v3816 = vpop.f32.mrf.mxu0
        %v3817 = vpop.f32.mrf.mxu0
        %v3818 = vadd.f32 %v3698, %v3817
        %v3819 = vpop.f32.mrf.mxu0
        %3820 = vmatprep.mubr.bf16.mxu0 0
        %3821 = vmatmul.mubr.bf16.gmra.mxu0 %v3602
        %v3822 = vpop.f32.mrf.mxu0
        %v3823 = vadd.f32 %v3698, %v3822
        %v3824 = vpop.f32.mrf.mxu0
        %v3825 = vpop.f32.mrf.mxu0
        %v3826 = vadd.f32 %v3698, %v3825
        %v3827 = vpop.f32.mrf.mxu0
        %3828 = vmatprep.mubr.bf16.mxu0 0
        %3829 = vmatmul.mubr.bf16.gmra.mxu0 %v3603
        %v3830 = vpop.f32.mrf.mxu0
        %v3831 = vadd.f32 %v3698, %v3830
        %v3832 = vpop.f32.mrf.mxu0
        %v3833 = vpop.f32.mrf.mxu0
        %v3834 = vadd.f32 %v3698, %v3833
        %v3835 = vpop.f32.mrf.mxu0
        %3836 = vmatprep.mubr.bf16.mxu0 0
        %3837 = vmatmul.mubr.bf16.gmra.mxu0 %v3604
        %v3838 = vpop.f32.mrf.mxu0
        %v3839 = vadd.f32 %v3698, %v3838
        %v3840 = vpop.f32.mrf.mxu0
        %v3841 = vpop.f32.mrf.mxu0
        %v3842 = vadd.f32 %v3698, %v3841
        %v3843 = vpop.f32.mrf.mxu0
        %3844 = vdwg.mxu0
        %3845 = vmax.xlane.f32.xlu0 %v3783
        %v3846 = vpop.xlane.xlu0 %3845
        %3847 = vmax.xlane.f32.xlu0 %v3786
        %v3848 = vpop.xlane.xlu0 %3847
        %3849 = vmax.xlane.f32.xlu0 %v3791
        %v3850 = vpop.xlane.xlu0 %3849
        %3851 = vmax.xlane.f32.xlu0 %v3794
        %v3852 = vpop.xlane.xlu0 %3851
        %3853 = vmax.xlane.f32.xlu0 %v3799
        %v3854 = vpop.xlane.xlu0 %3853
        %3855 = vmax.xlane.f32.xlu0 %v3802
        %v3856 = vpop.xlane.xlu0 %3855
        %3857 = vmax.xlane.f32.xlu0 %v3807
        %v3858 = vpop.xlane.xlu0 %3857
        %3859 = vmax.xlane.f32.xlu0 %v3810
        %v3860 = vpop.xlane.xlu0 %3859
        %3861 = vmax.xlane.f32.xlu0 %v3815
        %v3862 = vpop.xlane.xlu0 %3861
        %3863 = vmax.xlane.f32.xlu0 %v3818
        %v3864 = vpop.xlane.xlu0 %3863
        %3865 = vmax.xlane.f32.xlu0 %v3823
        %v3866 = vpop.xlane.xlu0 %3865
        %3867 = vmax.xlane.f32.xlu0 %v3826
        %v3868 = vpop.xlane.xlu0 %3867
        %3869 = vmax.xlane.f32.xlu0 %v3831
        %v3870 = vpop.xlane.xlu0 %3869
        %3871 = vmax.xlane.f32.xlu0 %v3834
        %v3872 = vpop.xlane.xlu0 %3871
        %3873 = vmax.xlane.f32.xlu0 %v3839
        %v3874 = vpop.xlane.xlu0 %3873
        %3875 = vmax.xlane.f32.xlu0 %v3842
        %v3876 = vpop.xlane.xlu0 %3875
        %v3877 = vsub.f32 %v3783, %v3846
        %v3878 = vsub.f32 %v3786, %v3848
        %v3879 = vsub.f32 %v3791, %v3850
        %v3880 = vsub.f32 %v3794, %v3852
        %v3881 = vsub.f32 %v3799, %v3854
        %v3882 = vsub.f32 %v3802, %v3856
        %v3883 = vsub.f32 %v3807, %v3858
        %v3884 = vsub.f32 %v3810, %v3860
        %v3885 = vsub.f32 %v3815, %v3862
        %v3886 = vsub.f32 %v3818, %v3864
        %v3887 = vsub.f32 %v3823, %v3866
        %v3888 = vsub.f32 %v3826, %v3868
        %v3889 = vsub.f32 %v3831, %v3870
        %v3890 = vsub.f32 %v3834, %v3872
        %v3891 = vsub.f32 %v3839, %v3874
        %v3892 = vsub.f32 %v3842, %v3876
        %v3893 = vmul.f32 %v3877, 1.442695
        %v3894 = vpow.pop %v3893
        %v3895 = vmul.f32 %v3878, 1.442695
        %v3896 = vpow.pop %v3895
        %v3897 = vmul.f32 %v3879, 1.442695
        %v3898 = vpow.pop %v3897
        %v3899 = vmul.f32 %v3880, 1.442695
        %v3900 = vpow.pop %v3899
        %v3901 = vmul.f32 %v3881, 1.442695
        %v3902 = vpow.pop %v3901
        %v3903 = vmul.f32 %v3882, 1.442695
        %v3904 = vpow.pop %v3903
        %v3905 = vmul.f32 %v3883, 1.442695
        %v3906 = vpow.pop %v3905
        %v3907 = vmul.f32 %v3884, 1.442695
        %v3908 = vpow.pop %v3907
        %v3909 = vmul.f32 %v3885, 1.442695
        %v3910 = vpow.pop %v3909
        %v3911 = vmul.f32 %v3886, 1.442695
        %v3912 = vpow.pop %v3911
        %v3913 = vmul.f32 %v3887, 1.442695
        %v3914 = vpow.pop %v3913
        %v3915 = vmul.f32 %v3888, 1.442695
        %v3916 = vpow.pop %v3915
        %v3917 = vmul.f32 %v3889, 1.442695
        %v3918 = vpow.pop %v3917
        %v3919 = vmul.f32 %v3890, 1.442695
        %v3920 = vpow.pop %v3919
        %v3921 = vmul.f32 %v3891, 1.442695
        %v3922 = vpow.pop %v3921
        %v3923 = vmul.f32 %v3892, 1.442695
        %v3924 = vpow.pop %v3923
        %3925 = vadd.xlane.f32.xlu0 %v3894
        %v3926 = vpop.xlane.xlu0 %3925
        %3927 = vadd.xlane.f32.xlu0 %v3896
        %v3928 = vpop.xlane.xlu0 %3927
        %3929 = vadd.xlane.f32.xlu0 %v3898
        %v3930 = vpop.xlane.xlu0 %3929
        %3931 = vadd.xlane.f32.xlu0 %v3900
        %v3932 = vpop.xlane.xlu0 %3931
        %3933 = vadd.xlane.f32.xlu0 %v3902
        %v3934 = vpop.xlane.xlu0 %3933
        %3935 = vadd.xlane.f32.xlu0 %v3904
        %v3936 = vpop.xlane.xlu0 %3935
        %3937 = vadd.xlane.f32.xlu0 %v3906
        %v3938 = vpop.xlane.xlu0 %3937
        %3939 = vadd.xlane.f32.xlu0 %v3908
        %v3940 = vpop.xlane.xlu0 %3939
        %3941 = vadd.xlane.f32.xlu0 %v3910
        %v3942 = vpop.xlane.xlu0 %3941
        %3943 = vadd.xlane.f32.xlu0 %v3912
        %v3944 = vpop.xlane.xlu0 %3943
        %3945 = vadd.xlane.f32.xlu0 %v3914
        %v3946 = vpop.xlane.xlu0 %3945
        %3947 = vadd.xlane.f32.xlu0 %v3916
        %v3948 = vpop.xlane.xlu0 %3947
        %3949 = vadd.xlane.f32.xlu0 %v3918
        %v3950 = vpop.xlane.xlu0 %3949
        %3951 = vadd.xlane.f32.xlu0 %v3920
        %v3952 = vpop.xlane.xlu0 %3951
        %3953 = vadd.xlane.f32.xlu0 %v3922
        %v3954 = vpop.xlane.xlu0 %3953
        %3955 = vadd.xlane.f32.xlu0 %v3924
        %v3956 = vpop.xlane.xlu0 %3955
        %v3957 = vrcp.pop %v3926
        %v3958 = vrcp.pop %v3928
        %v3959 = vrcp.pop %v3930
        %v3960 = vrcp.pop %v3932
        %v3961 = vrcp.pop %v3934
        %v3962 = vrcp.pop %v3936
        %v3963 = vrcp.pop %v3938
        %v3964 = vrcp.pop %v3940
        %v3965 = vrcp.pop %v3942
        %v3966 = vrcp.pop %v3944
        %v3967 = vrcp.pop %v3946
        %v3968 = vrcp.pop %v3948
        %v3969 = vrcp.pop %v3950
        %v3970 = vrcp.pop %v3952
        %v3971 = vrcp.pop %v3954
        %v3972 = vrcp.pop %v3956
        %v3973 = vmul.f32 %v3894, %v3957
        %v3974 = vmul.f32 %v3896, %v3958
        %v3975 = vmul.f32 %v3898, %v3959
        %v3976 = vmul.f32 %v3900, %v3960
        %v3977 = vmul.f32 %v3902, %v3961
        %v3978 = vmul.f32 %v3904, %v3962
        %v3979 = vmul.f32 %v3906, %v3963
        %v3980 = vmul.f32 %v3908, %v3964
        %v3981 = vmul.f32 %v3910, %v3965
        %v3982 = vmul.f32 %v3912, %v3966
        %v3983 = vmul.f32 %v3914, %v3967
        %v3984 = vmul.f32 %v3916, %v3968
        %v3985 = vmul.f32 %v3918, %v3969
        %v3986 = vmul.f32 %v3920, %v3970
        %v3987 = vmul.f32 %v3922, %v3971
        %v3988 = vmul.f32 %v3924, %v3972
        %3989 = vst [vmem:[%s683] sm:$0xff] %v3973
        %3990 = vst [vmem:[%s683 + $0x8] sm:$0xff] %v3974
        %3991 = vst [vmem:[%s683 + $0x10] sm:$0xff] %v3975
        %3992 = vst [vmem:[%s683 + $0x18] sm:$0xff] %v3976
        %3993 = vst [vmem:[%s683 + $0x20] sm:$0xff] %v3977
        %3994 = vst [vmem:[%s683 + $0x28] sm:$0xff] %v3978
        %3995 = vst [vmem:[%s683 + $0x30] sm:$0xff] %v3979
        %3996 = vst [vmem:[%s683 + $0x38] sm:$0xff] %v3980
        %3997 = vst [vmem:[%s683 + $0x40] sm:$0xff] %v3981
        %3998 = vst [vmem:[%s683 + $0x48] sm:$0xff] %v3982
        %3999 = vst [vmem:[%s683 + $0x50] sm:$0xff] %v3983
        %4000 = vst [vmem:[%s683 + $0x58] sm:$0xff] %v3984
        %4001 = vst [vmem:[%s683 + $0x60] sm:$0xff] %v3985
        %4002 = vst [vmem:[%s683 + $0x68] sm:$0xff] %v3986
        %4003 = vst [vmem:[%s683 + $0x70] sm:$0xff] %v3987
        %4004 = vst [vmem:[%s683 + $0x78] sm:$0xff] %v3988
        %s4005 = sand.u32 %s463, 1
        %s4006 = scalar_lea.sflag [#allocation9], %s4005
        %s4007 = sand.u32 %s463, 1
        %s4008 = smul.addr %s4007, 128
        %s4009 = scalar_lea.vmem [#allocation8], %s4008
        // Predicated region
        $region97: #{tpu_custom_call.1} parent=87 // pred_check
          %p4010 = pneg %p447
        $region98: #{tpu_custom_call.1} parent=87 // pred_check_branch
          %4012 = sbr.rel (%p4010) target = $region100
        $region99: #{tpu_custom_call.1} parent=87 // pred_region
          %s4014 = ssub.s32 1024, 1024
          %4015 = vsyncadd [#allocation6], %s4014
          %s4016 = sshll.u32 [#allocation7], 4
          %s4017 = int_to_ptr.vmem [resolvable:$true] %s4016
          %4022 = dma.vmem_to_hbm [thread:$0]  %s4017, 1024, %s17, [#allocation6], 64, 64, 4
        $region100: #{tpu_custom_call.1} parent=87 // pred_fallthru
          _
        // Predicated region
        $region101: #{tpu_custom_call.1} parent=87 // pred_check
          %p4023 = pneg %p473
        $region102: #{tpu_custom_call.1} parent=87 // pred_check_branch
          %4025 = sbr.rel (%p4023) target = $region104
        $region103: #{tpu_custom_call.1} parent=87 // pred_region
          %s4027 = ssub.s32 2048, 2048
          %4028 = vsyncadd %s4006, %s4027
          %s4029 = smul.addr %s37, 16
          %s4030 = smul.addr %s4029, 128
          %s4031 = scalar_lea.hbm %s18, %s4030
          %s4032 = sshll.u32 %s4009, 4
          %s4033 = int_to_ptr.vmem [resolvable:$true] %s4032
          %4038 = dma.vmem_to_hbm [thread:$0]  %s4033, 2048, %s4031, %s4006, 128, 128, 8
        $region104: #{tpu_custom_call.1} parent=87 // pred_fallthru
          _
        // Predicated region
        $region105: #{tpu_custom_call.1} parent=87 // pred_check
          %p4039 = pneg %p447
        $region106: #{tpu_custom_call.1} parent=87 // pred_check_branch
          %4041 = sbr.rel (%p4039) target = $region108
        $region107: #{tpu_custom_call.1} parent=87 // pred_region
          %4042 = dma.done [#allocation6], 1024
        $region108: #{tpu_custom_call.1} parent=87 // pred_fallthru
          _
      $region88: #{tpu_custom_call.1} parent=5 // pred_fallthru
        _
      %p4043 = scmp.le.s32.totalorder 2, %s32
      // Predicated region
      $region109: #{tpu_custom_call.1} parent=5 // pred_check
        %p4044 = pneg %p4043
      $region110: #{tpu_custom_call.1} parent=5 // pred_check_branch
        %4046 = sbr.rel (%p4044) target = $region112
      $region111: #{tpu_custom_call.1} parent=5 // pred_region
        %s4047 = ssub.s32 %s32, 2
        // Predicated region
        $region113: #{tpu_custom_call.1} parent=111 // pred_check
          %p4048 = pneg %p479
        $region114: #{tpu_custom_call.1} parent=111 // pred_check_branch
          %4050 = sbr.rel (%p4048) target = $region116
        $region115: #{tpu_custom_call.1} parent=111 // pred_region
          %s4051 = sand.u32 %s464, 1
          %s4052 = scalar_lea.sflag [#allocation9], %s4051
          %s4053 = sand.u32 %s464, 1
          %s4054 = smul.addr %s4053, 128
          %s4055 = scalar_lea.vmem [#allocation8], %s4054
          %4056 = dma.done %s4052, 2048
        $region116: #{tpu_custom_call.1} parent=111 // pred_fallthru
          _
      $region112: #{tpu_custom_call.1} parent=5 // pred_fallthru
        _
    $region6: #{tpu_custom_call.1} parent=1 // loop_footer
      %s36 = sadd.s32 1, %s32
    $region7: #{tpu_custom_call.1} parent=1 // loop_footer_branch
      %31 = sbr.rel target = $region3
    $region8: #{tpu_custom_call.1} parent=1 // loop_exit
      _
    %4057 = vsyncpa [#allocation5], 1
    %s4058 = scalar_lea.sflag [#allocation5], 1
    %4059 = vsyncpa %s4058, 1
    %4060 = vsyncpa [#allocation6], 1
    %s4061 = scalar_lea.sflag [#allocation6], 1
    %4062 = vsyncpa %s4061, 1
    %4063 = vsyncpa [#allocation9], 1
    %s4064 = scalar_lea.sflag [#allocation9], 1
    %4065 = vsyncpa %s4064, 1

</llo_original>
